<compile_context>
chip_gen: v6e
topology: v6e:2x2x1
jax: 0.10.0
libtpu: 0.0.40
codegen_flags: <defaults>
</compile_context>

<pallas_src>
import functools
import math

import jax
import jax.numpy as jnp
from jax import lax
from jax.experimental import pallas as pl
from jax.experimental.pallas import tpu as pltpu

# ----------------------------- config -----------------------------
B = 2          # batch
S = 8          # sequence length
D = 32         # d_model
NH = 4         # n_heads
HD = D // NH   # head dim
H = 64         # ffn hidden
N_LAYERS = 2
LN_EPS = 1e-5      # nn.LayerNorm default
NEG_INF = -1e10    # python float -> lowered as a literal, NOT a captured constant


def _layer_norm(x, gamma, beta):
    mu = jnp.mean(x, axis=-1, keepdims=True)
    xc = x - mu
    var = jnp.mean(xc * xc, axis=-1, keepdims=True)
    return xc * lax.rsqrt(var + LN_EPS) * gamma + beta


# ----------------------------- kernel -----------------------------
def encoder_kernel(src_ref, mask_ref,
                   wqkv_ref, bqkv_ref, wo_ref, w1_ref, b1_ref, w2_ref, vecs_ref,
                   out_ref,
                   *, n_layers, bb):
    """Runs all n_layers of the shared-weight EncoderLayer for `bb` batch rows."""
    BS = bb * S
    x0 = src_ref[...].reshape(BS, D)           # activation stays in vregs

    # ---- loop-invariant parameter loads, hoisted above the layer loop ----
    wqkv = wqkv_ref[...]                       # (D, 3D), q-scale pre-folded
    bqkv = bqkv_ref[...]                       # (1, 3D)
    wo = wo_ref[...]                           # (D, D)
    w1 = w1_ref[...]                           # (D, H)
    b1 = b1_ref[...]                           # (1, H)
    w2 = w2_ref[...]                           # (H, D)
    vecs = vecs_ref[...]                       # (6, D)
    bo, ln1g, ln1b, b2, ln2g, ln2b = (vecs[i:i + 1, :] for i in range(6))

    # ---- additive mask bias per batch row, hoisted out of layer/head loops ----
    # NOTE: additive -1e10 bias matches masked_fill(-1e10)+softmax for any row
    # with at least one visible key (fully-masked rows are not exercised here).
    mask = mask_ref[...]                       # (bb, 1, S)
    biases = [jnp.where(mask[b, 0:1, :] > 0.0, 0.0, NEG_INF) for b in range(bb)]

    def layer_body(_, x):
        # Fused QKV projection: one MXU matmul over all bb*S rows.
        qkv = jnp.dot(x, wqkv, preferred_element_type=jnp.float32) + bqkv   # (BS, 3D)

        # Per-(batch, head) attention; Wo projection accumulated in vregs.
        attn_parts = []
        for b in range(bb):
            r0 = b * S
            qkv_b = qkv[r0:r0 + S, :]
            bias_b = biases[b]
            attn_b = None
            for h in range(NH):
                lo = h * HD
                q_h = qkv_b[:, lo:lo + HD]                   # already scaled
                k_h = qkv_b[:, D + lo:D + lo + HD]
                v_h = qkv_b[:, 2 * D + lo:2 * D + lo + HD]
                # q_h @ k_h^T without an explicit transpose op
                s = lax.dot_general(q_h, k_h, (((1,), (1,)), ((), ())),
                                    preferred_element_type=jnp.float32)
                s = s + bias_b                               # (S, S)
                m = jnp.max(s, axis=-1, keepdims=True)
                e = jnp.exp(s - m)
                p = e * pl.reciprocal(jnp.sum(e, axis=-1, keepdims=True),
                                      approx=True)
                ctx_h = jnp.dot(p, v_h, preferred_element_type=jnp.float32)
                contrib = jnp.dot(ctx_h, wo[lo:lo + HD, :],
                                  preferred_element_type=jnp.float32)      # (S, D)
                attn_b = contrib if attn_b is None else attn_b + contrib
            attn_parts.append(attn_b)
        attn = attn_parts[0] if bb == 1 else jnp.concatenate(attn_parts, axis=0)

        # output projection bias + residual + layernorm 1
        h1 = _layer_norm(x + attn + bo, ln1g, ln1b)

        # position-wise feed-forward + residual + layernorm 2
        ff = jnp.dot(h1, w1, preferred_element_type=jnp.float32) + b1
        ff = jnp.maximum(ff, 0.0)
        ff = jnp.dot(ff, w2, preferred_element_type=jnp.float32) + b2
        return _layer_norm(h1 + ff, ln2g, ln2b)

    x_final = lax.fori_loop(0, n_layers, layer_body, x0, unroll=True)
    out_ref[...] = x_final.reshape(bb, S, D).astype(out_ref.dtype)


# ----------------------------- wrapper -----------------------------
def _rep_spec(shape):
    """Whole (small) parameter array, same block at every grid step (loaded once)."""
    ndim = len(shape)
    return pl.BlockSpec(shape, lambda i: (0,) * ndim)


def encoder_pallas(src, src_mask, params, n_layers, batch_block):
    kernel = functools.partial(encoder_kernel, n_layers=n_layers, bb=batch_block)
    grid = (B // batch_block,)
    in_specs = [
        pl.BlockSpec((batch_block, S, D), lambda i: (i, 0, 0)),   # src block
        pl.BlockSpec((batch_block, 1, S), lambda i: (i, 0, 0)),   # mask block
        _rep_spec((D, 3 * D)),                                    # fused Wqkv
        _rep_spec((1, 3 * D)),                                    # fused bqkv
        _rep_spec((D, D)),                                        # Wo
        _rep_spec((D, H)),                                        # W1
        _rep_spec((1, H)),                                        # b1
        _rep_spec((H, D)),                                        # W2
        _rep_spec((6, D)),                                        # packed vectors
    ]
    out_spec = pl.BlockSpec((batch_block, S, D), lambda i: (i, 0, 0))
    return pl.pallas_call(
        kernel,
        out_shape=jax.ShapeDtypeStruct((B, S, D), src.dtype),
        grid_spec=pltpu.PrefetchScalarGridSpec(
            num_scalar_prefetch=0,
            grid=grid,
            in_specs=in_specs,
            out_specs=out_spec,
        ),
        compiler_params=pltpu.CompilerParams(
            dimension_semantics=("parallel",),
        ),
    )(src, src_mask, *params)


@functools.partial(jax.jit, static_argnames=("n_layers", "batch_block"))
def encoder_forward(src, src_mask, params, n_layers=N_LAYERS, batch_block=B):
    # `for _ in range(self.n_layers): src = self.layer(src, src_mask)` with shared
    # weights -- the whole loop lives inside a single pallas_call.
    return encoder_pallas(src, src_mask, params, n_layers, batch_block)


def pick_batch_block():
    """v7x (2 TCs/chip): one batch element per grid step so both cores work.
    v5e / v6e (1 TC) and interpret mode: fuse the whole batch into one step."""
    try:
        kind = jax.devices()[0].device_kind.lower()
    except Exception:
        return B
    if "v7" in kind or "7x" in kind:
        return 1
    return B


# ----------------------------- params -----------------------------
def init_raw_params(key):
    ks = jax.random.split(key, 6)
    s = 0.05
    return dict(
        wq=s * jax.random.normal(ks[0], (D, D), jnp.float32),
        wk=s * jax.random.normal(ks[1], (D, D), jnp.float32),
        wv=s * jax.random.normal(ks[2], (D, D), jnp.float32),
        wo=s * jax.random.normal(ks[3], (D, D), jnp.float32),
        w1=s * jax.random.normal(ks[4], (D, H), jnp.float32),
        w2=s * jax.random.normal(ks[5], (H, D), jnp.float32),
        bq=jnp.zeros((1, D), jnp.float32),
        bk=jnp.zeros((1, D), jnp.float32),
        bv=jnp.zeros((1, D), jnp.float32),
        bo=jnp.zeros((1, D), jnp.float32),
        b1=jnp.zeros((1, H), jnp.float32),
        b2=jnp.zeros((1, D), jnp.float32),
        ln1g=jnp.ones((1, D), jnp.float32),
        ln1b=jnp.zeros((1, D), jnp.float32),
        ln2g=jnp.ones((1, D), jnp.float32),
        ln2b=jnp.zeros((1, D), jnp.float32),
    )


def pack_params(raw):
    """Fuse QKV and pack small vectors; fold 1/sqrt(HD) into the Q slice."""
    inv = 1.0 / math.sqrt(HD)
    wqkv = jnp.concatenate([raw["wq"] * inv, raw["wk"], raw["wv"]], axis=1)  # (D, 3D)
    bqkv = jnp.concatenate([raw["bq"] * inv, raw["bk"], raw["bv"]], axis=1)  # (1, 3D)
    vecs = jnp.concatenate([raw["bo"], raw["ln1g"], raw["ln1b"],
                            raw["b2"], raw["ln2g"], raw["ln2b"]], axis=0)    # (6, D)
    return (wqkv, bqkv, raw["wo"], raw["w1"], raw["b1"], raw["w2"], vecs)


# ----------------------------- reference -----------------------------
def reference_forward(src, src_mask, raw, n_layers):
    inv = 1.0 / math.sqrt(HD)
    keep = src_mask[:, None, :, :] > 0.0            # (B, 1, 1, S)
    x = src
    for _ in range(n_layers):
        q = (x @ raw["wq"] + raw["bq"]).reshape(B, S, NH, HD).transpose(0, 2, 1, 3)
        k = (x @ raw["wk"] + raw["bk"]).reshape(B, S, NH, HD).transpose(0, 2, 1, 3)
        v = (x @ raw["wv"] + raw["bv"]).reshape(B, S, NH, HD).transpose(0, 2, 1, 3)
        s = jnp.einsum("bhqd,bhkd->bhqk", q, k) * inv
        s = jnp.where(keep, s, -1e10)
        p = jax.nn.softmax(s, axis=-1)
        ctx = jnp.einsum("bhqk,bhkd->bhqd", p, v).transpose(0, 2, 1, 3).reshape(B, S, D)
        x = _layer_norm(x + ctx @ raw["wo"] + raw["bo"], raw["ln1g"], raw["ln1b"])
        ff = jnp.maximum(x @ raw["w1"] + raw["b1"], 0.0) @ raw["w2"] + raw["b2"]
        x = _layer_norm(x + ff, raw["ln2g"], raw["ln2b"])
    return x


# ----------------------------- main -----------------------------
if __name__ == "__main__":
    key = jax.random.PRNGKey(0)
    k_src, k_par = jax.random.split(key)
    src = jax.random.normal(k_src, (B, S, D), jnp.float32)
    # mask: batch 0 fully visible, batch 1 masks out the last 2 key positions
    src_mask = jnp.ones((B, 1, S), jnp.float32)
    src_mask = src_mask.at[1, 0, -2:].set(0.0)

    # TODO(synk): dropout inside the PyTorch EncoderLayer (if any) is treated as
    # eval-mode identity.
    raw = init_raw_params(k_par)
    params = pack_params(raw)
    bb = pick_batch_block()

    out = encoder_forward(src, src_mask, params, n_layers=N_LAYERS, batch_block=bb)
    jax.block_until_ready(out)

    ref = reference_forward(src, src_mask, raw, N_LAYERS)
    assert out.shape == (B, S, D)
    assert bool(jnp.all(jnp.isfinite(out)))
    assert bool(jnp.allclose(out, ref, rtol=1e-2, atol=1e-2)), \
        float(jnp.max(jnp.abs(out - ref)))
    print("KERNEL_OK")
</pallas_src>

<mosaic_0001>
module attributes {stable_mosaic.version = 11 : i64} {
  func.func @encoder_kernel(%arg0: i32, %arg1: memref<2x8x32xf32, #tpu.memory_space<vmem>>, %arg2: memref<2x1x8xf32, #tpu.memory_space<vmem>>, %arg3: memref<32x96xf32, #tpu.memory_space<vmem>>, %arg4: memref<1x96xf32, #tpu.memory_space<vmem>>, %arg5: memref<32x32xf32, #tpu.memory_space<vmem>>, %arg6: memref<32x64xf32, #tpu.memory_space<vmem>>, %arg7: memref<1x64xf32, #tpu.memory_space<vmem>>, %arg8: memref<64x32xf32, #tpu.memory_space<vmem>>, %arg9: memref<6x32xf32, #tpu.memory_space<vmem>>, %arg10: memref<2x8x32xf32, #tpu.memory_space<vmem>>) attributes {dimension_semantics = [#tpu.dimension_semantics<parallel>], iteration_bounds = array<i64: 1>, scalar_prefetch = 0 : i64, scratch_operands = 0 : i64, tpu.core_type = #tpu.core_type<tc>, window_params = [{transform_indices = @transform_0, window_bounds = array<i64: 2, 8, 32>}, {transform_indices = @transform_1, window_bounds = array<i64: 2, 1, 8>}, {pipeline_mode = #tpu.pipeline_mode<synchronous>, transform_indices = @transform_2, window_bounds = array<i64: 32, 96>}, {pipeline_mode = #tpu.pipeline_mode<synchronous>, transform_indices = @transform_3, window_bounds = array<i64: 1, 96>}, {pipeline_mode = #tpu.pipeline_mode<synchronous>, transform_indices = @transform_4, window_bounds = array<i64: 32, 32>}, {pipeline_mode = #tpu.pipeline_mode<synchronous>, transform_indices = @transform_5, window_bounds = array<i64: 32, 64>}, {pipeline_mode = #tpu.pipeline_mode<synchronous>, transform_indices = @transform_6, window_bounds = array<i64: 1, 64>}, {pipeline_mode = #tpu.pipeline_mode<synchronous>, transform_indices = @transform_7, window_bounds = array<i64: 64, 32>}, {pipeline_mode = #tpu.pipeline_mode<synchronous>, transform_indices = @transform_8, window_bounds = array<i64: 6, 32>}, {transform_indices = @transform_9, window_bounds = array<i64: 2, 8, 32>}]} {
    %c0 = arith.constant 0 : index
    %c0_0 = arith.constant 0 : index
    %c0_1 = arith.constant 0 : index
    %0 = vector.load %arg1[%c0, %c0_0, %c0_1] : memref<2x8x32xf32, #tpu.memory_space<vmem>>, vector<2x8x32xf32>
    %1 = vector.shape_cast %0 : vector<2x8x32xf32> to vector<16x32xf32>
    %c0_2 = arith.constant 0 : index
    %c0_3 = arith.constant 0 : index
    %2 = vector.load %arg3[%c0_2, %c0_3] : memref<32x96xf32, #tpu.memory_space<vmem>>, vector<32x96xf32>
    %c0_4 = arith.constant 0 : index
    %c0_5 = arith.constant 0 : index
    %3 = vector.load %arg4[%c0_4, %c0_5] : memref<1x96xf32, #tpu.memory_space<vmem>>, vector<1x96xf32>
    %c0_6 = arith.constant 0 : index
    %c0_7 = arith.constant 0 : index
    %4 = vector.load %arg5[%c0_6, %c0_7] : memref<32x32xf32, #tpu.memory_space<vmem>>, vector<32x32xf32>
    %c0_8 = arith.constant 0 : index
    %c0_9 = arith.constant 0 : index
    %5 = vector.load %arg6[%c0_8, %c0_9] : memref<32x64xf32, #tpu.memory_space<vmem>>, vector<32x64xf32>
    %c0_10 = arith.constant 0 : index
    %c0_11 = arith.constant 0 : index
    %6 = vector.load %arg7[%c0_10, %c0_11] : memref<1x64xf32, #tpu.memory_space<vmem>>, vector<1x64xf32>
    %c0_12 = arith.constant 0 : index
    %c0_13 = arith.constant 0 : index
    %7 = vector.load %arg8[%c0_12, %c0_13] : memref<64x32xf32, #tpu.memory_space<vmem>>, vector<64x32xf32>
    %c0_14 = arith.constant 0 : index
    %c0_15 = arith.constant 0 : index
    %8 = vector.load %arg9[%c0_14, %c0_15] : memref<6x32xf32, #tpu.memory_space<vmem>>, vector<6x32xf32>
    %9 = vector.extract_strided_slice %8 {offsets = [0, 0], sizes = [1, 32], strides = [1, 1]} : vector<6x32xf32> to vector<1x32xf32>
    %10 = vector.extract_strided_slice %8 {offsets = [1, 0], sizes = [1, 32], strides = [1, 1]} : vector<6x32xf32> to vector<1x32xf32>
    %11 = vector.extract_strided_slice %8 {offsets = [2, 0], sizes = [1, 32], strides = [1, 1]} : vector<6x32xf32> to vector<1x32xf32>
    %12 = vector.extract_strided_slice %8 {offsets = [3, 0], sizes = [1, 32], strides = [1, 1]} : vector<6x32xf32> to vector<1x32xf32>
    %13 = vector.extract_strided_slice %8 {offsets = [4, 0], sizes = [1, 32], strides = [1, 1]} : vector<6x32xf32> to vector<1x32xf32>
    %14 = vector.extract_strided_slice %8 {offsets = [5, 0], sizes = [1, 32], strides = [1, 1]} : vector<6x32xf32> to vector<1x32xf32>
    %c0_16 = arith.constant 0 : index
    %c0_17 = arith.constant 0 : index
    %c0_18 = arith.constant 0 : index
    %15 = vector.load %arg2[%c0_16, %c0_17, %c0_18] : memref<2x1x8xf32, #tpu.memory_space<vmem>>, vector<2x1x8xf32>
    %16 = vector.extract_strided_slice %15 {offsets = [0, 0, 0], sizes = [1, 1, 8], strides = [1, 1, 1]} : vector<2x1x8xf32> to vector<1x1x8xf32>
    %17 = vector.shape_cast %16 : vector<1x1x8xf32> to vector<1x8xf32>
    %cst = arith.constant 0.000000e+00 : f32
    %18 = vector.broadcast %cst : f32 to vector<1x8xf32>
    %19 = arith.cmpf ogt, %17, %18 : vector<1x8xf32>
    %cst_19 = arith.constant 0.000000e+00 : f32
    %cst_20 = arith.constant -1.000000e+10 : f32
    %20 = vector.broadcast %cst_19 : f32 to vector<1x8xf32>
    %21 = vector.broadcast %cst_20 : f32 to vector<1x8xf32>
    %22 = arith.select %19, %20, %21 : vector<1x8xi1>, vector<1x8xf32>
    %23 = vector.extract_strided_slice %15 {offsets = [1, 0, 0], sizes = [1, 1, 8], strides = [1, 1, 1]} : vector<2x1x8xf32> to vector<1x1x8xf32>
    %24 = vector.shape_cast %23 : vector<1x1x8xf32> to vector<1x8xf32>
    %cst_21 = arith.constant 0.000000e+00 : f32
    %25 = vector.broadcast %cst_21 : f32 to vector<1x8xf32>
    %26 = arith.cmpf ogt, %24, %25 : vector<1x8xf32>
    %cst_22 = arith.constant 0.000000e+00 : f32
    %cst_23 = arith.constant -1.000000e+10 : f32
    %27 = vector.broadcast %cst_22 : f32 to vector<1x8xf32>
    %28 = vector.broadcast %cst_23 : f32 to vector<1x8xf32>
    %29 = arith.select %26, %27, %28 : vector<1x8xi1>, vector<1x8xf32>
    %c0_i32 = arith.constant 0 : i32
    %cst_24 = arith.constant dense<0.000000e+00> : vector<16x96xf32>
    %30 = tpu.matmul %1, %2, %cst_24 {dimension_numbers = #tpu.dot_dimension_numbers<[1], [0], [0], [1], [0, 0, 1, 1], [], []>} : vector<16x32xf32>, vector<32x96xf32>, vector<16x96xf32> -> vector<16x96xf32>
    %31 = vector.broadcast %3 : vector<1x96xf32> to vector<16x96xf32>
    %32 = arith.addf %30, %31 : vector<16x96xf32>
    %33 = vector.extract_strided_slice %32 {offsets = [0, 0], sizes = [8, 96], strides = [1, 1]} : vector<16x96xf32> to vector<8x96xf32>
    %34 = vector.extract_strided_slice %33 {offsets = [0, 0], sizes = [8, 8], strides = [1, 1]} : vector<8x96xf32> to vector<8x8xf32>
    %35 = vector.extract_strided_slice %33 {offsets = [0, 32], sizes = [8, 8], strides = [1, 1]} : vector<8x96xf32> to vector<8x8xf32>
    %36 = vector.extract_strided_slice %33 {offsets = [0, 64], sizes = [8, 8], strides = [1, 1]} : vector<8x96xf32> to vector<8x8xf32>
    %cst_25 = arith.constant dense<0.000000e+00> : vector<8x8xf32>
    %37 = tpu.matmul %34, %35, %cst_25 {dimension_numbers = #tpu.dot_dimension_numbers<[1], [1], [0], [0], [0, 0, 1, 0], [], []>} : vector<8x8xf32>, vector<8x8xf32>, vector<8x8xf32> -> vector<8x8xf32>
    %38 = vector.broadcast %22 : vector<1x8xf32> to vector<8x8xf32>
    %39 = arith.addf %37, %38 : vector<8x8xf32>
    %cst_26 = arith.constant dense<0xFF800000> : vector<8xf32>
    %40 = vector.multi_reduction <maximumf>, %39, %cst_26 [1] : vector<8x8xf32> to vector<8xf32>
    %41 = vector.shape_cast %40 : vector<8xf32> to vector<8x1xf32>
    %42 = vector.broadcast %41 : vector<8x1xf32> to vector<8x8xf32>
    %43 = arith.subf %39, %42 : vector<8x8xf32>
    %44 = math.exp %43 : vector<8x8xf32>
    %cst_27 = arith.constant dense<0.000000e+00> : vector<8xf32>
    %45 = vector.multi_reduction <add>, %44, %cst_27 [1] : vector<8x8xf32> to vector<8xf32>
    %46 = vector.shape_cast %45 : vector<8xf32> to vector<8x1xf32>
    %47 = tpu.reciprocal %46 {approx = true} : vector<8x1xf32> -> vector<8x1xf32>
    %48 = vector.broadcast %47 : vector<8x1xf32> to vector<8x8xf32>
    %49 = arith.mulf %44, %48 : vector<8x8xf32>
    %cst_28 = arith.constant dense<0.000000e+00> : vector<8x8xf32>
    %50 = tpu.matmul %49, %36, %cst_28 {dimension_numbers = #tpu.dot_dimension_numbers<[1], [0], [0], [1], [0, 0, 1, 1], [], []>} : vector<8x8xf32>, vector<8x8xf32>, vector<8x8xf32> -> vector<8x8xf32>
    %51 = vector.extract_strided_slice %4 {offsets = [0, 0], sizes = [8, 32], strides = [1, 1]} : vector<32x32xf32> to vector<8x32xf32>
    %cst_29 = arith.constant dense<0.000000e+00> : vector<8x32xf32>
    %52 = tpu.matmul %50, %51, %cst_29 {dimension_numbers = #tpu.dot_dimension_numbers<[1], [0], [0], [1], [0, 0, 1, 1], [], []>} : vector<8x8xf32>, vector<8x32xf32>, vector<8x32xf32> -> vector<8x32xf32>
    %53 = vector.extract_strided_slice %33 {offsets = [0, 8], sizes = [8, 8], strides = [1, 1]} : vector<8x96xf32> to vector<8x8xf32>
    %54 = vector.extract_strided_slice %33 {offsets = [0, 40], sizes = [8, 8], strides = [1, 1]} : vector<8x96xf32> to vector<8x8xf32>
    %55 = vector.extract_strided_slice %33 {offsets = [0, 72], sizes = [8, 8], strides = [1, 1]} : vector<8x96xf32> to vector<8x8xf32>
    %cst_30 = arith.constant dense<0.000000e+00> : vector<8x8xf32>
    %56 = tpu.matmul %53, %54, %cst_30 {dimension_numbers = #tpu.dot_dimension_numbers<[1], [1], [0], [0], [0, 0, 1, 0], [], []>} : vector<8x8xf32>, vector<8x8xf32>, vector<8x8xf32> -> vector<8x8xf32>
    %57 = vector.broadcast %22 : vector<1x8xf32> to vector<8x8xf32>
    %58 = arith.addf %56, %57 : vector<8x8xf32>
    %cst_31 = arith.constant dense<0xFF800000> : vector<8xf32>
    %59 = vector.multi_reduction <maximumf>, %58, %cst_31 [1] : vector<8x8xf32> to vector<8xf32>
    %60 = vector.shape_cast %59 : vector<8xf32> to vector<8x1xf32>
    %61 = vector.broadcast %60 : vector<8x1xf32> to vector<8x8xf32>
    %62 = arith.subf %58, %61 : vector<8x8xf32>
    %63 = math.exp %62 : vector<8x8xf32>
    %cst_32 = arith.constant dense<0.000000e+00> : vector<8xf32>
    %64 = vector.multi_reduction <add>, %63, %cst_32 [1] : vector<8x8xf32> to vector<8xf32>
    %65 = vector.shape_cast %64 : vector<8xf32> to vector<8x1xf32>
    %66 = tpu.reciprocal %65 {approx = true} : vector<8x1xf32> -> vector<8x1xf32>
    %67 = vector.broadcast %66 : vector<8x1xf32> to vector<8x8xf32>
    %68 = arith.mulf %63, %67 : vector<8x8xf32>
    %cst_33 = arith.constant dense<0.000000e+00> : vector<8x8xf32>
    %69 = tpu.matmul %68, %55, %cst_33 {dimension_numbers = #tpu.dot_dimension_numbers<[1], [0], [0], [1], [0, 0, 1, 1], [], []>} : vector<8x8xf32>, vector<8x8xf32>, vector<8x8xf32> -> vector<8x8xf32>
    %70 = vector.extract_strided_slice %4 {offsets = [8, 0], sizes = [8, 32], strides = [1, 1]} : vector<32x32xf32> to vector<8x32xf32>
    %cst_34 = arith.constant dense<0.000000e+00> : vector<8x32xf32>
    %71 = tpu.matmul %69, %70, %cst_34 {dimension_numbers = #tpu.dot_dimension_numbers<[1], [0], [0], [1], [0, 0, 1, 1], [], []>} : vector<8x8xf32>, vector<8x32xf32>, vector<8x32xf32> -> vector<8x32xf32>
    %72 = arith.addf %52, %71 : vector<8x32xf32>
    %73 = vector.extract_strided_slice %33 {offsets = [0, 16], sizes = [8, 8], strides = [1, 1]} : vector<8x96xf32> to vector<8x8xf32>
    %74 = vector.extract_strided_slice %33 {offsets = [0, 48], sizes = [8, 8], strides = [1, 1]} : vector<8x96xf32> to vector<8x8xf32>
    %75 = vector.extract_strided_slice %33 {offsets = [0, 80], sizes = [8, 8], strides = [1, 1]} : vector<8x96xf32> to vector<8x8xf32>
    %cst_35 = arith.constant dense<0.000000e+00> : vector<8x8xf32>
    %76 = tpu.matmul %73, %74, %cst_35 {dimension_numbers = #tpu.dot_dimension_numbers<[1], [1], [0], [0], [0, 0, 1, 0], [], []>} : vector<8x8xf32>, vector<8x8xf32>, vector<8x8xf32> -> vector<8x8xf32>
    %77 = vector.broadcast %22 : vector<1x8xf32> to vector<8x8xf32>
    %78 = arith.addf %76, %77 : vector<8x8xf32>
    %cst_36 = arith.constant dense<0xFF800000> : vector<8xf32>
    %79 = vector.multi_reduction <maximumf>, %78, %cst_36 [1] : vector<8x8xf32> to vector<8xf32>
    %80 = vector.shape_cast %79 : vector<8xf32> to vector<8x1xf32>
    %81 = vector.broadcast %80 : vector<8x1xf32> to vector<8x8xf32>
    %82 = arith.subf %78, %81 : vector<8x8xf32>
    %83 = math.exp %82 : vector<8x8xf32>
    %cst_37 = arith.constant dense<0.000000e+00> : vector<8xf32>
    %84 = vector.multi_reduction <add>, %83, %cst_37 [1] : vector<8x8xf32> to vector<8xf32>
    %85 = vector.shape_cast %84 : vector<8xf32> to vector<8x1xf32>
    %86 = tpu.reciprocal %85 {approx = true} : vector<8x1xf32> -> vector<8x1xf32>
    %87 = vector.broadcast %86 : vector<8x1xf32> to vector<8x8xf32>
    %88 = arith.mulf %83, %87 : vector<8x8xf32>
    %cst_38 = arith.constant dense<0.000000e+00> : vector<8x8xf32>
    %89 = tpu.matmul %88, %75, %cst_38 {dimension_numbers = #tpu.dot_dimension_numbers<[1], [0], [0], [1], [0, 0, 1, 1], [], []>} : vector<8x8xf32>, vector<8x8xf32>, vector<8x8xf32> -> vector<8x8xf32>
    %90 = vector.extract_strided_slice %4 {offsets = [16, 0], sizes = [8, 32], strides = [1, 1]} : vector<32x32xf32> to vector<8x32xf32>
    %cst_39 = arith.constant dense<0.000000e+00> : vector<8x32xf32>
    %91 = tpu.matmul %89, %90, %cst_39 {dimension_numbers = #tpu.dot_dimension_numbers<[1], [0], [0], [1], [0, 0, 1, 1], [], []>} : vector<8x8xf32>, vector<8x32xf32>, vector<8x32xf32> -> vector<8x32xf32>
    %92 = arith.addf %72, %91 : vector<8x32xf32>
    %93 = vector.extract_strided_slice %33 {offsets = [0, 24], sizes = [8, 8], strides = [1, 1]} : vector<8x96xf32> to vector<8x8xf32>
    %94 = vector.extract_strided_slice %33 {offsets = [0, 56], sizes = [8, 8], strides = [1, 1]} : vector<8x96xf32> to vector<8x8xf32>
    %95 = vector.extract_strided_slice %33 {offsets = [0, 88], sizes = [8, 8], strides = [1, 1]} : vector<8x96xf32> to vector<8x8xf32>
    %cst_40 = arith.constant dense<0.000000e+00> : vector<8x8xf32>
    %96 = tpu.matmul %93, %94, %cst_40 {dimension_numbers = #tpu.dot_dimension_numbers<[1], [1], [0], [0], [0, 0, 1, 0], [], []>} : vector<8x8xf32>, vector<8x8xf32>, vector<8x8xf32> -> vector<8x8xf32>
    %97 = vector.broadcast %22 : vector<1x8xf32> to vector<8x8xf32>
    %98 = arith.addf %96, %97 : vector<8x8xf32>
    %cst_41 = arith.constant dense<0xFF800000> : vector<8xf32>
    %99 = vector.multi_reduction <maximumf>, %98, %cst_41 [1] : vector<8x8xf32> to vector<8xf32>
    %100 = vector.shape_cast %99 : vector<8xf32> to vector<8x1xf32>
    %101 = vector.broadcast %100 : vector<8x1xf32> to vector<8x8xf32>
    %102 = arith.subf %98, %101 : vector<8x8xf32>
    %103 = math.exp %102 : vector<8x8xf32>
    %cst_42 = arith.constant dense<0.000000e+00> : vector<8xf32>
    %104 = vector.multi_reduction <add>, %103, %cst_42 [1] : vector<8x8xf32> to vector<8xf32>
    %105 = vector.shape_cast %104 : vector<8xf32> to vector<8x1xf32>
    %106 = tpu.reciprocal %105 {approx = true} : vector<8x1xf32> -> vector<8x1xf32>
    %107 = vector.broadcast %106 : vector<8x1xf32> to vector<8x8xf32>
    %108 = arith.mulf %103, %107 : vector<8x8xf32>
    %cst_43 = arith.constant dense<0.000000e+00> : vector<8x8xf32>
    %109 = tpu.matmul %108, %95, %cst_43 {dimension_numbers = #tpu.dot_dimension_numbers<[1], [0], [0], [1], [0, 0, 1, 1], [], []>} : vector<8x8xf32>, vector<8x8xf32>, vector<8x8xf32> -> vector<8x8xf32>
    %110 = vector.extract_strided_slice %4 {offsets = [24, 0], sizes = [8, 32], strides = [1, 1]} : vector<32x32xf32> to vector<8x32xf32>
    %cst_44 = arith.constant dense<0.000000e+00> : vector<8x32xf32>
    %111 = tpu.matmul %109, %110, %cst_44 {dimension_numbers = #tpu.dot_dimension_numbers<[1], [0], [0], [1], [0, 0, 1, 1], [], []>} : vector<8x8xf32>, vector<8x32xf32>, vector<8x32xf32> -> vector<8x32xf32>
    %112 = arith.addf %92, %111 : vector<8x32xf32>
    %113 = vector.extract_strided_slice %32 {offsets = [8, 0], sizes = [8, 96], strides = [1, 1]} : vector<16x96xf32> to vector<8x96xf32>
    %114 = vector.extract_strided_slice %113 {offsets = [0, 0], sizes = [8, 8], strides = [1, 1]} : vector<8x96xf32> to vector<8x8xf32>
    %115 = vector.extract_strided_slice %113 {offsets = [0, 32], sizes = [8, 8], strides = [1, 1]} : vector<8x96xf32> to vector<8x8xf32>
    %116 = vector.extract_strided_slice %113 {offsets = [0, 64], sizes = [8, 8], strides = [1, 1]} : vector<8x96xf32> to vector<8x8xf32>
    %cst_45 = arith.constant dense<0.000000e+00> : vector<8x8xf32>
    %117 = tpu.matmul %114, %115, %cst_45 {dimension_numbers = #tpu.dot_dimension_numbers<[1], [1], [0], [0], [0, 0, 1, 0], [], []>} : vector<8x8xf32>, vector<8x8xf32>, vector<8x8xf32> -> vector<8x8xf32>
    %118 = vector.broadcast %29 : vector<1x8xf32> to vector<8x8xf32>
    %119 = arith.addf %117, %118 : vector<8x8xf32>
    %cst_46 = arith.constant dense<0xFF800000> : vector<8xf32>
    %120 = vector.multi_reduction <maximumf>, %119, %cst_46 [1] : vector<8x8xf32> to vector<8xf32>
    %121 = vector.shape_cast %120 : vector<8xf32> to vector<8x1xf32>
    %122 = vector.broadcast %121 : vector<8x1xf32> to vector<8x8xf32>
    %123 = arith.subf %119, %122 : vector<8x8xf32>
    %124 = math.exp %123 : vector<8x8xf32>
    %cst_47 = arith.constant dense<0.000000e+00> : vector<8xf32>
    %125 = vector.multi_reduction <add>, %124, %cst_47 [1] : vector<8x8xf32> to vector<8xf32>
    %126 = vector.shape_cast %125 : vector<8xf32> to vector<8x1xf32>
    %127 = tpu.reciprocal %126 {approx = true} : vector<8x1xf32> -> vector<8x1xf32>
    %128 = vector.broadcast %127 : vector<8x1xf32> to vector<8x8xf32>
    %129 = arith.mulf %124, %128 : vector<8x8xf32>
    %cst_48 = arith.constant dense<0.000000e+00> : vector<8x8xf32>
    %130 = tpu.matmul %129, %116, %cst_48 {dimension_numbers = #tpu.dot_dimension_numbers<[1], [0], [0], [1], [0, 0, 1, 1], [], []>} : vector<8x8xf32>, vector<8x8xf32>, vector<8x8xf32> -> vector<8x8xf32>
    %131 = vector.extract_strided_slice %4 {offsets = [0, 0], sizes = [8, 32], strides = [1, 1]} : vector<32x32xf32> to vector<8x32xf32>
    %cst_49 = arith.constant dense<0.000000e+00> : vector<8x32xf32>
    %132 = tpu.matmul %130, %131, %cst_49 {dimension_numbers = #tpu.dot_dimension_numbers<[1], [0], [0], [1], [0, 0, 1, 1], [], []>} : vector<8x8xf32>, vector<8x32xf32>, vector<8x32xf32> -> vector<8x32xf32>
    %133 = vector.extract_strided_slice %113 {offsets = [0, 8], sizes = [8, 8], strides = [1, 1]} : vector<8x96xf32> to vector<8x8xf32>
    %134 = vector.extract_strided_slice %113 {offsets = [0, 40], sizes = [8, 8], strides = [1, 1]} : vector<8x96xf32> to vector<8x8xf32>
    %135 = vector.extract_strided_slice %113 {offsets = [0, 72], sizes = [8, 8], strides = [1, 1]} : vector<8x96xf32> to vector<8x8xf32>
    %cst_50 = arith.constant dense<0.000000e+00> : vector<8x8xf32>
    %136 = tpu.matmul %133, %134, %cst_50 {dimension_numbers = #tpu.dot_dimension_numbers<[1], [1], [0], [0], [0, 0, 1, 0], [], []>} : vector<8x8xf32>, vector<8x8xf32>, vector<8x8xf32> -> vector<8x8xf32>
    %137 = vector.broadcast %29 : vector<1x8xf32> to vector<8x8xf32>
    %138 = arith.addf %136, %137 : vector<8x8xf32>
    %cst_51 = arith.constant dense<0xFF800000> : vector<8xf32>
    %139 = vector.multi_reduction <maximumf>, %138, %cst_51 [1] : vector<8x8xf32> to vector<8xf32>
    %140 = vector.shape_cast %139 : vector<8xf32> to vector<8x1xf32>
    %141 = vector.broadcast %140 : vector<8x1xf32> to vector<8x8xf32>
    %142 = arith.subf %138, %141 : vector<8x8xf32>
    %143 = math.exp %142 : vector<8x8xf32>
    %cst_52 = arith.constant dense<0.000000e+00> : vector<8xf32>
    %144 = vector.multi_reduction <add>, %143, %cst_52 [1] : vector<8x8xf32> to vector<8xf32>
    %145 = vector.shape_cast %144 : vector<8xf32> to vector<8x1xf32>
    %146 = tpu.reciprocal %145 {approx = true} : vector<8x1xf32> -> vector<8x1xf32>
    %147 = vector.broadcast %146 : vector<8x1xf32> to vector<8x8xf32>
    %148 = arith.mulf %143, %147 : vector<8x8xf32>
    %cst_53 = arith.constant dense<0.000000e+00> : vector<8x8xf32>
    %149 = tpu.matmul %148, %135, %cst_53 {dimension_numbers = #tpu.dot_dimension_numbers<[1], [0], [0], [1], [0, 0, 1, 1], [], []>} : vector<8x8xf32>, vector<8x8xf32>, vector<8x8xf32> -> vector<8x8xf32>
    %150 = vector.extract_strided_slice %4 {offsets = [8, 0], sizes = [8, 32], strides = [1, 1]} : vector<32x32xf32> to vector<8x32xf32>
    %cst_54 = arith.constant dense<0.000000e+00> : vector<8x32xf32>
    %151 = tpu.matmul %149, %150, %cst_54 {dimension_numbers = #tpu.dot_dimension_numbers<[1], [0], [0], [1], [0, 0, 1, 1], [], []>} : vector<8x8xf32>, vector<8x32xf32>, vector<8x32xf32> -> vector<8x32xf32>
    %152 = arith.addf %132, %151 : vector<8x32xf32>
    %153 = vector.extract_strided_slice %113 {offsets = [0, 16], sizes = [8, 8], strides = [1, 1]} : vector<8x96xf32> to vector<8x8xf32>
    %154 = vector.extract_strided_slice %113 {offsets = [0, 48], sizes = [8, 8], strides = [1, 1]} : vector<8x96xf32> to vector<8x8xf32>
    %155 = vector.extract_strided_slice %113 {offsets = [0, 80], sizes = [8, 8], strides = [1, 1]} : vector<8x96xf32> to vector<8x8xf32>
    %cst_55 = arith.constant dense<0.000000e+00> : vector<8x8xf32>
    %156 = tpu.matmul %153, %154, %cst_55 {dimension_numbers = #tpu.dot_dimension_numbers<[1], [1], [0], [0], [0, 0, 1, 0], [], []>} : vector<8x8xf32>, vector<8x8xf32>, vector<8x8xf32> -> vector<8x8xf32>
    %157 = vector.broadcast %29 : vector<1x8xf32> to vector<8x8xf32>
    %158 = arith.addf %156, %157 : vector<8x8xf32>
    %cst_56 = arith.constant dense<0xFF800000> : vector<8xf32>
    %159 = vector.multi_reduction <maximumf>, %158, %cst_56 [1] : vector<8x8xf32> to vector<8xf32>
    %160 = vector.shape_cast %159 : vector<8xf32> to vector<8x1xf32>
    %161 = vector.broadcast %160 : vector<8x1xf32> to vector<8x8xf32>
    %162 = arith.subf %158, %161 : vector<8x8xf32>
    %163 = math.exp %162 : vector<8x8xf32>
    %cst_57 = arith.constant dense<0.000000e+00> : vector<8xf32>
    %164 = vector.multi_reduction <add>, %163, %cst_57 [1] : vector<8x8xf32> to vector<8xf32>
    %165 = vector.shape_cast %164 : vector<8xf32> to vector<8x1xf32>
    %166 = tpu.reciprocal %165 {approx = true} : vector<8x1xf32> -> vector<8x1xf32>
    %167 = vector.broadcast %166 : vector<8x1xf32> to vector<8x8xf32>
    %168 = arith.mulf %163, %167 : vector<8x8xf32>
    %cst_58 = arith.constant dense<0.000000e+00> : vector<8x8xf32>
    %169 = tpu.matmul %168, %155, %cst_58 {dimension_numbers = #tpu.dot_dimension_numbers<[1], [0], [0], [1], [0, 0, 1, 1], [], []>} : vector<8x8xf32>, vector<8x8xf32>, vector<8x8xf32> -> vector<8x8xf32>
    %170 = vector.extract_strided_slice %4 {offsets = [16, 0], sizes = [8, 32], strides = [1, 1]} : vector<32x32xf32> to vector<8x32xf32>
    %cst_59 = arith.constant dense<0.000000e+00> : vector<8x32xf32>
    %171 = tpu.matmul %169, %170, %cst_59 {dimension_numbers = #tpu.dot_dimension_numbers<[1], [0], [0], [1], [0, 0, 1, 1], [], []>} : vector<8x8xf32>, vector<8x32xf32>, vector<8x32xf32> -> vector<8x32xf32>
    %172 = arith.addf %152, %171 : vector<8x32xf32>
    %173 = vector.extract_strided_slice %113 {offsets = [0, 24], sizes = [8, 8], strides = [1, 1]} : vector<8x96xf32> to vector<8x8xf32>
    %174 = vector.extract_strided_slice %113 {offsets = [0, 56], sizes = [8, 8], strides = [1, 1]} : vector<8x96xf32> to vector<8x8xf32>
    %175 = vector.extract_strided_slice %113 {offsets = [0, 88], sizes = [8, 8], strides = [1, 1]} : vector<8x96xf32> to vector<8x8xf32>
    %cst_60 = arith.constant dense<0.000000e+00> : vector<8x8xf32>
    %176 = tpu.matmul %173, %174, %cst_60 {dimension_numbers = #tpu.dot_dimension_numbers<[1], [1], [0], [0], [0, 0, 1, 0], [], []>} : vector<8x8xf32>, vector<8x8xf32>, vector<8x8xf32> -> vector<8x8xf32>
    %177 = vector.broadcast %29 : vector<1x8xf32> to vector<8x8xf32>
    %178 = arith.addf %176, %177 : vector<8x8xf32>
    %cst_61 = arith.constant dense<0xFF800000> : vector<8xf32>
    %179 = vector.multi_reduction <maximumf>, %178, %cst_61 [1] : vector<8x8xf32> to vector<8xf32>
    %180 = vector.shape_cast %179 : vector<8xf32> to vector<8x1xf32>
    %181 = vector.broadcast %180 : vector<8x1xf32> to vector<8x8xf32>
    %182 = arith.subf %178, %181 : vector<8x8xf32>
    %183 = math.exp %182 : vector<8x8xf32>
    %cst_62 = arith.constant dense<0.000000e+00> : vector<8xf32>
    %184 = vector.multi_reduction <add>, %183, %cst_62 [1] : vector<8x8xf32> to vector<8xf32>
    %185 = vector.shape_cast %184 : vector<8xf32> to vector<8x1xf32>
    %186 = tpu.reciprocal %185 {approx = true} : vector<8x1xf32> -> vector<8x1xf32>
    %187 = vector.broadcast %186 : vector<8x1xf32> to vector<8x8xf32>
    %188 = arith.mulf %183, %187 : vector<8x8xf32>
    %cst_63 = arith.constant dense<0.000000e+00> : vector<8x8xf32>
    %189 = tpu.matmul %188, %175, %cst_63 {dimension_numbers = #tpu.dot_dimension_numbers<[1], [0], [0], [1], [0, 0, 1, 1], [], []>} : vector<8x8xf32>, vector<8x8xf32>, vector<8x8xf32> -> vector<8x8xf32>
    %190 = vector.extract_strided_slice %4 {offsets = [24, 0], sizes = [8, 32], strides = [1, 1]} : vector<32x32xf32> to vector<8x32xf32>
    %cst_64 = arith.constant dense<0.000000e+00> : vector<8x32xf32>
    %191 = tpu.matmul %189, %190, %cst_64 {dimension_numbers = #tpu.dot_dimension_numbers<[1], [0], [0], [1], [0, 0, 1, 1], [], []>} : vector<8x8xf32>, vector<8x32xf32>, vector<8x32xf32> -> vector<8x32xf32>
    %192 = arith.addf %172, %191 : vector<8x32xf32>
    %193 = tpu.concatenate %112, %192 in 0 : vector<8x32xf32>, vector<8x32xf32> -> vector<16x32xf32>
    %194 = arith.addf %1, %193 : vector<16x32xf32>
    %195 = vector.broadcast %9 : vector<1x32xf32> to vector<16x32xf32>
    %196 = arith.addf %194, %195 : vector<16x32xf32>
    %cst_65 = arith.constant dense<0.000000e+00> : vector<16xf32>
    %197 = vector.multi_reduction <add>, %196, %cst_65 [1] : vector<16x32xf32> to vector<16xf32>
    %198 = vector.shape_cast %197 : vector<16xf32> to vector<16x1xf32>
    %cst_66 = arith.constant 3.200000e+01 : f32
    %199 = vector.broadcast %cst_66 : f32 to vector<16x1xf32>
    %200 = arith.divf %198, %199 : vector<16x1xf32>
    %201 = vector.broadcast %200 : vector<16x1xf32> to vector<16x32xf32>
    %202 = arith.subf %196, %201 : vector<16x32xf32>
    %203 = arith.mulf %202, %202 : vector<16x32xf32>
    %cst_67 = arith.constant dense<0.000000e+00> : vector<16xf32>
    %204 = vector.multi_reduction <add>, %203, %cst_67 [1] : vector<16x32xf32> to vector<16xf32>
    %205 = vector.shape_cast %204 : vector<16xf32> to vector<16x1xf32>
    %cst_68 = arith.constant 3.200000e+01 : f32
    %206 = vector.broadcast %cst_68 : f32 to vector<16x1xf32>
    %207 = arith.divf %205, %206 : vector<16x1xf32>
    %cst_69 = arith.constant 9.99999974E-6 : f32
    %208 = vector.broadcast %cst_69 : f32 to vector<16x1xf32>
    %209 = arith.addf %207, %208 : vector<16x1xf32>
    %210 = math.rsqrt %209 : vector<16x1xf32>
    %211 = vector.broadcast %210 : vector<16x1xf32> to vector<16x32xf32>
    %212 = arith.mulf %202, %211 : vector<16x32xf32>
    %213 = vector.broadcast %10 : vector<1x32xf32> to vector<16x32xf32>
    %214 = arith.mulf %212, %213 : vector<16x32xf32>
    %215 = vector.broadcast %11 : vector<1x32xf32> to vector<16x32xf32>
    %216 = arith.addf %214, %215 : vector<16x32xf32>
    %cst_70 = arith.constant dense<0.000000e+00> : vector<16x64xf32>
    %217 = tpu.matmul %216, %5, %cst_70 {dimension_numbers = #tpu.dot_dimension_numbers<[1], [0], [0], [1], [0, 0, 1, 1], [], []>} : vector<16x32xf32>, vector<32x64xf32>, vector<16x64xf32> -> vector<16x64xf32>
    %218 = vector.broadcast %6 : vector<1x64xf32> to vector<16x64xf32>
    %219 = arith.addf %217, %218 : vector<16x64xf32>
    %cst_71 = arith.constant 0.000000e+00 : f32
    %220 = vector.broadcast %cst_71 : f32 to vector<16x64xf32>
    %221 = arith.maximumf %219, %220 : vector<16x64xf32>
    %cst_72 = arith.constant dense<0.000000e+00> : vector<16x32xf32>
    %222 = tpu.matmul %221, %7, %cst_72 {dimension_numbers = #tpu.dot_dimension_numbers<[1], [0], [0], [1], [0, 0, 1, 1], [], []>} : vector<16x64xf32>, vector<64x32xf32>, vector<16x32xf32> -> vector<16x32xf32>
    %223 = vector.broadcast %12 : vector<1x32xf32> to vector<16x32xf32>
    %224 = arith.addf %222, %223 : vector<16x32xf32>
    %225 = arith.addf %216, %224 : vector<16x32xf32>
    %cst_73 = arith.constant dense<0.000000e+00> : vector<16xf32>
    %226 = vector.multi_reduction <add>, %225, %cst_73 [1] : vector<16x32xf32> to vector<16xf32>
    %227 = vector.shape_cast %226 : vector<16xf32> to vector<16x1xf32>
    %cst_74 = arith.constant 3.200000e+01 : f32
    %228 = vector.broadcast %cst_74 : f32 to vector<16x1xf32>
    %229 = arith.divf %227, %228 : vector<16x1xf32>
    %230 = vector.broadcast %229 : vector<16x1xf32> to vector<16x32xf32>
    %231 = arith.subf %225, %230 : vector<16x32xf32>
    %232 = arith.mulf %231, %231 : vector<16x32xf32>
    %cst_75 = arith.constant dense<0.000000e+00> : vector<16xf32>
    %233 = vector.multi_reduction <add>, %232, %cst_75 [1] : vector<16x32xf32> to vector<16xf32>
    %234 = vector.shape_cast %233 : vector<16xf32> to vector<16x1xf32>
    %cst_76 = arith.constant 3.200000e+01 : f32
    %235 = vector.broadcast %cst_76 : f32 to vector<16x1xf32>
    %236 = arith.divf %234, %235 : vector<16x1xf32>
    %cst_77 = arith.constant 9.99999974E-6 : f32
    %237 = vector.broadcast %cst_77 : f32 to vector<16x1xf32>
    %238 = arith.addf %236, %237 : vector<16x1xf32>
    %239 = math.rsqrt %238 : vector<16x1xf32>
    %240 = vector.broadcast %239 : vector<16x1xf32> to vector<16x32xf32>
    %241 = arith.mulf %231, %240 : vector<16x32xf32>
    %242 = vector.broadcast %13 : vector<1x32xf32> to vector<16x32xf32>
    %243 = arith.mulf %241, %242 : vector<16x32xf32>
    %244 = vector.broadcast %14 : vector<1x32xf32> to vector<16x32xf32>
    %245 = arith.addf %243, %244 : vector<16x32xf32>
    %c1_i32 = arith.constant 1 : i32
    %cst_78 = arith.constant dense<0.000000e+00> : vector<16x96xf32>
    %246 = tpu.matmul %245, %2, %cst_78 {dimension_numbers = #tpu.dot_dimension_numbers<[1], [0], [0], [1], [0, 0, 1, 1], [], []>} : vector<16x32xf32>, vector<32x96xf32>, vector<16x96xf32> -> vector<16x96xf32>
    %247 = vector.broadcast %3 : vector<1x96xf32> to vector<16x96xf32>
    %248 = arith.addf %246, %247 : vector<16x96xf32>
    %249 = vector.extract_strided_slice %248 {offsets = [0, 0], sizes = [8, 96], strides = [1, 1]} : vector<16x96xf32> to vector<8x96xf32>
    %250 = vector.extract_strided_slice %249 {offsets = [0, 0], sizes = [8, 8], strides = [1, 1]} : vector<8x96xf32> to vector<8x8xf32>
    %251 = vector.extract_strided_slice %249 {offsets = [0, 32], sizes = [8, 8], strides = [1, 1]} : vector<8x96xf32> to vector<8x8xf32>
    %252 = vector.extract_strided_slice %249 {offsets = [0, 64], sizes = [8, 8], strides = [1, 1]} : vector<8x96xf32> to vector<8x8xf32>
    %cst_79 = arith.constant dense<0.000000e+00> : vector<8x8xf32>
    %253 = tpu.matmul %250, %251, %cst_79 {dimension_numbers = #tpu.dot_dimension_numbers<[1], [1], [0], [0], [0, 0, 1, 0], [], []>} : vector<8x8xf32>, vector<8x8xf32>, vector<8x8xf32> -> vector<8x8xf32>
    %254 = vector.broadcast %22 : vector<1x8xf32> to vector<8x8xf32>
    %255 = arith.addf %253, %254 : vector<8x8xf32>
    %cst_80 = arith.constant dense<0xFF800000> : vector<8xf32>
    %256 = vector.multi_reduction <maximumf>, %255, %cst_80 [1] : vector<8x8xf32> to vector<8xf32>
    %257 = vector.shape_cast %256 : vector<8xf32> to vector<8x1xf32>
    %258 = vector.broadcast %257 : vector<8x1xf32> to vector<8x8xf32>
    %259 = arith.subf %255, %258 : vector<8x8xf32>
    %260 = math.exp %259 : vector<8x8xf32>
    %cst_81 = arith.constant dense<0.000000e+00> : vector<8xf32>
    %261 = vector.multi_reduction <add>, %260, %cst_81 [1] : vector<8x8xf32> to vector<8xf32>
    %262 = vector.shape_cast %261 : vector<8xf32> to vector<8x1xf32>
    %263 = tpu.reciprocal %262 {approx = true} : vector<8x1xf32> -> vector<8x1xf32>
    %264 = vector.broadcast %263 : vector<8x1xf32> to vector<8x8xf32>
    %265 = arith.mulf %260, %264 : vector<8x8xf32>
    %cst_82 = arith.constant dense<0.000000e+00> : vector<8x8xf32>
    %266 = tpu.matmul %265, %252, %cst_82 {dimension_numbers = #tpu.dot_dimension_numbers<[1], [0], [0], [1], [0, 0, 1, 1], [], []>} : vector<8x8xf32>, vector<8x8xf32>, vector<8x8xf32> -> vector<8x8xf32>
    %267 = vector.extract_strided_slice %4 {offsets = [0, 0], sizes = [8, 32], strides = [1, 1]} : vector<32x32xf32> to vector<8x32xf32>
    %cst_83 = arith.constant dense<0.000000e+00> : vector<8x32xf32>
    %268 = tpu.matmul %266, %267, %cst_83 {dimension_numbers = #tpu.dot_dimension_numbers<[1], [0], [0], [1], [0, 0, 1, 1], [], []>} : vector<8x8xf32>, vector<8x32xf32>, vector<8x32xf32> -> vector<8x32xf32>
    %269 = vector.extract_strided_slice %249 {offsets = [0, 8], sizes = [8, 8], strides = [1, 1]} : vector<8x96xf32> to vector<8x8xf32>
    %270 = vector.extract_strided_slice %249 {offsets = [0, 40], sizes = [8, 8], strides = [1, 1]} : vector<8x96xf32> to vector<8x8xf32>
    %271 = vector.extract_strided_slice %249 {offsets = [0, 72], sizes = [8, 8], strides = [1, 1]} : vector<8x96xf32> to vector<8x8xf32>
    %cst_84 = arith.constant dense<0.000000e+00> : vector<8x8xf32>
    %272 = tpu.matmul %269, %270, %cst_84 {dimension_numbers = #tpu.dot_dimension_numbers<[1], [1], [0], [0], [0, 0, 1, 0], [], []>} : vector<8x8xf32>, vector<8x8xf32>, vector<8x8xf32> -> vector<8x8xf32>
    %273 = vector.broadcast %22 : vector<1x8xf32> to vector<8x8xf32>
    %274 = arith.addf %272, %273 : vector<8x8xf32>
    %cst_85 = arith.constant dense<0xFF800000> : vector<8xf32>
    %275 = vector.multi_reduction <maximumf>, %274, %cst_85 [1] : vector<8x8xf32> to vector<8xf32>
    %276 = vector.shape_cast %275 : vector<8xf32> to vector<8x1xf32>
    %277 = vector.broadcast %276 : vector<8x1xf32> to vector<8x8xf32>
    %278 = arith.subf %274, %277 : vector<8x8xf32>
    %279 = math.exp %278 : vector<8x8xf32>
    %cst_86 = arith.constant dense<0.000000e+00> : vector<8xf32>
    %280 = vector.multi_reduction <add>, %279, %cst_86 [1] : vector<8x8xf32> to vector<8xf32>
    %281 = vector.shape_cast %280 : vector<8xf32> to vector<8x1xf32>
    %282 = tpu.reciprocal %281 {approx = true} : vector<8x1xf32> -> vector<8x1xf32>
    %283 = vector.broadcast %282 : vector<8x1xf32> to vector<8x8xf32>
    %284 = arith.mulf %279, %283 : vector<8x8xf32>
    %cst_87 = arith.constant dense<0.000000e+00> : vector<8x8xf32>
    %285 = tpu.matmul %284, %271, %cst_87 {dimension_numbers = #tpu.dot_dimension_numbers<[1], [0], [0], [1], [0, 0, 1, 1], [], []>} : vector<8x8xf32>, vector<8x8xf32>, vector<8x8xf32> -> vector<8x8xf32>
    %286 = vector.extract_strided_slice %4 {offsets = [8, 0], sizes = [8, 32], strides = [1, 1]} : vector<32x32xf32> to vector<8x32xf32>
    %cst_88 = arith.constant dense<0.000000e+00> : vector<8x32xf32>
    %287 = tpu.matmul %285, %286, %cst_88 {dimension_numbers = #tpu.dot_dimension_numbers<[1], [0], [0], [1], [0, 0, 1, 1], [], []>} : vector<8x8xf32>, vector<8x32xf32>, vector<8x32xf32> -> vector<8x32xf32>
    %288 = arith.addf %268, %287 : vector<8x32xf32>
    %289 = vector.extract_strided_slice %249 {offsets = [0, 16], sizes = [8, 8], strides = [1, 1]} : vector<8x96xf32> to vector<8x8xf32>
    %290 = vector.extract_strided_slice %249 {offsets = [0, 48], sizes = [8, 8], strides = [1, 1]} : vector<8x96xf32> to vector<8x8xf32>
    %291 = vector.extract_strided_slice %249 {offsets = [0, 80], sizes = [8, 8], strides = [1, 1]} : vector<8x96xf32> to vector<8x8xf32>
    %cst_89 = arith.constant dense<0.000000e+00> : vector<8x8xf32>
    %292 = tpu.matmul %289, %290, %cst_89 {dimension_numbers = #tpu.dot_dimension_numbers<[1], [1], [0], [0], [0, 0, 1, 0], [], []>} : vector<8x8xf32>, vector<8x8xf32>, vector<8x8xf32> -> vector<8x8xf32>
    %293 = vector.broadcast %22 : vector<1x8xf32> to vector<8x8xf32>
    %294 = arith.addf %292, %293 : vector<8x8xf32>
    %cst_90 = arith.constant dense<0xFF800000> : vector<8xf32>
    %295 = vector.multi_reduction <maximumf>, %294, %cst_90 [1] : vector<8x8xf32> to vector<8xf32>
    %296 = vector.shape_cast %295 : vector<8xf32> to vector<8x1xf32>
    %297 = vector.broadcast %296 : vector<8x1xf32> to vector<8x8xf32>
    %298 = arith.subf %294, %297 : vector<8x8xf32>
    %299 = math.exp %298 : vector<8x8xf32>
    %cst_91 = arith.constant dense<0.000000e+00> : vector<8xf32>
    %300 = vector.multi_reduction <add>, %299, %cst_91 [1] : vector<8x8xf32> to vector<8xf32>
    %301 = vector.shape_cast %300 : vector<8xf32> to vector<8x1xf32>
    %302 = tpu.reciprocal %301 {approx = true} : vector<8x1xf32> -> vector<8x1xf32>
    %303 = vector.broadcast %302 : vector<8x1xf32> to vector<8x8xf32>
    %304 = arith.mulf %299, %303 : vector<8x8xf32>
    %cst_92 = arith.constant dense<0.000000e+00> : vector<8x8xf32>
    %305 = tpu.matmul %304, %291, %cst_92 {dimension_numbers = #tpu.dot_dimension_numbers<[1], [0], [0], [1], [0, 0, 1, 1], [], []>} : vector<8x8xf32>, vector<8x8xf32>, vector<8x8xf32> -> vector<8x8xf32>
    %306 = vector.extract_strided_slice %4 {offsets = [16, 0], sizes = [8, 32], strides = [1, 1]} : vector<32x32xf32> to vector<8x32xf32>
    %cst_93 = arith.constant dense<0.000000e+00> : vector<8x32xf32>
    %307 = tpu.matmul %305, %306, %cst_93 {dimension_numbers = #tpu.dot_dimension_numbers<[1], [0], [0], [1], [0, 0, 1, 1], [], []>} : vector<8x8xf32>, vector<8x32xf32>, vector<8x32xf32> -> vector<8x32xf32>
    %308 = arith.addf %288, %307 : vector<8x32xf32>
    %309 = vector.extract_strided_slice %249 {offsets = [0, 24], sizes = [8, 8], strides = [1, 1]} : vector<8x96xf32> to vector<8x8xf32>
    %310 = vector.extract_strided_slice %249 {offsets = [0, 56], sizes = [8, 8], strides = [1, 1]} : vector<8x96xf32> to vector<8x8xf32>
    %311 = vector.extract_strided_slice %249 {offsets = [0, 88], sizes = [8, 8], strides = [1, 1]} : vector<8x96xf32> to vector<8x8xf32>
    %cst_94 = arith.constant dense<0.000000e+00> : vector<8x8xf32>
    %312 = tpu.matmul %309, %310, %cst_94 {dimension_numbers = #tpu.dot_dimension_numbers<[1], [1], [0], [0], [0, 0, 1, 0], [], []>} : vector<8x8xf32>, vector<8x8xf32>, vector<8x8xf32> -> vector<8x8xf32>
    %313 = vector.broadcast %22 : vector<1x8xf32> to vector<8x8xf32>
    %314 = arith.addf %312, %313 : vector<8x8xf32>
    %cst_95 = arith.constant dense<0xFF800000> : vector<8xf32>
    %315 = vector.multi_reduction <maximumf>, %314, %cst_95 [1] : vector<8x8xf32> to vector<8xf32>
    %316 = vector.shape_cast %315 : vector<8xf32> to vector<8x1xf32>
    %317 = vector.broadcast %316 : vector<8x1xf32> to vector<8x8xf32>
    %318 = arith.subf %314, %317 : vector<8x8xf32>
    %319 = math.exp %318 : vector<8x8xf32>
    %cst_96 = arith.constant dense<0.000000e+00> : vector<8xf32>
    %320 = vector.multi_reduction <add>, %319, %cst_96 [1] : vector<8x8xf32> to vector<8xf32>
    %321 = vector.shape_cast %320 : vector<8xf32> to vector<8x1xf32>
    %322 = tpu.reciprocal %321 {approx = true} : vector<8x1xf32> -> vector<8x1xf32>
    %323 = vector.broadcast %322 : vector<8x1xf32> to vector<8x8xf32>
    %324 = arith.mulf %319, %323 : vector<8x8xf32>
    %cst_97 = arith.constant dense<0.000000e+00> : vector<8x8xf32>
    %325 = tpu.matmul %324, %311, %cst_97 {dimension_numbers = #tpu.dot_dimension_numbers<[1], [0], [0], [1], [0, 0, 1, 1], [], []>} : vector<8x8xf32>, vector<8x8xf32>, vector<8x8xf32> -> vector<8x8xf32>
    %326 = vector.extract_strided_slice %4 {offsets = [24, 0], sizes = [8, 32], strides = [1, 1]} : vector<32x32xf32> to vector<8x32xf32>
    %cst_98 = arith.constant dense<0.000000e+00> : vector<8x32xf32>
    %327 = tpu.matmul %325, %326, %cst_98 {dimension_numbers = #tpu.dot_dimension_numbers<[1], [0], [0], [1], [0, 0, 1, 1], [], []>} : vector<8x8xf32>, vector<8x32xf32>, vector<8x32xf32> -> vector<8x32xf32>
    %328 = arith.addf %308, %327 : vector<8x32xf32>
    %329 = vector.extract_strided_slice %248 {offsets = [8, 0], sizes = [8, 96], strides = [1, 1]} : vector<16x96xf32> to vector<8x96xf32>
    %330 = vector.extract_strided_slice %329 {offsets = [0, 0], sizes = [8, 8], strides = [1, 1]} : vector<8x96xf32> to vector<8x8xf32>
    %331 = vector.extract_strided_slice %329 {offsets = [0, 32], sizes = [8, 8], strides = [1, 1]} : vector<8x96xf32> to vector<8x8xf32>
    %332 = vector.extract_strided_slice %329 {offsets = [0, 64], sizes = [8, 8], strides = [1, 1]} : vector<8x96xf32> to vector<8x8xf32>
    %cst_99 = arith.constant dense<0.000000e+00> : vector<8x8xf32>
    %333 = tpu.matmul %330, %331, %cst_99 {dimension_numbers = #tpu.dot_dimension_numbers<[1], [1], [0], [0], [0, 0, 1, 0], [], []>} : vector<8x8xf32>, vector<8x8xf32>, vector<8x8xf32> -> vector<8x8xf32>
    %334 = vector.broadcast %29 : vector<1x8xf32> to vector<8x8xf32>
    %335 = arith.addf %333, %334 : vector<8x8xf32>
    %cst_100 = arith.constant dense<0xFF800000> : vector<8xf32>
    %336 = vector.multi_reduction <maximumf>, %335, %cst_100 [1] : vector<8x8xf32> to vector<8xf32>
    %337 = vector.shape_cast %336 : vector<8xf32> to vector<8x1xf32>
    %338 = vector.broadcast %337 : vector<8x1xf32> to vector<8x8xf32>
    %339 = arith.subf %335, %338 : vector<8x8xf32>
    %340 = math.exp %339 : vector<8x8xf32>
    %cst_101 = arith.constant dense<0.000000e+00> : vector<8xf32>
    %341 = vector.multi_reduction <add>, %340, %cst_101 [1] : vector<8x8xf32> to vector<8xf32>
    %342 = vector.shape_cast %341 : vector<8xf32> to vector<8x1xf32>
    %343 = tpu.reciprocal %342 {approx = true} : vector<8x1xf32> -> vector<8x1xf32>
    %344 = vector.broadcast %343 : vector<8x1xf32> to vector<8x8xf32>
    %345 = arith.mulf %340, %344 : vector<8x8xf32>
    %cst_102 = arith.constant dense<0.000000e+00> : vector<8x8xf32>
    %346 = tpu.matmul %345, %332, %cst_102 {dimension_numbers = #tpu.dot_dimension_numbers<[1], [0], [0], [1], [0, 0, 1, 1], [], []>} : vector<8x8xf32>, vector<8x8xf32>, vector<8x8xf32> -> vector<8x8xf32>
    %347 = vector.extract_strided_slice %4 {offsets = [0, 0], sizes = [8, 32], strides = [1, 1]} : vector<32x32xf32> to vector<8x32xf32>
    %cst_103 = arith.constant dense<0.000000e+00> : vector<8x32xf32>
    %348 = tpu.matmul %346, %347, %cst_103 {dimension_numbers = #tpu.dot_dimension_numbers<[1], [0], [0], [1], [0, 0, 1, 1], [], []>} : vector<8x8xf32>, vector<8x32xf32>, vector<8x32xf32> -> vector<8x32xf32>
    %349 = vector.extract_strided_slice %329 {offsets = [0, 8], sizes = [8, 8], strides = [1, 1]} : vector<8x96xf32> to vector<8x8xf32>
    %350 = vector.extract_strided_slice %329 {offsets = [0, 40], sizes = [8, 8], strides = [1, 1]} : vector<8x96xf32> to vector<8x8xf32>
    %351 = vector.extract_strided_slice %329 {offsets = [0, 72], sizes = [8, 8], strides = [1, 1]} : vector<8x96xf32> to vector<8x8xf32>
    %cst_104 = arith.constant dense<0.000000e+00> : vector<8x8xf32>
    %352 = tpu.matmul %349, %350, %cst_104 {dimension_numbers = #tpu.dot_dimension_numbers<[1], [1], [0], [0], [0, 0, 1, 0], [], []>} : vector<8x8xf32>, vector<8x8xf32>, vector<8x8xf32> -> vector<8x8xf32>
    %353 = vector.broadcast %29 : vector<1x8xf32> to vector<8x8xf32>
    %354 = arith.addf %352, %353 : vector<8x8xf32>
    %cst_105 = arith.constant dense<0xFF800000> : vector<8xf32>
    %355 = vector.multi_reduction <maximumf>, %354, %cst_105 [1] : vector<8x8xf32> to vector<8xf32>
    %356 = vector.shape_cast %355 : vector<8xf32> to vector<8x1xf32>
    %357 = vector.broadcast %356 : vector<8x1xf32> to vector<8x8xf32>
    %358 = arith.subf %354, %357 : vector<8x8xf32>
    %359 = math.exp %358 : vector<8x8xf32>
    %cst_106 = arith.constant dense<0.000000e+00> : vector<8xf32>
    %360 = vector.multi_reduction <add>, %359, %cst_106 [1] : vector<8x8xf32> to vector<8xf32>
    %361 = vector.shape_cast %360 : vector<8xf32> to vector<8x1xf32>
    %362 = tpu.reciprocal %361 {approx = true} : vector<8x1xf32> -> vector<8x1xf32>
    %363 = vector.broadcast %362 : vector<8x1xf32> to vector<8x8xf32>
    %364 = arith.mulf %359, %363 : vector<8x8xf32>
    %cst_107 = arith.constant dense<0.000000e+00> : vector<8x8xf32>
    %365 = tpu.matmul %364, %351, %cst_107 {dimension_numbers = #tpu.dot_dimension_numbers<[1], [0], [0], [1], [0, 0, 1, 1], [], []>} : vector<8x8xf32>, vector<8x8xf32>, vector<8x8xf32> -> vector<8x8xf32>
    %366 = vector.extract_strided_slice %4 {offsets = [8, 0], sizes = [8, 32], strides = [1, 1]} : vector<32x32xf32> to vector<8x32xf32>
    %cst_108 = arith.constant dense<0.000000e+00> : vector<8x32xf32>
    %367 = tpu.matmul %365, %366, %cst_108 {dimension_numbers = #tpu.dot_dimension_numbers<[1], [0], [0], [1], [0, 0, 1, 1], [], []>} : vector<8x8xf32>, vector<8x32xf32>, vector<8x32xf32> -> vector<8x32xf32>
    %368 = arith.addf %348, %367 : vector<8x32xf32>
    %369 = vector.extract_strided_slice %329 {offsets = [0, 16], sizes = [8, 8], strides = [1, 1]} : vector<8x96xf32> to vector<8x8xf32>
    %370 = vector.extract_strided_slice %329 {offsets = [0, 48], sizes = [8, 8], strides = [1, 1]} : vector<8x96xf32> to vector<8x8xf32>
    %371 = vector.extract_strided_slice %329 {offsets = [0, 80], sizes = [8, 8], strides = [1, 1]} : vector<8x96xf32> to vector<8x8xf32>
    %cst_109 = arith.constant dense<0.000000e+00> : vector<8x8xf32>
    %372 = tpu.matmul %369, %370, %cst_109 {dimension_numbers = #tpu.dot_dimension_numbers<[1], [1], [0], [0], [0, 0, 1, 0], [], []>} : vector<8x8xf32>, vector<8x8xf32>, vector<8x8xf32> -> vector<8x8xf32>
    %373 = vector.broadcast %29 : vector<1x8xf32> to vector<8x8xf32>
    %374 = arith.addf %372, %373 : vector<8x8xf32>
    %cst_110 = arith.constant dense<0xFF800000> : vector<8xf32>
    %375 = vector.multi_reduction <maximumf>, %374, %cst_110 [1] : vector<8x8xf32> to vector<8xf32>
    %376 = vector.shape_cast %375 : vector<8xf32> to vector<8x1xf32>
    %377 = vector.broadcast %376 : vector<8x1xf32> to vector<8x8xf32>
    %378 = arith.subf %374, %377 : vector<8x8xf32>
    %379 = math.exp %378 : vector<8x8xf32>
    %cst_111 = arith.constant dense<0.000000e+00> : vector<8xf32>
    %380 = vector.multi_reduction <add>, %379, %cst_111 [1] : vector<8x8xf32> to vector<8xf32>
    %381 = vector.shape_cast %380 : vector<8xf32> to vector<8x1xf32>
    %382 = tpu.reciprocal %381 {approx = true} : vector<8x1xf32> -> vector<8x1xf32>
    %383 = vector.broadcast %382 : vector<8x1xf32> to vector<8x8xf32>
    %384 = arith.mulf %379, %383 : vector<8x8xf32>
    %cst_112 = arith.constant dense<0.000000e+00> : vector<8x8xf32>
    %385 = tpu.matmul %384, %371, %cst_112 {dimension_numbers = #tpu.dot_dimension_numbers<[1], [0], [0], [1], [0, 0, 1, 1], [], []>} : vector<8x8xf32>, vector<8x8xf32>, vector<8x8xf32> -> vector<8x8xf32>
    %386 = vector.extract_strided_slice %4 {offsets = [16, 0], sizes = [8, 32], strides = [1, 1]} : vector<32x32xf32> to vector<8x32xf32>
    %cst_113 = arith.constant dense<0.000000e+00> : vector<8x32xf32>
    %387 = tpu.matmul %385, %386, %cst_113 {dimension_numbers = #tpu.dot_dimension_numbers<[1], [0], [0], [1], [0, 0, 1, 1], [], []>} : vector<8x8xf32>, vector<8x32xf32>, vector<8x32xf32> -> vector<8x32xf32>
    %388 = arith.addf %368, %387 : vector<8x32xf32>
    %389 = vector.extract_strided_slice %329 {offsets = [0, 24], sizes = [8, 8], strides = [1, 1]} : vector<8x96xf32> to vector<8x8xf32>
    %390 = vector.extract_strided_slice %329 {offsets = [0, 56], sizes = [8, 8], strides = [1, 1]} : vector<8x96xf32> to vector<8x8xf32>
    %391 = vector.extract_strided_slice %329 {offsets = [0, 88], sizes = [8, 8], strides = [1, 1]} : vector<8x96xf32> to vector<8x8xf32>
    %cst_114 = arith.constant dense<0.000000e+00> : vector<8x8xf32>
    %392 = tpu.matmul %389, %390, %cst_114 {dimension_numbers = #tpu.dot_dimension_numbers<[1], [1], [0], [0], [0, 0, 1, 0], [], []>} : vector<8x8xf32>, vector<8x8xf32>, vector<8x8xf32> -> vector<8x8xf32>
    %393 = vector.broadcast %29 : vector<1x8xf32> to vector<8x8xf32>
    %394 = arith.addf %392, %393 : vector<8x8xf32>
    %cst_115 = arith.constant dense<0xFF800000> : vector<8xf32>
    %395 = vector.multi_reduction <maximumf>, %394, %cst_115 [1] : vector<8x8xf32> to vector<8xf32>
    %396 = vector.shape_cast %395 : vector<8xf32> to vector<8x1xf32>
    %397 = vector.broadcast %396 : vector<8x1xf32> to vector<8x8xf32>
    %398 = arith.subf %394, %397 : vector<8x8xf32>
    %399 = math.exp %398 : vector<8x8xf32>
    %cst_116 = arith.constant dense<0.000000e+00> : vector<8xf32>
    %400 = vector.multi_reduction <add>, %399, %cst_116 [1] : vector<8x8xf32> to vector<8xf32>
    %401 = vector.shape_cast %400 : vector<8xf32> to vector<8x1xf32>
    %402 = tpu.reciprocal %401 {approx = true} : vector<8x1xf32> -> vector<8x1xf32>
    %403 = vector.broadcast %402 : vector<8x1xf32> to vector<8x8xf32>
    %404 = arith.mulf %399, %403 : vector<8x8xf32>
    %cst_117 = arith.constant dense<0.000000e+00> : vector<8x8xf32>
    %405 = tpu.matmul %404, %391, %cst_117 {dimension_numbers = #tpu.dot_dimension_numbers<[1], [0], [0], [1], [0, 0, 1, 1], [], []>} : vector<8x8xf32>, vector<8x8xf32>, vector<8x8xf32> -> vector<8x8xf32>
    %406 = vector.extract_strided_slice %4 {offsets = [24, 0], sizes = [8, 32], strides = [1, 1]} : vector<32x32xf32> to vector<8x32xf32>
    %cst_118 = arith.constant dense<0.000000e+00> : vector<8x32xf32>
    %407 = tpu.matmul %405, %406, %cst_118 {dimension_numbers = #tpu.dot_dimension_numbers<[1], [0], [0], [1], [0, 0, 1, 1], [], []>} : vector<8x8xf32>, vector<8x32xf32>, vector<8x32xf32> -> vector<8x32xf32>
    %408 = arith.addf %388, %407 : vector<8x32xf32>
    %409 = tpu.concatenate %328, %408 in 0 : vector<8x32xf32>, vector<8x32xf32> -> vector<16x32xf32>
    %410 = arith.addf %245, %409 : vector<16x32xf32>
    %411 = vector.broadcast %9 : vector<1x32xf32> to vector<16x32xf32>
    %412 = arith.addf %410, %411 : vector<16x32xf32>
    %cst_119 = arith.constant dense<0.000000e+00> : vector<16xf32>
    %413 = vector.multi_reduction <add>, %412, %cst_119 [1] : vector<16x32xf32> to vector<16xf32>
    %414 = vector.shape_cast %413 : vector<16xf32> to vector<16x1xf32>
    %cst_120 = arith.constant 3.200000e+01 : f32
    %415 = vector.broadcast %cst_120 : f32 to vector<16x1xf32>
    %416 = arith.divf %414, %415 : vector<16x1xf32>
    %417 = vector.broadcast %416 : vector<16x1xf32> to vector<16x32xf32>
    %418 = arith.subf %412, %417 : vector<16x32xf32>
    %419 = arith.mulf %418, %418 : vector<16x32xf32>
    %cst_121 = arith.constant dense<0.000000e+00> : vector<16xf32>
    %420 = vector.multi_reduction <add>, %419, %cst_121 [1] : vector<16x32xf32> to vector<16xf32>
    %421 = vector.shape_cast %420 : vector<16xf32> to vector<16x1xf32>
    %cst_122 = arith.constant 3.200000e+01 : f32
    %422 = vector.broadcast %cst_122 : f32 to vector<16x1xf32>
    %423 = arith.divf %421, %422 : vector<16x1xf32>
    %cst_123 = arith.constant 9.99999974E-6 : f32
    %424 = vector.broadcast %cst_123 : f32 to vector<16x1xf32>
    %425 = arith.addf %423, %424 : vector<16x1xf32>
    %426 = math.rsqrt %425 : vector<16x1xf32>
    %427 = vector.broadcast %426 : vector<16x1xf32> to vector<16x32xf32>
    %428 = arith.mulf %418, %427 : vector<16x32xf32>
    %429 = vector.broadcast %10 : vector<1x32xf32> to vector<16x32xf32>
    %430 = arith.mulf %428, %429 : vector<16x32xf32>
    %431 = vector.broadcast %11 : vector<1x32xf32> to vector<16x32xf32>
    %432 = arith.addf %430, %431 : vector<16x32xf32>
    %cst_124 = arith.constant dense<0.000000e+00> : vector<16x64xf32>
    %433 = tpu.matmul %432, %5, %cst_124 {dimension_numbers = #tpu.dot_dimension_numbers<[1], [0], [0], [1], [0, 0, 1, 1], [], []>} : vector<16x32xf32>, vector<32x64xf32>, vector<16x64xf32> -> vector<16x64xf32>
    %434 = vector.broadcast %6 : vector<1x64xf32> to vector<16x64xf32>
    %435 = arith.addf %433, %434 : vector<16x64xf32>
    %cst_125 = arith.constant 0.000000e+00 : f32
    %436 = vector.broadcast %cst_125 : f32 to vector<16x64xf32>
    %437 = arith.maximumf %435, %436 : vector<16x64xf32>
    %cst_126 = arith.constant dense<0.000000e+00> : vector<16x32xf32>
    %438 = tpu.matmul %437, %7, %cst_126 {dimension_numbers = #tpu.dot_dimension_numbers<[1], [0], [0], [1], [0, 0, 1, 1], [], []>} : vector<16x64xf32>, vector<64x32xf32>, vector<16x32xf32> -> vector<16x32xf32>
    %439 = vector.broadcast %12 : vector<1x32xf32> to vector<16x32xf32>
    %440 = arith.addf %438, %439 : vector<16x32xf32>
    %441 = arith.addf %432, %440 : vector<16x32xf32>
    %cst_127 = arith.constant dense<0.000000e+00> : vector<16xf32>
    %442 = vector.multi_reduction <add>, %441, %cst_127 [1] : vector<16x32xf32> to vector<16xf32>
    %443 = vector.shape_cast %442 : vector<16xf32> to vector<16x1xf32>
    %cst_128 = arith.constant 3.200000e+01 : f32
    %444 = vector.broadcast %cst_128 : f32 to vector<16x1xf32>
    %445 = arith.divf %443, %444 : vector<16x1xf32>
    %446 = vector.broadcast %445 : vector<16x1xf32> to vector<16x32xf32>
    %447 = arith.subf %441, %446 : vector<16x32xf32>
    %448 = arith.mulf %447, %447 : vector<16x32xf32>
    %cst_129 = arith.constant dense<0.000000e+00> : vector<16xf32>
    %449 = vector.multi_reduction <add>, %448, %cst_129 [1] : vector<16x32xf32> to vector<16xf32>
    %450 = vector.shape_cast %449 : vector<16xf32> to vector<16x1xf32>
    %cst_130 = arith.constant 3.200000e+01 : f32
    %451 = vector.broadcast %cst_130 : f32 to vector<16x1xf32>
    %452 = arith.divf %450, %451 : vector<16x1xf32>
    %cst_131 = arith.constant 9.99999974E-6 : f32
    %453 = vector.broadcast %cst_131 : f32 to vector<16x1xf32>
    %454 = arith.addf %452, %453 : vector<16x1xf32>
    %455 = math.rsqrt %454 : vector<16x1xf32>
    %456 = vector.broadcast %455 : vector<16x1xf32> to vector<16x32xf32>
    %457 = arith.mulf %447, %456 : vector<16x32xf32>
    %458 = vector.broadcast %13 : vector<1x32xf32> to vector<16x32xf32>
    %459 = arith.mulf %457, %458 : vector<16x32xf32>
    %460 = vector.broadcast %14 : vector<1x32xf32> to vector<16x32xf32>
    %461 = arith.addf %459, %460 : vector<16x32xf32>
    %462 = vector.shape_cast %461 : vector<16x32xf32> to vector<2x8x32xf32>
    %c0_132 = arith.constant 0 : index
    %c0_133 = arith.constant 0 : index
    %c0_134 = arith.constant 0 : index
    %463 = vector.load %arg10[%c0_132, %c0_133, %c0_134] : memref<2x8x32xf32, #tpu.memory_space<vmem>>, vector<2x8x32xf32>
    tpu.vector_store %arg10[%c0_132, %c0_133, %c0_134], %462 {strides = array<i32>} : memref<2x8x32xf32, #tpu.memory_space<vmem>>, vector<2x8x32xf32>,
    return
  }
  func.func @transform_0(%arg0: i32) -> (i32, i32, i32) {
    %c0_i32 = arith.constant 0 : i32
    %c0_i32_0 = arith.constant 0 : i32
    %c0_i32_1 = arith.constant 0 : i32
    return %arg0, %c0_i32, %c0_i32_0 : i32, i32, i32
  }
  func.func @transform_1(%arg0: i32) -> (i32, i32, i32) {
    %c0_i32 = arith.constant 0 : i32
    %c0_i32_0 = arith.constant 0 : i32
    %c0_i32_1 = arith.constant 0 : i32
    return %arg0, %c0_i32, %c0_i32_0 : i32, i32, i32
  }
  func.func @transform_2(%arg0: i32) -> (i32, i32) {
    %c0_i32 = arith.constant 0 : i32
    %c0_i32_0 = arith.constant 0 : i32
    %c0_i32_1 = arith.constant 0 : i32
    return %c0_i32, %c0_i32_0 : i32, i32
  }
  func.func @transform_3(%arg0: i32) -> (i32, i32) {
    %c0_i32 = arith.constant 0 : i32
    %c0_i32_0 = arith.constant 0 : i32
    %c0_i32_1 = arith.constant 0 : i32
    return %c0_i32, %c0_i32_0 : i32, i32
  }
  func.func @transform_4(%arg0: i32) -> (i32, i32) {
    %c0_i32 = arith.constant 0 : i32
    %c0_i32_0 = arith.constant 0 : i32
    %c0_i32_1 = arith.constant 0 : i32
    return %c0_i32, %c0_i32_0 : i32, i32
  }
  func.func @transform_5(%arg0: i32) -> (i32, i32) {
    %c0_i32 = arith.constant 0 : i32
    %c0_i32_0 = arith.constant 0 : i32
    %c0_i32_1 = arith.constant 0 : i32
    return %c0_i32, %c0_i32_0 : i32, i32
  }
  func.func @transform_6(%arg0: i32) -> (i32, i32) {
    %c0_i32 = arith.constant 0 : i32
    %c0_i32_0 = arith.constant 0 : i32
    %c0_i32_1 = arith.constant 0 : i32
    return %c0_i32, %c0_i32_0 : i32, i32
  }
  func.func @transform_7(%arg0: i32) -> (i32, i32) {
    %c0_i32 = arith.constant 0 : i32
    %c0_i32_0 = arith.constant 0 : i32
    %c0_i32_1 = arith.constant 0 : i32
    return %c0_i32, %c0_i32_0 : i32, i32
  }
  func.func @transform_8(%arg0: i32) -> (i32, i32) {
    %c0_i32 = arith.constant 0 : i32
    %c0_i32_0 = arith.constant 0 : i32
    %c0_i32_1 = arith.constant 0 : i32
    return %c0_i32, %c0_i32_0 : i32, i32
  }
  func.func @transform_9(%arg0: i32) -> (i32, i32, i32) {
    %c0_i32 = arith.constant 0 : i32
    %c0_i32_0 = arith.constant 0 : i32
    %c0_i32_1 = arith.constant 0 : i32
    return %arg0, %c0_i32, %c0_i32_0 : i32, i32, i32
  }
}

</mosaic_0001>

<llo_original>
// kernel: encoder_forward.1
$region0: #{encoder_forward.1}
  #allocation0 [shape = 'u32[]', space=smem, size = 0x4, offset = 0x4, fixed_abs, tag = 'smem constant byte address 0x4 - core index']
  #allocation1 [shape = 'u32[144,128]{1,0:T(1,128)}', space=vmem, size = 0x12000, scoped, tag = 'internal scratch']
  %s0 = inlined_call_operand.hbm [shape: f32[2,8,32], index: 0, kind: input, shape index: {}]
  %s1 = inlined_call_operand.hbm [shape: f32[2,1,8], index: 1, kind: input, shape index: {}]
  %s2 = inlined_call_operand.vmem [shape: f32[32,96], index: 2, kind: input, shape index: {}]
  %s3 = inlined_call_operand.vmem [shape: f32[1,96], index: 3, kind: input, shape index: {}]
  %s4 = inlined_call_operand.vmem [shape: f32[32,32], index: 4, kind: input, shape index: {}]
  %s5 = inlined_call_operand.vmem [shape: f32[32,64], index: 5, kind: input, shape index: {}]
  %s6 = inlined_call_operand.vmem [shape: f32[1,64], index: 6, kind: input, shape index: {}]
  %s7 = inlined_call_operand.vmem [shape: f32[64,32], index: 7, kind: input, shape index: {}]
  %s8 = inlined_call_operand.vmem [shape: f32[6,32], index: 8, kind: input, shape index: {}]
  %s9 = inlined_call_operand.hbm [shape: f32[2,8,32], index: 9, kind: output, shape index: {}]
  %s10 = sld [smem:[#allocation0]]
  $region54: #{encoder_forward.1} parent=0
    _
  %s12 = ssub.s32 1, %s10
  %s13 = scalar_select 0, %s12, %s10
  $region1: #{encoder_forward.1} parent=0
    #allocation2 [shape = 'u8[8192]{0}', space=vmem, size = 0x2000, scoped, tag = 'input window, operand 0, single buffered']
    #allocation3 [shape = 's32[1]{0}', space=sflag, size = 0x4, scoped, tag = 'scoped memory for encoder_forward.1']
    #allocation4 [shape = 's32[1]{0}', space=sflag, size = 0x4, scoped, tag = 'scoped memory for encoder_forward.1']
    #allocation5 [shape = 'u8[1024]{0}', space=vmem, size = 0x400, scoped, tag = 'input window, operand 1, single buffered']
    #allocation6 [shape = 's32[1]{0}', space=sflag, size = 0x4, scoped, tag = 'scoped memory for encoder_forward.1']
    #allocation7 [shape = 'u8[8192]{0}', space=vmem, size = 0x2000, scoped, tag = 'output window, operand 0, single buffered']
    %14 = vsyncpa [#allocation3], 0
    %15 = vsyncpa [#allocation6], 0
    %16 = vsyncpa [#allocation4], 0
    // Predicated region
    $region2: #{encoder_forward.1} parent=1 // pred_check
      _
    $region3: #{encoder_forward.1} parent=1 // pred_check_branch
      %18 = sbr.rel (0) target = $region5
    $region4: #{encoder_forward.1} parent=1 // pred_region
      %s20 = ssub.s32 256, 256
      %21 = vsyncadd [#allocation3], %s20
      %s22 = sshll.u32 [#allocation2], 4
      %s23 = int_to_ptr.vmem [resolvable:$true] %s22
      %28 = dma.hbm_to_vmem [thread:$0]  %s0, 256, %s23, [#allocation3], 128, 128, 8
    $region5: #{encoder_forward.1} parent=1 // pred_fallthru
      _
    // Predicated region
    $region6: #{encoder_forward.1} parent=1 // pred_check
      _
    $region7: #{encoder_forward.1} parent=1 // pred_check_branch
      %30 = sbr.rel (0) target = $region9
    $region8: #{encoder_forward.1} parent=1 // pred_region
      %s32 = ssub.s32 32, 32
      %33 = vsyncadd [#allocation6], %s32
      %s34 = sshll.u32 [#allocation5], 4
      %s35 = int_to_ptr.vmem [resolvable:$true] %s34
      %40 = dma.hbm_to_vmem [thread:$0]  %s1, 32, %s35, [#allocation6], 16, 16, 1
    $region9: #{encoder_forward.1} parent=1 // pred_fallthru
      _
    // Predicated region
    $region10: #{encoder_forward.1} parent=1 // pred_check
      _
    $region11: #{encoder_forward.1} parent=1 // pred_check_branch
      %42 = sbr.rel (0) target = $region13
    $region12: #{encoder_forward.1} parent=1 // pred_region
      _
    $region13: #{encoder_forward.1} parent=1 // pred_fallthru
      _
    // Predicated region
    $region14: #{encoder_forward.1} parent=1 // pred_check
      _
    $region15: #{encoder_forward.1} parent=1 // pred_check_branch
      %44 = sbr.rel (0) target = $region17
    $region16: #{encoder_forward.1} parent=1 // pred_region
      _
    $region17: #{encoder_forward.1} parent=1 // pred_fallthru
      _
    // Predicated region
    $region18: #{encoder_forward.1} parent=1 // pred_check
      _
    $region19: #{encoder_forward.1} parent=1 // pred_check_branch
      %46 = sbr.rel (0) target = $region21
    $region20: #{encoder_forward.1} parent=1 // pred_region
      _
    $region21: #{encoder_forward.1} parent=1 // pred_fallthru
      _
    // Predicated region
    $region22: #{encoder_forward.1} parent=1 // pred_check
      _
    $region23: #{encoder_forward.1} parent=1 // pred_check_branch
      %48 = sbr.rel (0) target = $region25
    $region24: #{encoder_forward.1} parent=1 // pred_region
      _
    $region25: #{encoder_forward.1} parent=1 // pred_fallthru
      _
    // Predicated region
    $region26: #{encoder_forward.1} parent=1 // pred_check
      _
    $region27: #{encoder_forward.1} parent=1 // pred_check_branch
      %50 = sbr.rel (0) target = $region29
    $region28: #{encoder_forward.1} parent=1 // pred_region
      _
    $region29: #{encoder_forward.1} parent=1 // pred_fallthru
      _
    // Predicated region
    $region30: #{encoder_forward.1} parent=1 // pred_check
      _
    $region31: #{encoder_forward.1} parent=1 // pred_check_branch
      %52 = sbr.rel (0) target = $region33
    $region32: #{encoder_forward.1} parent=1 // pred_region
      _
    $region33: #{encoder_forward.1} parent=1 // pred_fallthru
      _
    // Predicated region
    $region34: #{encoder_forward.1} parent=1 // pred_check
      _
    $region35: #{encoder_forward.1} parent=1 // pred_check_branch
      %54 = sbr.rel (0) target = $region37
    $region36: #{encoder_forward.1} parent=1 // pred_region
      _
    $region37: #{encoder_forward.1} parent=1 // pred_fallthru
      _
    // Predicated region
    $region38: #{encoder_forward.1} parent=1 // pred_check
      _
    $region39: #{encoder_forward.1} parent=1 // pred_check_branch
      %56 = sbr.rel (0) target = $region41
    $region40: #{encoder_forward.1} parent=1 // pred_region
      %57 = dma.done [#allocation3], 256
    $region41: #{encoder_forward.1} parent=1 // pred_fallthru
      _
    // Predicated region
    $region42: #{encoder_forward.1} parent=1 // pred_check
      _
    $region43: #{encoder_forward.1} parent=1 // pred_check_branch
      %59 = sbr.rel (0) target = $region45
    $region44: #{encoder_forward.1} parent=1 // pred_region
      %60 = dma.done [#allocation6], 32
    $region45: #{encoder_forward.1} parent=1 // pred_fallthru
      _
    %v61 = vld [vmem:[#allocation2] sm:$0xff]
    %v62 = vld [vmem:[#allocation2 + $0x8] sm:$0xff]
    %v63 = vld [vmem:[%s2] sm:$0xff]
    %v64 = vld [vmem:[%s2 + $0x8] sm:$0xff]
    %v65 = vld [vmem:[%s2 + $0x10] sm:$0xff]
    %v66 = vld [vmem:[%s2 + $0x18] sm:$0xff]
    %v67 = vld [vmem:[%s3] sm:$0x1]
    %v68 = vld [vmem:[%s4] sm:$0xff]
    %v69 = vld [vmem:[%s4 + $0x8] sm:$0xff]
    %v70 = vld [vmem:[%s4 + $0x10] sm:$0xff]
    %v71 = vld [vmem:[%s4 + $0x18] sm:$0xff]
    %v72 = vld [vmem:[%s5] sm:$0xff]
    %v73 = vld [vmem:[%s5 + $0x8] sm:$0xff]
    %v74 = vld [vmem:[%s5 + $0x10] sm:$0xff]
    %v75 = vld [vmem:[%s5 + $0x18] sm:$0xff]
    %v76 = vld [vmem:[%s6] sm:$0x1]
    %v77 = vld [vmem:[%s7] sm:$0xff]
    %v78 = vld [vmem:[%s7 + $0x8] sm:$0xff]
    %v79 = vld [vmem:[%s7 + $0x10] sm:$0xff]
    %v80 = vld [vmem:[%s7 + $0x18] sm:$0xff]
    %v81 = vld [vmem:[%s7 + $0x20] sm:$0xff]
    %v82 = vld [vmem:[%s7 + $0x28] sm:$0xff]
    %v83 = vld [vmem:[%s7 + $0x30] sm:$0xff]
    %v84 = vld [vmem:[%s7 + $0x38] sm:$0xff]
    %v85 = vld [vmem:[%s8] sm:$0x3f]
    %v86 = vld [vmem:[#allocation5] sm:$0x1]
    %v87 = vld [vmem:[#allocation5 + $0x1] sm:$0x1]
    %vm88 = vcmp.gt.f32.partialorder %v86, 0.0
    %v89 = vsel %vm88, 0.0, -1e+10
    %vm90 = vcmp.gt.f32.partialorder %v87, 0.0
    %v91 = vsel %vm90, 0.0, -1e+10
    %v93 = vlaneseq
    %v94 = vshrl.u32 %v93, 7
    %v95 = vsub.s32 0, %v94
    %v96 = vrot.slane %v67, %v95
    %vm98 = vcmask 261120
    %v100 = vsel %vm98, %v61, 0
    %v103 = vsel %vm98, %v62, 0
    %105 = vmatprep.subr.mxu0 0.0
    %106 = vmatpush1.msra.mxu0 0.0
    %107 = vmatprep.subr.mxu0 0.0
    %108 = vmatpush1.msra.mxu0 0.0
    %109 = vmatprep.subr.mxu0 0.0
    %110 = vmatpush1.msra.mxu0 0.0
    %111 = vmatprep.subr.mxu0 0.0
    %112 = vmatpush1.msra.mxu0 0.0
    %113 = vmatprep.subr.mxu0 0.0
    %114 = vmatpush1.msra.mxu0 0.0
    %115 = vmatprep.subr.mxu0 0.0
    %116 = vmatpush1.msra.mxu0 0.0
    %117 = vmatprep.subr.mxu0 0.0
    %118 = vmatpush1.msra.mxu0 0.0
    %119 = vmatprep.subr.mxu0 0.0
    %120 = vmatpush1.msra.mxu0 0.0
    %121 = vmatprep.subr.mxu0 0.0
    %122 = vmatpush1.msra.mxu0 0.0
    %123 = vmatprep.subr.mxu0 0.0
    %124 = vmatpush1.msra.mxu0 0.0
    %125 = vmatprep.subr.mxu0 0.0
    %126 = vmatpush1.msra.mxu0 0.0
    %127 = vmatprep.subr.mxu0 0.0
    %128 = vmatpush1.msra.mxu0 0.0
    %129 = vmatprep.subr.mxu0 0.0
    %130 = vmatpush1.msra.mxu0 %v66
    %131 = vmatprep.subr.mxu0 0.0
    %132 = vmatpush1.msra.mxu0 %v65
    %133 = vmatprep.subr.mxu0 0.0
    %134 = vmatpush1.msra.mxu0 %v64
    %135 = vmatprep.subr.mxu0 0.0
    %136 = vmatpush1.msra.mxu0 %v63
    %137 = vmatprep.subr.mxu0 0.0
    %138 = vmatpush2.msra.mxu0 0.0
    %139 = vmatprep.subr.mxu0 0.0
    %140 = vmatpush2.msra.mxu0 0.0
    %141 = vmatprep.subr.mxu0 0.0
    %142 = vmatpush2.msra.mxu0 0.0
    %143 = vmatprep.subr.mxu0 0.0
    %144 = vmatpush2.msra.mxu0 0.0
    %145 = vmatprep.subr.mxu0 0.0
    %146 = vmatpush2.msra.mxu0 0.0
    %147 = vmatprep.subr.mxu0 0.0
    %148 = vmatpush2.msra.mxu0 0.0
    %149 = vmatprep.subr.mxu0 0.0
    %150 = vmatpush2.msra.mxu0 0.0
    %151 = vmatprep.subr.mxu0 0.0
    %152 = vmatpush2.msra.mxu0 0.0
    %153 = vmatprep.subr.mxu0 0.0
    %154 = vmatpush2.msra.mxu0 0.0
    %155 = vmatprep.subr.mxu0 0.0
    %156 = vmatpush2.msra.mxu0 0.0
    %157 = vmatprep.subr.mxu0 0.0
    %158 = vmatpush2.msra.mxu0 0.0
    %159 = vmatprep.subr.mxu0 0.0
    %160 = vmatpush2.msra.mxu0 0.0
    %161 = vmatprep.subr.mxu0 0.0
    %162 = vmatpush2.msra.mxu0 0.0
    %163 = vmatprep.subr.mxu0 0.0
    %164 = vmatpush2.msra.mxu0 0.0
    %165 = vmatprep.subr.mxu0 0.0
    %166 = vmatpush2.msra.mxu0 0.0
    %167 = vmatprep.subr.mxu0 0.0
    %168 = vmatpush2.msra.mxu0 0.0
    %169 = vmatprep.mubr.f32.mxu0 0.0
    %170 = vmatmul.mubr.f32.gmra.mxu0 %v100
    %v171 = vpop.f32.mrf.mxu0
    %v172 = vadd.f32 %v96, %v171
    %v173 = vpop.f32.mrf.mxu0
    %174 = vmatprep.mubr.f32.mxu0 0.0
    %175 = vmatmul.mubr.f32.gmra.mxu0 %v103
    %v176 = vpop.f32.mrf.mxu0
    %v177 = vadd.f32 %v96, %v176
    %v178 = vpop.f32.mrf.mxu0
    %179 = vdwg.mxu0
    %v181 = vlaneseq
    %v182 = vshrl.u32 %v181, 7
    %v183 = vsub.s32 0, %v182
    %v184 = vrot.slane %v89, %v183
    %187 = vrot.lane.b32.xlu0 %v172, 96
    %v188 = vpop.permute.xlu0 %187
    %vm189 = vcmask 64512
    %v190 = vsel %vm189, %v172, 0
    %v192 = vsel %vm189, %v188, 0
    %194 = vmatprep.subr.mxu0 0.0
    %195 = vmatpush1.xpose.msra.mxu0 0.0
    %196 = vmatprep.subr.mxu0 0.0
    %197 = vmatpush1.xpose.msra.mxu0 0.0
    %198 = vmatprep.subr.mxu0 0.0
    %199 = vmatpush1.xpose.msra.mxu0 0.0
    %200 = vmatprep.subr.mxu0 0.0
    %201 = vmatpush1.xpose.msra.mxu0 0.0
    %202 = vmatprep.subr.mxu0 0.0
    %203 = vmatpush1.xpose.msra.mxu0 0.0
    %204 = vmatprep.subr.mxu0 0.0
    %205 = vmatpush1.xpose.msra.mxu0 0.0
    %206 = vmatprep.subr.mxu0 0.0
    %207 = vmatpush1.xpose.msra.mxu0 0.0
    %208 = vmatprep.subr.mxu0 0.0
    %209 = vmatpush1.xpose.msra.mxu0 0.0
    %210 = vmatprep.subr.mxu0 0.0
    %211 = vmatpush1.xpose.msra.mxu0 0.0
    %212 = vmatprep.subr.mxu0 0.0
    %213 = vmatpush1.xpose.msra.mxu0 0.0
    %214 = vmatprep.subr.mxu0 0.0
    %215 = vmatpush1.xpose.msra.mxu0 0.0
    %216 = vmatprep.subr.mxu0 0.0
    %217 = vmatpush1.xpose.msra.mxu0 0.0
    %218 = vmatprep.subr.mxu0 0.0
    %219 = vmatpush1.xpose.msra.mxu0 0.0
    %220 = vmatprep.subr.mxu0 0.0
    %221 = vmatpush1.xpose.msra.mxu0 0.0
    %222 = vmatprep.subr.mxu0 0.0
    %223 = vmatpush1.xpose.msra.mxu0 0.0
    %224 = vmatprep.subr.mxu0 0.0
    %225 = vmatpush1.xpose.msra.mxu0 %v192
    %226 = vmatprep.subr.mxu0 0.0
    %227 = vmatpush2.xpose.msra.mxu0 0.0
    %228 = vmatprep.subr.mxu0 0.0
    %229 = vmatpush2.xpose.msra.mxu0 0.0
    %230 = vmatprep.subr.mxu0 0.0
    %231 = vmatpush2.xpose.msra.mxu0 0.0
    %232 = vmatprep.subr.mxu0 0.0
    %233 = vmatpush2.xpose.msra.mxu0 0.0
    %234 = vmatprep.subr.mxu0 0.0
    %235 = vmatpush2.xpose.msra.mxu0 0.0
    %236 = vmatprep.subr.mxu0 0.0
    %237 = vmatpush2.xpose.msra.mxu0 0.0
    %238 = vmatprep.subr.mxu0 0.0
    %239 = vmatpush2.xpose.msra.mxu0 0.0
    %240 = vmatprep.subr.mxu0 0.0
    %241 = vmatpush2.xpose.msra.mxu0 0.0
    %242 = vmatprep.subr.mxu0 0.0
    %243 = vmatpush2.xpose.msra.mxu0 0.0
    %244 = vmatprep.subr.mxu0 0.0
    %245 = vmatpush2.xpose.msra.mxu0 0.0
    %246 = vmatprep.subr.mxu0 0.0
    %247 = vmatpush2.xpose.msra.mxu0 0.0
    %248 = vmatprep.subr.mxu0 0.0
    %249 = vmatpush2.xpose.msra.mxu0 0.0
    %250 = vmatprep.subr.mxu0 0.0
    %251 = vmatpush2.xpose.msra.mxu0 0.0
    %252 = vmatprep.subr.mxu0 0.0
    %253 = vmatpush2.xpose.msra.mxu0 0.0
    %254 = vmatprep.subr.mxu0 0.0
    %255 = vmatpush2.xpose.msra.mxu0 0.0
    %256 = vmatprep.subr.mxu0 0.0
    %257 = vmatpush2.xpose.msra.mxu0 0.0
    %258 = vmatprep.mubr.f32.mxu0 0.0
    %259 = vmatmul.mubr.f32.gmra.mxu0 %v190
    %v260 = vpop.f32.mrf.mxu0
    %v261 = vadd.f32 %v184, %v260
    %v262 = vpop.f32.mrf.mxu0
    %263 = vdwg.mxu0
    %v264 = vsel %vm189, %v261, -inf
    %265 = vmax.xlane.f32.xlu0 %v264
    %v266 = vpop.xlane.xlu0 %265
    %v267 = vsub.f32 %v261, %v266
    %v268 = vmul.f32 %v267, 1.442695
    %v269 = vpow.pop %v268
    %v270 = vsel %vm189, %v269, 0.0
    %271 = vadd.xlane.f32.xlu0 %v270
    %v272 = vpop.xlane.xlu0 %271
    %v273 = vrcp.pop %v272
    %v274 = vmul.f32 %v269, %v273
    %275 = vrot.lane.b32.xlu0 %v172, 64
    %v276 = vpop.permute.xlu0 %275
    %v279 = vsel %vm189, %v274, 0
    %281 = vmatprep.subr.mxu0 0.0
    %282 = vmatpush1.msra.mxu0 0.0
    %283 = vmatprep.subr.mxu0 0.0
    %284 = vmatpush1.msra.mxu0 0.0
    %285 = vmatprep.subr.mxu0 0.0
    %286 = vmatpush1.msra.mxu0 0.0
    %287 = vmatprep.subr.mxu0 0.0
    %288 = vmatpush1.msra.mxu0 0.0
    %289 = vmatprep.subr.mxu0 0.0
    %290 = vmatpush1.msra.mxu0 0.0
    %291 = vmatprep.subr.mxu0 0.0
    %292 = vmatpush1.msra.mxu0 0.0
    %293 = vmatprep.subr.mxu0 0.0
    %294 = vmatpush1.msra.mxu0 0.0
    %295 = vmatprep.subr.mxu0 0.0
    %296 = vmatpush1.msra.mxu0 0.0
    %297 = vmatprep.subr.mxu0 0.0
    %298 = vmatpush1.msra.mxu0 0.0
    %299 = vmatprep.subr.mxu0 0.0
    %300 = vmatpush1.msra.mxu0 0.0
    %301 = vmatprep.subr.mxu0 0.0
    %302 = vmatpush1.msra.mxu0 0.0
    %303 = vmatprep.subr.mxu0 0.0
    %304 = vmatpush1.msra.mxu0 0.0
    %305 = vmatprep.subr.mxu0 0.0
    %306 = vmatpush1.msra.mxu0 0.0
    %307 = vmatprep.subr.mxu0 0.0
    %308 = vmatpush1.msra.mxu0 0.0
    %309 = vmatprep.subr.mxu0 0.0
    %310 = vmatpush1.msra.mxu0 0.0
    %311 = vmatprep.subr.mxu0 0.0
    %312 = vmatpush1.msra.mxu0 %v276
    %313 = vmatprep.subr.mxu0 0.0
    %314 = vmatpush2.msra.mxu0 0.0
    %315 = vmatprep.subr.mxu0 0.0
    %316 = vmatpush2.msra.mxu0 0.0
    %317 = vmatprep.subr.mxu0 0.0
    %318 = vmatpush2.msra.mxu0 0.0
    %319 = vmatprep.subr.mxu0 0.0
    %320 = vmatpush2.msra.mxu0 0.0
    %321 = vmatprep.subr.mxu0 0.0
    %322 = vmatpush2.msra.mxu0 0.0
    %323 = vmatprep.subr.mxu0 0.0
    %324 = vmatpush2.msra.mxu0 0.0
    %325 = vmatprep.subr.mxu0 0.0
    %326 = vmatpush2.msra.mxu0 0.0
    %327 = vmatprep.subr.mxu0 0.0
    %328 = vmatpush2.msra.mxu0 0.0
    %329 = vmatprep.subr.mxu0 0.0
    %330 = vmatpush2.msra.mxu0 0.0
    %331 = vmatprep.subr.mxu0 0.0
    %332 = vmatpush2.msra.mxu0 0.0
    %333 = vmatprep.subr.mxu0 0.0
    %334 = vmatpush2.msra.mxu0 0.0
    %335 = vmatprep.subr.mxu0 0.0
    %336 = vmatpush2.msra.mxu0 0.0
    %337 = vmatprep.subr.mxu0 0.0
    %338 = vmatpush2.msra.mxu0 0.0
    %339 = vmatprep.subr.mxu0 0.0
    %340 = vmatpush2.msra.mxu0 0.0
    %341 = vmatprep.subr.mxu0 0.0
    %342 = vmatpush2.msra.mxu0 0.0
    %343 = vmatprep.subr.mxu0 0.0
    %344 = vmatpush2.msra.mxu0 0.0
    %345 = vmatprep.mubr.f32.mxu0 0.0
    %346 = vmatmul.mubr.f32.gmra.mxu0 %v279
    %v347 = vpop.f32.mrf.mxu0
    %v348 = vadd.f32 0.0, %v347
    %v349 = vpop.f32.mrf.mxu0
    %350 = vdwg.mxu0
    %351 = vrot.lane.b32.xlu0 %v172, 120
    %v352 = vpop.permute.xlu0 %351
    %353 = vrot.lane.b32.xlu0 %v172, 88
    %v354 = vpop.permute.xlu0 %353
    %v355 = vsel %vm189, %v352, 0
    %v357 = vsel %vm189, %v354, 0
    %359 = vmatprep.subr.mxu0 0.0
    %360 = vmatpush1.xpose.msra.mxu0 0.0
    %361 = vmatprep.subr.mxu0 0.0
    %362 = vmatpush1.xpose.msra.mxu0 0.0
    %363 = vmatprep.subr.mxu0 0.0
    %364 = vmatpush1.xpose.msra.mxu0 0.0
    %365 = vmatprep.subr.mxu0 0.0
    %366 = vmatpush1.xpose.msra.mxu0 0.0
    %367 = vmatprep.subr.mxu0 0.0
    %368 = vmatpush1.xpose.msra.mxu0 0.0
    %369 = vmatprep.subr.mxu0 0.0
    %370 = vmatpush1.xpose.msra.mxu0 0.0
    %371 = vmatprep.subr.mxu0 0.0
    %372 = vmatpush1.xpose.msra.mxu0 0.0
    %373 = vmatprep.subr.mxu0 0.0
    %374 = vmatpush1.xpose.msra.mxu0 0.0
    %375 = vmatprep.subr.mxu0 0.0
    %376 = vmatpush1.xpose.msra.mxu0 0.0
    %377 = vmatprep.subr.mxu0 0.0
    %378 = vmatpush1.xpose.msra.mxu0 0.0
    %379 = vmatprep.subr.mxu0 0.0
    %380 = vmatpush1.xpose.msra.mxu0 0.0
    %381 = vmatprep.subr.mxu0 0.0
    %382 = vmatpush1.xpose.msra.mxu0 0.0
    %383 = vmatprep.subr.mxu0 0.0
    %384 = vmatpush1.xpose.msra.mxu0 0.0
    %385 = vmatprep.subr.mxu0 0.0
    %386 = vmatpush1.xpose.msra.mxu0 0.0
    %387 = vmatprep.subr.mxu0 0.0
    %388 = vmatpush1.xpose.msra.mxu0 0.0
    %389 = vmatprep.subr.mxu0 0.0
    %390 = vmatpush1.xpose.msra.mxu0 %v357
    %391 = vmatprep.subr.mxu0 0.0
    %392 = vmatpush2.xpose.msra.mxu0 0.0
    %393 = vmatprep.subr.mxu0 0.0
    %394 = vmatpush2.xpose.msra.mxu0 0.0
    %395 = vmatprep.subr.mxu0 0.0
    %396 = vmatpush2.xpose.msra.mxu0 0.0
    %397 = vmatprep.subr.mxu0 0.0
    %398 = vmatpush2.xpose.msra.mxu0 0.0
    %399 = vmatprep.subr.mxu0 0.0
    %400 = vmatpush2.xpose.msra.mxu0 0.0
    %401 = vmatprep.subr.mxu0 0.0
    %402 = vmatpush2.xpose.msra.mxu0 0.0
    %403 = vmatprep.subr.mxu0 0.0
    %404 = vmatpush2.xpose.msra.mxu0 0.0
    %405 = vmatprep.subr.mxu0 0.0
    %406 = vmatpush2.xpose.msra.mxu0 0.0
    %407 = vmatprep.subr.mxu0 0.0
    %408 = vmatpush2.xpose.msra.mxu0 0.0
    %409 = vmatprep.subr.mxu0 0.0
    %410 = vmatpush2.xpose.msra.mxu0 0.0
    %411 = vmatprep.subr.mxu0 0.0
    %412 = vmatpush2.xpose.msra.mxu0 0.0
    %413 = vmatprep.subr.mxu0 0.0
    %414 = vmatpush2.xpose.msra.mxu0 0.0
    %415 = vmatprep.subr.mxu0 0.0
    %416 = vmatpush2.xpose.msra.mxu0 0.0
    %417 = vmatprep.subr.mxu0 0.0
    %418 = vmatpush2.xpose.msra.mxu0 0.0
    %419 = vmatprep.subr.mxu0 0.0
    %420 = vmatpush2.xpose.msra.mxu0 0.0
    %421 = vmatprep.subr.mxu0 0.0
    %422 = vmatpush2.xpose.msra.mxu0 0.0
    %423 = vmatprep.mubr.f32.mxu0 0.0
    %424 = vmatmul.mubr.f32.gmra.mxu0 %v355
    %v425 = vpop.f32.mrf.mxu0
    %v426 = vadd.f32 %v184, %v425
    %v427 = vpop.f32.mrf.mxu0
    %428 = vdwg.mxu0
    %v429 = vsel %vm189, %v426, -inf
    %430 = vmax.xlane.f32.xlu0 %v429
    %v431 = vpop.xlane.xlu0 %430
    %v432 = vsub.f32 %v426, %v431
    %v433 = vmul.f32 %v432, 1.442695
    %v434 = vpow.pop %v433
    %v435 = vsel %vm189, %v434, 0.0
    %436 = vadd.xlane.f32.xlu0 %v435
    %v437 = vpop.xlane.xlu0 %436
    %v438 = vrcp.pop %v437
    %v439 = vmul.f32 %v434, %v438
    %440 = vrot.lane.b32.xlu0 %v172, 56
    %v441 = vpop.permute.xlu0 %440
    %v444 = vsel %vm189, %v439, 0
    %446 = vmatprep.subr.mxu0 0.0
    %447 = vmatpush1.msra.mxu0 0.0
    %448 = vmatprep.subr.mxu0 0.0
    %449 = vmatpush1.msra.mxu0 0.0
    %450 = vmatprep.subr.mxu0 0.0
    %451 = vmatpush1.msra.mxu0 0.0
    %452 = vmatprep.subr.mxu0 0.0
    %453 = vmatpush1.msra.mxu0 0.0
    %454 = vmatprep.subr.mxu0 0.0
    %455 = vmatpush1.msra.mxu0 0.0
    %456 = vmatprep.subr.mxu0 0.0
    %457 = vmatpush1.msra.mxu0 0.0
    %458 = vmatprep.subr.mxu0 0.0
    %459 = vmatpush1.msra.mxu0 0.0
    %460 = vmatprep.subr.mxu0 0.0
    %461 = vmatpush1.msra.mxu0 0.0
    %462 = vmatprep.subr.mxu0 0.0
    %463 = vmatpush1.msra.mxu0 0.0
    %464 = vmatprep.subr.mxu0 0.0
    %465 = vmatpush1.msra.mxu0 0.0
    %466 = vmatprep.subr.mxu0 0.0
    %467 = vmatpush1.msra.mxu0 0.0
    %468 = vmatprep.subr.mxu0 0.0
    %469 = vmatpush1.msra.mxu0 0.0
    %470 = vmatprep.subr.mxu0 0.0
    %471 = vmatpush1.msra.mxu0 0.0
    %472 = vmatprep.subr.mxu0 0.0
    %473 = vmatpush1.msra.mxu0 0.0
    %474 = vmatprep.subr.mxu0 0.0
    %475 = vmatpush1.msra.mxu0 0.0
    %476 = vmatprep.subr.mxu0 0.0
    %477 = vmatpush1.msra.mxu0 %v441
    %478 = vmatprep.subr.mxu0 0.0
    %479 = vmatpush2.msra.mxu0 0.0
    %480 = vmatprep.subr.mxu0 0.0
    %481 = vmatpush2.msra.mxu0 0.0
    %482 = vmatprep.subr.mxu0 0.0
    %483 = vmatpush2.msra.mxu0 0.0
    %484 = vmatprep.subr.mxu0 0.0
    %485 = vmatpush2.msra.mxu0 0.0
    %486 = vmatprep.subr.mxu0 0.0
    %487 = vmatpush2.msra.mxu0 0.0
    %488 = vmatprep.subr.mxu0 0.0
    %489 = vmatpush2.msra.mxu0 0.0
    %490 = vmatprep.subr.mxu0 0.0
    %491 = vmatpush2.msra.mxu0 0.0
    %492 = vmatprep.subr.mxu0 0.0
    %493 = vmatpush2.msra.mxu0 0.0
    %494 = vmatprep.subr.mxu0 0.0
    %495 = vmatpush2.msra.mxu0 0.0
    %496 = vmatprep.subr.mxu0 0.0
    %497 = vmatpush2.msra.mxu0 0.0
    %498 = vmatprep.subr.mxu0 0.0
    %499 = vmatpush2.msra.mxu0 0.0
    %500 = vmatprep.subr.mxu0 0.0
    %501 = vmatpush2.msra.mxu0 0.0
    %502 = vmatprep.subr.mxu0 0.0
    %503 = vmatpush2.msra.mxu0 0.0
    %504 = vmatprep.subr.mxu0 0.0
    %505 = vmatpush2.msra.mxu0 0.0
    %506 = vmatprep.subr.mxu0 0.0
    %507 = vmatpush2.msra.mxu0 0.0
    %508 = vmatprep.subr.mxu0 0.0
    %509 = vmatpush2.msra.mxu0 0.0
    %510 = vmatprep.mubr.f32.mxu0 0.0
    %511 = vmatmul.mubr.f32.gmra.mxu0 %v444
    %v512 = vpop.f32.mrf.mxu0
    %v513 = vadd.f32 0.0, %v512
    %v514 = vpop.f32.mrf.mxu0
    %515 = vdwg.mxu0
    %v517 = vsel %vm189, %v513, 0
    %519 = vmatprep.subr.mxu0 0.0
    %520 = vmatpush1.msra.mxu0 0.0
    %521 = vmatprep.subr.mxu0 0.0
    %522 = vmatpush1.msra.mxu0 0.0
    %523 = vmatprep.subr.mxu0 0.0
    %524 = vmatpush1.msra.mxu0 0.0
    %525 = vmatprep.subr.mxu0 0.0
    %526 = vmatpush1.msra.mxu0 0.0
    %527 = vmatprep.subr.mxu0 0.0
    %528 = vmatpush1.msra.mxu0 0.0
    %529 = vmatprep.subr.mxu0 0.0
    %530 = vmatpush1.msra.mxu0 0.0
    %531 = vmatprep.subr.mxu0 0.0
    %532 = vmatpush1.msra.mxu0 0.0
    %533 = vmatprep.subr.mxu0 0.0
    %534 = vmatpush1.msra.mxu0 0.0
    %535 = vmatprep.subr.mxu0 0.0
    %536 = vmatpush1.msra.mxu0 0.0
    %537 = vmatprep.subr.mxu0 0.0
    %538 = vmatpush1.msra.mxu0 0.0
    %539 = vmatprep.subr.mxu0 0.0
    %540 = vmatpush1.msra.mxu0 0.0
    %541 = vmatprep.subr.mxu0 0.0
    %542 = vmatpush1.msra.mxu0 0.0
    %543 = vmatprep.subr.mxu0 0.0
    %544 = vmatpush1.msra.mxu0 0.0
    %545 = vmatprep.subr.mxu0 0.0
    %546 = vmatpush1.msra.mxu0 0.0
    %547 = vmatprep.subr.mxu0 0.0
    %548 = vmatpush1.msra.mxu0 0.0
    %549 = vmatprep.subr.mxu0 0.0
    %550 = vmatpush1.msra.mxu0 %v69
    %551 = vmatprep.subr.mxu0 0.0
    %552 = vmatpush2.msra.mxu0 0.0
    %553 = vmatprep.subr.mxu0 0.0
    %554 = vmatpush2.msra.mxu0 0.0
    %555 = vmatprep.subr.mxu0 0.0
    %556 = vmatpush2.msra.mxu0 0.0
    %557 = vmatprep.subr.mxu0 0.0
    %558 = vmatpush2.msra.mxu0 0.0
    %559 = vmatprep.subr.mxu0 0.0
    %560 = vmatpush2.msra.mxu0 0.0
    %561 = vmatprep.subr.mxu0 0.0
    %562 = vmatpush2.msra.mxu0 0.0
    %563 = vmatprep.subr.mxu0 0.0
    %564 = vmatpush2.msra.mxu0 0.0
    %565 = vmatprep.subr.mxu0 0.0
    %566 = vmatpush2.msra.mxu0 0.0
    %567 = vmatprep.subr.mxu0 0.0
    %568 = vmatpush2.msra.mxu0 0.0
    %569 = vmatprep.subr.mxu0 0.0
    %570 = vmatpush2.msra.mxu0 0.0
    %571 = vmatprep.subr.mxu0 0.0
    %572 = vmatpush2.msra.mxu0 0.0
    %573 = vmatprep.subr.mxu0 0.0
    %574 = vmatpush2.msra.mxu0 0.0
    %575 = vmatprep.subr.mxu0 0.0
    %576 = vmatpush2.msra.mxu0 0.0
    %577 = vmatprep.subr.mxu0 0.0
    %578 = vmatpush2.msra.mxu0 0.0
    %579 = vmatprep.subr.mxu0 0.0
    %580 = vmatpush2.msra.mxu0 0.0
    %581 = vmatprep.subr.mxu0 0.0
    %582 = vmatpush2.msra.mxu0 0.0
    %583 = vmatprep.mubr.f32.mxu0 0.0
    %584 = vmatmul.mubr.f32.gmra.mxu0 %v517
    %v585 = vpop.f32.mrf.mxu0
    %v586 = vadd.f32 0.0, %v585
    %v587 = vpop.f32.mrf.mxu0
    %588 = vdwg.mxu0
    %v590 = vsel %vm189, %v348, 0
    %592 = vmatprep.subr.mxu0 0.0
    %593 = vmatpush1.msra.mxu0 0.0
    %594 = vmatprep.subr.mxu0 0.0
    %595 = vmatpush1.msra.mxu0 0.0
    %596 = vmatprep.subr.mxu0 0.0
    %597 = vmatpush1.msra.mxu0 0.0
    %598 = vmatprep.subr.mxu0 0.0
    %599 = vmatpush1.msra.mxu0 0.0
    %600 = vmatprep.subr.mxu0 0.0
    %601 = vmatpush1.msra.mxu0 0.0
    %602 = vmatprep.subr.mxu0 0.0
    %603 = vmatpush1.msra.mxu0 0.0
    %604 = vmatprep.subr.mxu0 0.0
    %605 = vmatpush1.msra.mxu0 0.0
    %606 = vmatprep.subr.mxu0 0.0
    %607 = vmatpush1.msra.mxu0 0.0
    %608 = vmatprep.subr.mxu0 0.0
    %609 = vmatpush1.msra.mxu0 0.0
    %610 = vmatprep.subr.mxu0 0.0
    %611 = vmatpush1.msra.mxu0 0.0
    %612 = vmatprep.subr.mxu0 0.0
    %613 = vmatpush1.msra.mxu0 0.0
    %614 = vmatprep.subr.mxu0 0.0
    %615 = vmatpush1.msra.mxu0 0.0
    %616 = vmatprep.subr.mxu0 0.0
    %617 = vmatpush1.msra.mxu0 0.0
    %618 = vmatprep.subr.mxu0 0.0
    %619 = vmatpush1.msra.mxu0 0.0
    %620 = vmatprep.subr.mxu0 0.0
    %621 = vmatpush1.msra.mxu0 0.0
    %622 = vmatprep.subr.mxu0 0.0
    %623 = vmatpush1.msra.mxu0 %v68
    %624 = vmatprep.subr.mxu0 0.0
    %625 = vmatpush2.msra.mxu0 0.0
    %626 = vmatprep.subr.mxu0 0.0
    %627 = vmatpush2.msra.mxu0 0.0
    %628 = vmatprep.subr.mxu0 0.0
    %629 = vmatpush2.msra.mxu0 0.0
    %630 = vmatprep.subr.mxu0 0.0
    %631 = vmatpush2.msra.mxu0 0.0
    %632 = vmatprep.subr.mxu0 0.0
    %633 = vmatpush2.msra.mxu0 0.0
    %634 = vmatprep.subr.mxu0 0.0
    %635 = vmatpush2.msra.mxu0 0.0
    %636 = vmatprep.subr.mxu0 0.0
    %637 = vmatpush2.msra.mxu0 0.0
    %638 = vmatprep.subr.mxu0 0.0
    %639 = vmatpush2.msra.mxu0 0.0
    %640 = vmatprep.subr.mxu0 0.0
    %641 = vmatpush2.msra.mxu0 0.0
    %642 = vmatprep.subr.mxu0 0.0
    %643 = vmatpush2.msra.mxu0 0.0
    %644 = vmatprep.subr.mxu0 0.0
    %645 = vmatpush2.msra.mxu0 0.0
    %646 = vmatprep.subr.mxu0 0.0
    %647 = vmatpush2.msra.mxu0 0.0
    %648 = vmatprep.subr.mxu0 0.0
    %649 = vmatpush2.msra.mxu0 0.0
    %650 = vmatprep.subr.mxu0 0.0
    %651 = vmatpush2.msra.mxu0 0.0
    %652 = vmatprep.subr.mxu0 0.0
    %653 = vmatpush2.msra.mxu0 0.0
    %654 = vmatprep.subr.mxu0 0.0
    %655 = vmatpush2.msra.mxu0 0.0
    %656 = vmatprep.mubr.f32.mxu0 0.0
    %657 = vmatmul.mubr.f32.gmra.mxu0 %v590
    %v658 = vpop.f32.mrf.mxu0
    %v659 = vadd.f32 %v586, %v658
    %v660 = vpop.f32.mrf.mxu0
    %661 = vdwg.mxu0
    %662 = vrot.lane.b32.xlu0 %v172, 112
    %v663 = vpop.permute.xlu0 %662
    %664 = vrot.lane.b32.xlu0 %v172, 80
    %v665 = vpop.permute.xlu0 %664
    %v666 = vsel %vm189, %v663, 0
    %v668 = vsel %vm189, %v665, 0
    %670 = vmatprep.subr.mxu0 0.0
    %671 = vmatpush1.xpose.msra.mxu0 0.0
    %672 = vmatprep.subr.mxu0 0.0
    %673 = vmatpush1.xpose.msra.mxu0 0.0
    %674 = vmatprep.subr.mxu0 0.0
    %675 = vmatpush1.xpose.msra.mxu0 0.0
    %676 = vmatprep.subr.mxu0 0.0
    %677 = vmatpush1.xpose.msra.mxu0 0.0
    %678 = vmatprep.subr.mxu0 0.0
    %679 = vmatpush1.xpose.msra.mxu0 0.0
    %680 = vmatprep.subr.mxu0 0.0
    %681 = vmatpush1.xpose.msra.mxu0 0.0
    %682 = vmatprep.subr.mxu0 0.0
    %683 = vmatpush1.xpose.msra.mxu0 0.0
    %684 = vmatprep.subr.mxu0 0.0
    %685 = vmatpush1.xpose.msra.mxu0 0.0
    %686 = vmatprep.subr.mxu0 0.0
    %687 = vmatpush1.xpose.msra.mxu0 0.0
    %688 = vmatprep.subr.mxu0 0.0
    %689 = vmatpush1.xpose.msra.mxu0 0.0
    %690 = vmatprep.subr.mxu0 0.0
    %691 = vmatpush1.xpose.msra.mxu0 0.0
    %692 = vmatprep.subr.mxu0 0.0
    %693 = vmatpush1.xpose.msra.mxu0 0.0
    %694 = vmatprep.subr.mxu0 0.0
    %695 = vmatpush1.xpose.msra.mxu0 0.0
    %696 = vmatprep.subr.mxu0 0.0
    %697 = vmatpush1.xpose.msra.mxu0 0.0
    %698 = vmatprep.subr.mxu0 0.0
    %699 = vmatpush1.xpose.msra.mxu0 0.0
    %700 = vmatprep.subr.mxu0 0.0
    %701 = vmatpush1.xpose.msra.mxu0 %v668
    %702 = vmatprep.subr.mxu0 0.0
    %703 = vmatpush2.xpose.msra.mxu0 0.0
    %704 = vmatprep.subr.mxu0 0.0
    %705 = vmatpush2.xpose.msra.mxu0 0.0
    %706 = vmatprep.subr.mxu0 0.0
    %707 = vmatpush2.xpose.msra.mxu0 0.0
    %708 = vmatprep.subr.mxu0 0.0
    %709 = vmatpush2.xpose.msra.mxu0 0.0
    %710 = vmatprep.subr.mxu0 0.0
    %711 = vmatpush2.xpose.msra.mxu0 0.0
    %712 = vmatprep.subr.mxu0 0.0
    %713 = vmatpush2.xpose.msra.mxu0 0.0
    %714 = vmatprep.subr.mxu0 0.0
    %715 = vmatpush2.xpose.msra.mxu0 0.0
    %716 = vmatprep.subr.mxu0 0.0
    %717 = vmatpush2.xpose.msra.mxu0 0.0
    %718 = vmatprep.subr.mxu0 0.0
    %719 = vmatpush2.xpose.msra.mxu0 0.0
    %720 = vmatprep.subr.mxu0 0.0
    %721 = vmatpush2.xpose.msra.mxu0 0.0
    %722 = vmatprep.subr.mxu0 0.0
    %723 = vmatpush2.xpose.msra.mxu0 0.0
    %724 = vmatprep.subr.mxu0 0.0
    %725 = vmatpush2.xpose.msra.mxu0 0.0
    %726 = vmatprep.subr.mxu0 0.0
    %727 = vmatpush2.xpose.msra.mxu0 0.0
    %728 = vmatprep.subr.mxu0 0.0
    %729 = vmatpush2.xpose.msra.mxu0 0.0
    %730 = vmatprep.subr.mxu0 0.0
    %731 = vmatpush2.xpose.msra.mxu0 0.0
    %732 = vmatprep.subr.mxu0 0.0
    %733 = vmatpush2.xpose.msra.mxu0 0.0
    %734 = vmatprep.mubr.f32.mxu0 0.0
    %735 = vmatmul.mubr.f32.gmra.mxu0 %v666
    %v736 = vpop.f32.mrf.mxu0
    %v737 = vadd.f32 %v184, %v736
    %v738 = vpop.f32.mrf.mxu0
    %739 = vdwg.mxu0
    %v740 = vsel %vm189, %v737, -inf
    %741 = vmax.xlane.f32.xlu0 %v740
    %v742 = vpop.xlane.xlu0 %741
    %v743 = vsub.f32 %v737, %v742
    %v744 = vmul.f32 %v743, 1.442695
    %v745 = vpow.pop %v744
    %v746 = vsel %vm189, %v745, 0.0
    %747 = vadd.xlane.f32.xlu0 %v746
    %v748 = vpop.xlane.xlu0 %747
    %v749 = vrcp.pop %v748
    %v750 = vmul.f32 %v745, %v749
    %751 = vrot.lane.b32.xlu0 %v172, 48
    %v752 = vpop.permute.xlu0 %751
    %v755 = vsel %vm189, %v750, 0
    %757 = vmatprep.subr.mxu0 0.0
    %758 = vmatpush1.msra.mxu0 0.0
    %759 = vmatprep.subr.mxu0 0.0
    %760 = vmatpush1.msra.mxu0 0.0
    %761 = vmatprep.subr.mxu0 0.0
    %762 = vmatpush1.msra.mxu0 0.0
    %763 = vmatprep.subr.mxu0 0.0
    %764 = vmatpush1.msra.mxu0 0.0
    %765 = vmatprep.subr.mxu0 0.0
    %766 = vmatpush1.msra.mxu0 0.0
    %767 = vmatprep.subr.mxu0 0.0
    %768 = vmatpush1.msra.mxu0 0.0
    %769 = vmatprep.subr.mxu0 0.0
    %770 = vmatpush1.msra.mxu0 0.0
    %771 = vmatprep.subr.mxu0 0.0
    %772 = vmatpush1.msra.mxu0 0.0
    %773 = vmatprep.subr.mxu0 0.0
    %774 = vmatpush1.msra.mxu0 0.0
    %775 = vmatprep.subr.mxu0 0.0
    %776 = vmatpush1.msra.mxu0 0.0
    %777 = vmatprep.subr.mxu0 0.0
    %778 = vmatpush1.msra.mxu0 0.0
    %779 = vmatprep.subr.mxu0 0.0
    %780 = vmatpush1.msra.mxu0 0.0
    %781 = vmatprep.subr.mxu0 0.0
    %782 = vmatpush1.msra.mxu0 0.0
    %783 = vmatprep.subr.mxu0 0.0
    %784 = vmatpush1.msra.mxu0 0.0
    %785 = vmatprep.subr.mxu0 0.0
    %786 = vmatpush1.msra.mxu0 0.0
    %787 = vmatprep.subr.mxu0 0.0
    %788 = vmatpush1.msra.mxu0 %v752
    %789 = vmatprep.subr.mxu0 0.0
    %790 = vmatpush2.msra.mxu0 0.0
    %791 = vmatprep.subr.mxu0 0.0
    %792 = vmatpush2.msra.mxu0 0.0
    %793 = vmatprep.subr.mxu0 0.0
    %794 = vmatpush2.msra.mxu0 0.0
    %795 = vmatprep.subr.mxu0 0.0
    %796 = vmatpush2.msra.mxu0 0.0
    %797 = vmatprep.subr.mxu0 0.0
    %798 = vmatpush2.msra.mxu0 0.0
    %799 = vmatprep.subr.mxu0 0.0
    %800 = vmatpush2.msra.mxu0 0.0
    %801 = vmatprep.subr.mxu0 0.0
    %802 = vmatpush2.msra.mxu0 0.0
    %803 = vmatprep.subr.mxu0 0.0
    %804 = vmatpush2.msra.mxu0 0.0
    %805 = vmatprep.subr.mxu0 0.0
    %806 = vmatpush2.msra.mxu0 0.0
    %807 = vmatprep.subr.mxu0 0.0
    %808 = vmatpush2.msra.mxu0 0.0
    %809 = vmatprep.subr.mxu0 0.0
    %810 = vmatpush2.msra.mxu0 0.0
    %811 = vmatprep.subr.mxu0 0.0
    %812 = vmatpush2.msra.mxu0 0.0
    %813 = vmatprep.subr.mxu0 0.0
    %814 = vmatpush2.msra.mxu0 0.0
    %815 = vmatprep.subr.mxu0 0.0
    %816 = vmatpush2.msra.mxu0 0.0
    %817 = vmatprep.subr.mxu0 0.0
    %818 = vmatpush2.msra.mxu0 0.0
    %819 = vmatprep.subr.mxu0 0.0
    %820 = vmatpush2.msra.mxu0 0.0
    %821 = vmatprep.mubr.f32.mxu0 0.0
    %822 = vmatmul.mubr.f32.gmra.mxu0 %v755
    %v823 = vpop.f32.mrf.mxu0
    %v824 = vadd.f32 0.0, %v823
    %v825 = vpop.f32.mrf.mxu0
    %826 = vdwg.mxu0
    %v828 = vsel %vm189, %v824, 0
    %830 = vmatprep.subr.mxu0 0.0
    %831 = vmatpush1.msra.mxu0 0.0
    %832 = vmatprep.subr.mxu0 0.0
    %833 = vmatpush1.msra.mxu0 0.0
    %834 = vmatprep.subr.mxu0 0.0
    %835 = vmatpush1.msra.mxu0 0.0
    %836 = vmatprep.subr.mxu0 0.0
    %837 = vmatpush1.msra.mxu0 0.0
    %838 = vmatprep.subr.mxu0 0.0
    %839 = vmatpush1.msra.mxu0 0.0
    %840 = vmatprep.subr.mxu0 0.0
    %841 = vmatpush1.msra.mxu0 0.0
    %842 = vmatprep.subr.mxu0 0.0
    %843 = vmatpush1.msra.mxu0 0.0
    %844 = vmatprep.subr.mxu0 0.0
    %845 = vmatpush1.msra.mxu0 0.0
    %846 = vmatprep.subr.mxu0 0.0
    %847 = vmatpush1.msra.mxu0 0.0
    %848 = vmatprep.subr.mxu0 0.0
    %849 = vmatpush1.msra.mxu0 0.0
    %850 = vmatprep.subr.mxu0 0.0
    %851 = vmatpush1.msra.mxu0 0.0
    %852 = vmatprep.subr.mxu0 0.0
    %853 = vmatpush1.msra.mxu0 0.0
    %854 = vmatprep.subr.mxu0 0.0
    %855 = vmatpush1.msra.mxu0 0.0
    %856 = vmatprep.subr.mxu0 0.0
    %857 = vmatpush1.msra.mxu0 0.0
    %858 = vmatprep.subr.mxu0 0.0
    %859 = vmatpush1.msra.mxu0 0.0
    %860 = vmatprep.subr.mxu0 0.0
    %861 = vmatpush1.msra.mxu0 %v70
    %862 = vmatprep.subr.mxu0 0.0
    %863 = vmatpush2.msra.mxu0 0.0
    %864 = vmatprep.subr.mxu0 0.0
    %865 = vmatpush2.msra.mxu0 0.0
    %866 = vmatprep.subr.mxu0 0.0
    %867 = vmatpush2.msra.mxu0 0.0
    %868 = vmatprep.subr.mxu0 0.0
    %869 = vmatpush2.msra.mxu0 0.0
    %870 = vmatprep.subr.mxu0 0.0
    %871 = vmatpush2.msra.mxu0 0.0
    %872 = vmatprep.subr.mxu0 0.0
    %873 = vmatpush2.msra.mxu0 0.0
    %874 = vmatprep.subr.mxu0 0.0
    %875 = vmatpush2.msra.mxu0 0.0
    %876 = vmatprep.subr.mxu0 0.0
    %877 = vmatpush2.msra.mxu0 0.0
    %878 = vmatprep.subr.mxu0 0.0
    %879 = vmatpush2.msra.mxu0 0.0
    %880 = vmatprep.subr.mxu0 0.0
    %881 = vmatpush2.msra.mxu0 0.0
    %882 = vmatprep.subr.mxu0 0.0
    %883 = vmatpush2.msra.mxu0 0.0
    %884 = vmatprep.subr.mxu0 0.0
    %885 = vmatpush2.msra.mxu0 0.0
    %886 = vmatprep.subr.mxu0 0.0
    %887 = vmatpush2.msra.mxu0 0.0
    %888 = vmatprep.subr.mxu0 0.0
    %889 = vmatpush2.msra.mxu0 0.0
    %890 = vmatprep.subr.mxu0 0.0
    %891 = vmatpush2.msra.mxu0 0.0
    %892 = vmatprep.subr.mxu0 0.0
    %893 = vmatpush2.msra.mxu0 0.0
    %894 = vmatprep.mubr.f32.mxu0 0.0
    %895 = vmatmul.mubr.f32.gmra.mxu0 %v828
    %v896 = vpop.f32.mrf.mxu0
    %v897 = vadd.f32 0.0, %v896
    %v898 = vpop.f32.mrf.mxu0
    %899 = vdwg.mxu0
    %v900 = vadd.f32 %v659, %v897
    %901 = vrot.lane.b32.xlu0 %v172, 104
    %v902 = vpop.permute.xlu0 %901
    %903 = vrot.lane.b32.xlu0 %v172, 72
    %v904 = vpop.permute.xlu0 %903
    %v905 = vsel %vm189, %v902, 0
    %v907 = vsel %vm189, %v904, 0
    %909 = vmatprep.subr.mxu0 0.0
    %910 = vmatpush1.xpose.msra.mxu0 0.0
    %911 = vmatprep.subr.mxu0 0.0
    %912 = vmatpush1.xpose.msra.mxu0 0.0
    %913 = vmatprep.subr.mxu0 0.0
    %914 = vmatpush1.xpose.msra.mxu0 0.0
    %915 = vmatprep.subr.mxu0 0.0
    %916 = vmatpush1.xpose.msra.mxu0 0.0
    %917 = vmatprep.subr.mxu0 0.0
    %918 = vmatpush1.xpose.msra.mxu0 0.0
    %919 = vmatprep.subr.mxu0 0.0
    %920 = vmatpush1.xpose.msra.mxu0 0.0
    %921 = vmatprep.subr.mxu0 0.0
    %922 = vmatpush1.xpose.msra.mxu0 0.0
    %923 = vmatprep.subr.mxu0 0.0
    %924 = vmatpush1.xpose.msra.mxu0 0.0
    %925 = vmatprep.subr.mxu0 0.0
    %926 = vmatpush1.xpose.msra.mxu0 0.0
    %927 = vmatprep.subr.mxu0 0.0
    %928 = vmatpush1.xpose.msra.mxu0 0.0
    %929 = vmatprep.subr.mxu0 0.0
    %930 = vmatpush1.xpose.msra.mxu0 0.0
    %931 = vmatprep.subr.mxu0 0.0
    %932 = vmatpush1.xpose.msra.mxu0 0.0
    %933 = vmatprep.subr.mxu0 0.0
    %934 = vmatpush1.xpose.msra.mxu0 0.0
    %935 = vmatprep.subr.mxu0 0.0
    %936 = vmatpush1.xpose.msra.mxu0 0.0
    %937 = vmatprep.subr.mxu0 0.0
    %938 = vmatpush1.xpose.msra.mxu0 0.0
    %939 = vmatprep.subr.mxu0 0.0
    %940 = vmatpush1.xpose.msra.mxu0 %v907
    %941 = vmatprep.subr.mxu0 0.0
    %942 = vmatpush2.xpose.msra.mxu0 0.0
    %943 = vmatprep.subr.mxu0 0.0
    %944 = vmatpush2.xpose.msra.mxu0 0.0
    %945 = vmatprep.subr.mxu0 0.0
    %946 = vmatpush2.xpose.msra.mxu0 0.0
    %947 = vmatprep.subr.mxu0 0.0
    %948 = vmatpush2.xpose.msra.mxu0 0.0
    %949 = vmatprep.subr.mxu0 0.0
    %950 = vmatpush2.xpose.msra.mxu0 0.0
    %951 = vmatprep.subr.mxu0 0.0
    %952 = vmatpush2.xpose.msra.mxu0 0.0
    %953 = vmatprep.subr.mxu0 0.0
    %954 = vmatpush2.xpose.msra.mxu0 0.0
    %955 = vmatprep.subr.mxu0 0.0
    %956 = vmatpush2.xpose.msra.mxu0 0.0
    %957 = vmatprep.subr.mxu0 0.0
    %958 = vmatpush2.xpose.msra.mxu0 0.0
    %959 = vmatprep.subr.mxu0 0.0
    %960 = vmatpush2.xpose.msra.mxu0 0.0
    %961 = vmatprep.subr.mxu0 0.0
    %962 = vmatpush2.xpose.msra.mxu0 0.0
    %963 = vmatprep.subr.mxu0 0.0
    %964 = vmatpush2.xpose.msra.mxu0 0.0
    %965 = vmatprep.subr.mxu0 0.0
    %966 = vmatpush2.xpose.msra.mxu0 0.0
    %967 = vmatprep.subr.mxu0 0.0
    %968 = vmatpush2.xpose.msra.mxu0 0.0
    %969 = vmatprep.subr.mxu0 0.0
    %970 = vmatpush2.xpose.msra.mxu0 0.0
    %971 = vmatprep.subr.mxu0 0.0
    %972 = vmatpush2.xpose.msra.mxu0 0.0
    %973 = vmatprep.mubr.f32.mxu0 0.0
    %974 = vmatmul.mubr.f32.gmra.mxu0 %v905
    %v975 = vpop.f32.mrf.mxu0
    %v976 = vadd.f32 %v184, %v975
    %v977 = vpop.f32.mrf.mxu0
    %978 = vdwg.mxu0
    %v979 = vsel %vm189, %v976, -inf
    %980 = vmax.xlane.f32.xlu0 %v979
    %v981 = vpop.xlane.xlu0 %980
    %v982 = vsub.f32 %v976, %v981
    %v983 = vmul.f32 %v982, 1.442695
    %v984 = vpow.pop %v983
    %v985 = vsel %vm189, %v984, 0.0
    %986 = vadd.xlane.f32.xlu0 %v985
    %v987 = vpop.xlane.xlu0 %986
    %v988 = vrcp.pop %v987
    %v989 = vmul.f32 %v984, %v988
    %990 = vrot.lane.b32.xlu0 %v172, 40
    %v991 = vpop.permute.xlu0 %990
    %v994 = vsel %vm189, %v989, 0
    %996 = vmatprep.subr.mxu0 0.0
    %997 = vmatpush1.msra.mxu0 0.0
    %998 = vmatprep.subr.mxu0 0.0
    %999 = vmatpush1.msra.mxu0 0.0
    %1000 = vmatprep.subr.mxu0 0.0
    %1001 = vmatpush1.msra.mxu0 0.0
    %1002 = vmatprep.subr.mxu0 0.0
    %1003 = vmatpush1.msra.mxu0 0.0
    %1004 = vmatprep.subr.mxu0 0.0
    %1005 = vmatpush1.msra.mxu0 0.0
    %1006 = vmatprep.subr.mxu0 0.0
    %1007 = vmatpush1.msra.mxu0 0.0
    %1008 = vmatprep.subr.mxu0 0.0
    %1009 = vmatpush1.msra.mxu0 0.0
    %1010 = vmatprep.subr.mxu0 0.0
    %1011 = vmatpush1.msra.mxu0 0.0
    %1012 = vmatprep.subr.mxu0 0.0
    %1013 = vmatpush1.msra.mxu0 0.0
    %1014 = vmatprep.subr.mxu0 0.0
    %1015 = vmatpush1.msra.mxu0 0.0
    %1016 = vmatprep.subr.mxu0 0.0
    %1017 = vmatpush1.msra.mxu0 0.0
    %1018 = vmatprep.subr.mxu0 0.0
    %1019 = vmatpush1.msra.mxu0 0.0
    %1020 = vmatprep.subr.mxu0 0.0
    %1021 = vmatpush1.msra.mxu0 0.0
    %1022 = vmatprep.subr.mxu0 0.0
    %1023 = vmatpush1.msra.mxu0 0.0
    %1024 = vmatprep.subr.mxu0 0.0
    %1025 = vmatpush1.msra.mxu0 0.0
    %1026 = vmatprep.subr.mxu0 0.0
    %1027 = vmatpush1.msra.mxu0 %v991
    %1028 = vmatprep.subr.mxu0 0.0
    %1029 = vmatpush2.msra.mxu0 0.0
    %1030 = vmatprep.subr.mxu0 0.0
    %1031 = vmatpush2.msra.mxu0 0.0
    %1032 = vmatprep.subr.mxu0 0.0
    %1033 = vmatpush2.msra.mxu0 0.0
    %1034 = vmatprep.subr.mxu0 0.0
    %1035 = vmatpush2.msra.mxu0 0.0
    %1036 = vmatprep.subr.mxu0 0.0
    %1037 = vmatpush2.msra.mxu0 0.0
    %1038 = vmatprep.subr.mxu0 0.0
    %1039 = vmatpush2.msra.mxu0 0.0
    %1040 = vmatprep.subr.mxu0 0.0
    %1041 = vmatpush2.msra.mxu0 0.0
    %1042 = vmatprep.subr.mxu0 0.0
    %1043 = vmatpush2.msra.mxu0 0.0
    %1044 = vmatprep.subr.mxu0 0.0
    %1045 = vmatpush2.msra.mxu0 0.0
    %1046 = vmatprep.subr.mxu0 0.0
    %1047 = vmatpush2.msra.mxu0 0.0
    %1048 = vmatprep.subr.mxu0 0.0
    %1049 = vmatpush2.msra.mxu0 0.0
    %1050 = vmatprep.subr.mxu0 0.0
    %1051 = vmatpush2.msra.mxu0 0.0
    %1052 = vmatprep.subr.mxu0 0.0
    %1053 = vmatpush2.msra.mxu0 0.0
    %1054 = vmatprep.subr.mxu0 0.0
    %1055 = vmatpush2.msra.mxu0 0.0
    %1056 = vmatprep.subr.mxu0 0.0
    %1057 = vmatpush2.msra.mxu0 0.0
    %1058 = vmatprep.subr.mxu0 0.0
    %1059 = vmatpush2.msra.mxu0 0.0
    %1060 = vmatprep.mubr.f32.mxu0 0.0
    %1061 = vmatmul.mubr.f32.gmra.mxu0 %v994
    %v1062 = vpop.f32.mrf.mxu0
    %v1063 = vadd.f32 0.0, %v1062
    %v1064 = vpop.f32.mrf.mxu0
    %1065 = vdwg.mxu0
    %v1067 = vsel %vm189, %v1063, 0
    %1069 = vmatprep.subr.mxu0 0.0
    %1070 = vmatpush1.msra.mxu0 0.0
    %1071 = vmatprep.subr.mxu0 0.0
    %1072 = vmatpush1.msra.mxu0 0.0
    %1073 = vmatprep.subr.mxu0 0.0
    %1074 = vmatpush1.msra.mxu0 0.0
    %1075 = vmatprep.subr.mxu0 0.0
    %1076 = vmatpush1.msra.mxu0 0.0
    %1077 = vmatprep.subr.mxu0 0.0
    %1078 = vmatpush1.msra.mxu0 0.0
    %1079 = vmatprep.subr.mxu0 0.0
    %1080 = vmatpush1.msra.mxu0 0.0
    %1081 = vmatprep.subr.mxu0 0.0
    %1082 = vmatpush1.msra.mxu0 0.0
    %1083 = vmatprep.subr.mxu0 0.0
    %1084 = vmatpush1.msra.mxu0 0.0
    %1085 = vmatprep.subr.mxu0 0.0
    %1086 = vmatpush1.msra.mxu0 0.0
    %1087 = vmatprep.subr.mxu0 0.0
    %1088 = vmatpush1.msra.mxu0 0.0
    %1089 = vmatprep.subr.mxu0 0.0
    %1090 = vmatpush1.msra.mxu0 0.0
    %1091 = vmatprep.subr.mxu0 0.0
    %1092 = vmatpush1.msra.mxu0 0.0
    %1093 = vmatprep.subr.mxu0 0.0
    %1094 = vmatpush1.msra.mxu0 0.0
    %1095 = vmatprep.subr.mxu0 0.0
    %1096 = vmatpush1.msra.mxu0 0.0
    %1097 = vmatprep.subr.mxu0 0.0
    %1098 = vmatpush1.msra.mxu0 0.0
    %1099 = vmatprep.subr.mxu0 0.0
    %1100 = vmatpush1.msra.mxu0 %v71
    %1101 = vmatprep.subr.mxu0 0.0
    %1102 = vmatpush2.msra.mxu0 0.0
    %1103 = vmatprep.subr.mxu0 0.0
    %1104 = vmatpush2.msra.mxu0 0.0
    %1105 = vmatprep.subr.mxu0 0.0
    %1106 = vmatpush2.msra.mxu0 0.0
    %1107 = vmatprep.subr.mxu0 0.0
    %1108 = vmatpush2.msra.mxu0 0.0
    %1109 = vmatprep.subr.mxu0 0.0
    %1110 = vmatpush2.msra.mxu0 0.0
    %1111 = vmatprep.subr.mxu0 0.0
    %1112 = vmatpush2.msra.mxu0 0.0
    %1113 = vmatprep.subr.mxu0 0.0
    %1114 = vmatpush2.msra.mxu0 0.0
    %1115 = vmatprep.subr.mxu0 0.0
    %1116 = vmatpush2.msra.mxu0 0.0
    %1117 = vmatprep.subr.mxu0 0.0
    %1118 = vmatpush2.msra.mxu0 0.0
    %1119 = vmatprep.subr.mxu0 0.0
    %1120 = vmatpush2.msra.mxu0 0.0
    %1121 = vmatprep.subr.mxu0 0.0
    %1122 = vmatpush2.msra.mxu0 0.0
    %1123 = vmatprep.subr.mxu0 0.0
    %1124 = vmatpush2.msra.mxu0 0.0
    %1125 = vmatprep.subr.mxu0 0.0
    %1126 = vmatpush2.msra.mxu0 0.0
    %1127 = vmatprep.subr.mxu0 0.0
    %1128 = vmatpush2.msra.mxu0 0.0
    %1129 = vmatprep.subr.mxu0 0.0
    %1130 = vmatpush2.msra.mxu0 0.0
    %1131 = vmatprep.subr.mxu0 0.0
    %1132 = vmatpush2.msra.mxu0 0.0
    %1133 = vmatprep.mubr.f32.mxu0 0.0
    %1134 = vmatmul.mubr.f32.gmra.mxu0 %v1067
    %v1135 = vpop.f32.mrf.mxu0
    %v1136 = vadd.f32 0.0, %v1135
    %v1137 = vpop.f32.mrf.mxu0
    %1138 = vdwg.mxu0
    %v1139 = vadd.f32 %v900, %v1136
    %v1141 = vlaneseq
    %v1142 = vshrl.u32 %v1141, 7
    %v1143 = vsub.s32 0, %v1142
    %v1144 = vrot.slane %v91, %v1143
    %1147 = vrot.lane.b32.xlu0 %v177, 96
    %v1148 = vpop.permute.xlu0 %1147
    %v1149 = vsel %vm189, %v177, 0
    %v1151 = vsel %vm189, %v1148, 0
    %1153 = vmatprep.subr.mxu0 0.0
    %1154 = vmatpush1.xpose.msra.mxu0 0.0
    %1155 = vmatprep.subr.mxu0 0.0
    %1156 = vmatpush1.xpose.msra.mxu0 0.0
    %1157 = vmatprep.subr.mxu0 0.0
    %1158 = vmatpush1.xpose.msra.mxu0 0.0
    %1159 = vmatprep.subr.mxu0 0.0
    %1160 = vmatpush1.xpose.msra.mxu0 0.0
    %1161 = vmatprep.subr.mxu0 0.0
    %1162 = vmatpush1.xpose.msra.mxu0 0.0
    %1163 = vmatprep.subr.mxu0 0.0
    %1164 = vmatpush1.xpose.msra.mxu0 0.0
    %1165 = vmatprep.subr.mxu0 0.0
    %1166 = vmatpush1.xpose.msra.mxu0 0.0
    %1167 = vmatprep.subr.mxu0 0.0
    %1168 = vmatpush1.xpose.msra.mxu0 0.0
    %1169 = vmatprep.subr.mxu0 0.0
    %1170 = vmatpush1.xpose.msra.mxu0 0.0
    %1171 = vmatprep.subr.mxu0 0.0
    %1172 = vmatpush1.xpose.msra.mxu0 0.0
    %1173 = vmatprep.subr.mxu0 0.0
    %1174 = vmatpush1.xpose.msra.mxu0 0.0
    %1175 = vmatprep.subr.mxu0 0.0
    %1176 = vmatpush1.xpose.msra.mxu0 0.0
    %1177 = vmatprep.subr.mxu0 0.0
    %1178 = vmatpush1.xpose.msra.mxu0 0.0
    %1179 = vmatprep.subr.mxu0 0.0
    %1180 = vmatpush1.xpose.msra.mxu0 0.0
    %1181 = vmatprep.subr.mxu0 0.0
    %1182 = vmatpush1.xpose.msra.mxu0 0.0
    %1183 = vmatprep.subr.mxu0 0.0
    %1184 = vmatpush1.xpose.msra.mxu0 %v1151
    %1185 = vmatprep.subr.mxu0 0.0
    %1186 = vmatpush2.xpose.msra.mxu0 0.0
    %1187 = vmatprep.subr.mxu0 0.0
    %1188 = vmatpush2.xpose.msra.mxu0 0.0
    %1189 = vmatprep.subr.mxu0 0.0
    %1190 = vmatpush2.xpose.msra.mxu0 0.0
    %1191 = vmatprep.subr.mxu0 0.0
    %1192 = vmatpush2.xpose.msra.mxu0 0.0
    %1193 = vmatprep.subr.mxu0 0.0
    %1194 = vmatpush2.xpose.msra.mxu0 0.0
    %1195 = vmatprep.subr.mxu0 0.0
    %1196 = vmatpush2.xpose.msra.mxu0 0.0
    %1197 = vmatprep.subr.mxu0 0.0
    %1198 = vmatpush2.xpose.msra.mxu0 0.0
    %1199 = vmatprep.subr.mxu0 0.0
    %1200 = vmatpush2.xpose.msra.mxu0 0.0
    %1201 = vmatprep.subr.mxu0 0.0
    %1202 = vmatpush2.xpose.msra.mxu0 0.0
    %1203 = vmatprep.subr.mxu0 0.0
    %1204 = vmatpush2.xpose.msra.mxu0 0.0
    %1205 = vmatprep.subr.mxu0 0.0
    %1206 = vmatpush2.xpose.msra.mxu0 0.0
    %1207 = vmatprep.subr.mxu0 0.0
    %1208 = vmatpush2.xpose.msra.mxu0 0.0
    %1209 = vmatprep.subr.mxu0 0.0
    %1210 = vmatpush2.xpose.msra.mxu0 0.0
    %1211 = vmatprep.subr.mxu0 0.0
    %1212 = vmatpush2.xpose.msra.mxu0 0.0
    %1213 = vmatprep.subr.mxu0 0.0
    %1214 = vmatpush2.xpose.msra.mxu0 0.0
    %1215 = vmatprep.subr.mxu0 0.0
    %1216 = vmatpush2.xpose.msra.mxu0 0.0
    %1217 = vmatprep.mubr.f32.mxu0 0.0
    %1218 = vmatmul.mubr.f32.gmra.mxu0 %v1149
    %v1219 = vpop.f32.mrf.mxu0
    %v1220 = vadd.f32 %v1144, %v1219
    %v1221 = vpop.f32.mrf.mxu0
    %1222 = vdwg.mxu0
    %v1223 = vsel %vm189, %v1220, -inf
    %1224 = vmax.xlane.f32.xlu0 %v1223
    %v1225 = vpop.xlane.xlu0 %1224
    %v1226 = vsub.f32 %v1220, %v1225
    %v1227 = vmul.f32 %v1226, 1.442695
    %v1228 = vpow.pop %v1227
    %v1229 = vsel %vm189, %v1228, 0.0
    %1230 = vadd.xlane.f32.xlu0 %v1229
    %v1231 = vpop.xlane.xlu0 %1230
    %v1232 = vrcp.pop %v1231
    %v1233 = vmul.f32 %v1228, %v1232
    %1234 = vrot.lane.b32.xlu0 %v177, 64
    %v1235 = vpop.permute.xlu0 %1234
    %v1238 = vsel %vm189, %v1233, 0
    %1240 = vmatprep.subr.mxu0 0.0
    %1241 = vmatpush1.msra.mxu0 0.0
    %1242 = vmatprep.subr.mxu0 0.0
    %1243 = vmatpush1.msra.mxu0 0.0
    %1244 = vmatprep.subr.mxu0 0.0
    %1245 = vmatpush1.msra.mxu0 0.0
    %1246 = vmatprep.subr.mxu0 0.0
    %1247 = vmatpush1.msra.mxu0 0.0
    %1248 = vmatprep.subr.mxu0 0.0
    %1249 = vmatpush1.msra.mxu0 0.0
    %1250 = vmatprep.subr.mxu0 0.0
    %1251 = vmatpush1.msra.mxu0 0.0
    %1252 = vmatprep.subr.mxu0 0.0
    %1253 = vmatpush1.msra.mxu0 0.0
    %1254 = vmatprep.subr.mxu0 0.0
    %1255 = vmatpush1.msra.mxu0 0.0
    %1256 = vmatprep.subr.mxu0 0.0
    %1257 = vmatpush1.msra.mxu0 0.0
    %1258 = vmatprep.subr.mxu0 0.0
    %1259 = vmatpush1.msra.mxu0 0.0
    %1260 = vmatprep.subr.mxu0 0.0
    %1261 = vmatpush1.msra.mxu0 0.0
    %1262 = vmatprep.subr.mxu0 0.0
    %1263 = vmatpush1.msra.mxu0 0.0
    %1264 = vmatprep.subr.mxu0 0.0
    %1265 = vmatpush1.msra.mxu0 0.0
    %1266 = vmatprep.subr.mxu0 0.0
    %1267 = vmatpush1.msra.mxu0 0.0
    %1268 = vmatprep.subr.mxu0 0.0
    %1269 = vmatpush1.msra.mxu0 0.0
    %1270 = vmatprep.subr.mxu0 0.0
    %1271 = vmatpush1.msra.mxu0 %v1235
    %1272 = vmatprep.subr.mxu0 0.0
    %1273 = vmatpush2.msra.mxu0 0.0
    %1274 = vmatprep.subr.mxu0 0.0
    %1275 = vmatpush2.msra.mxu0 0.0
    %1276 = vmatprep.subr.mxu0 0.0
    %1277 = vmatpush2.msra.mxu0 0.0
    %1278 = vmatprep.subr.mxu0 0.0
    %1279 = vmatpush2.msra.mxu0 0.0
    %1280 = vmatprep.subr.mxu0 0.0
    %1281 = vmatpush2.msra.mxu0 0.0
    %1282 = vmatprep.subr.mxu0 0.0
    %1283 = vmatpush2.msra.mxu0 0.0
    %1284 = vmatprep.subr.mxu0 0.0
    %1285 = vmatpush2.msra.mxu0 0.0
    %1286 = vmatprep.subr.mxu0 0.0
    %1287 = vmatpush2.msra.mxu0 0.0
    %1288 = vmatprep.subr.mxu0 0.0
    %1289 = vmatpush2.msra.mxu0 0.0
    %1290 = vmatprep.subr.mxu0 0.0
    %1291 = vmatpush2.msra.mxu0 0.0
    %1292 = vmatprep.subr.mxu0 0.0
    %1293 = vmatpush2.msra.mxu0 0.0
    %1294 = vmatprep.subr.mxu0 0.0
    %1295 = vmatpush2.msra.mxu0 0.0
    %1296 = vmatprep.subr.mxu0 0.0
    %1297 = vmatpush2.msra.mxu0 0.0
    %1298 = vmatprep.subr.mxu0 0.0
    %1299 = vmatpush2.msra.mxu0 0.0
    %1300 = vmatprep.subr.mxu0 0.0
    %1301 = vmatpush2.msra.mxu0 0.0
    %1302 = vmatprep.subr.mxu0 0.0
    %1303 = vmatpush2.msra.mxu0 0.0
    %1304 = vmatprep.mubr.f32.mxu0 0.0
    %1305 = vmatmul.mubr.f32.gmra.mxu0 %v1238
    %v1306 = vpop.f32.mrf.mxu0
    %v1307 = vadd.f32 0.0, %v1306
    %v1308 = vpop.f32.mrf.mxu0
    %1309 = vdwg.mxu0
    %1310 = vrot.lane.b32.xlu0 %v177, 120
    %v1311 = vpop.permute.xlu0 %1310
    %1312 = vrot.lane.b32.xlu0 %v177, 88
    %v1313 = vpop.permute.xlu0 %1312
    %v1314 = vsel %vm189, %v1311, 0
    %v1316 = vsel %vm189, %v1313, 0
    %1318 = vmatprep.subr.mxu0 0.0
    %1319 = vmatpush1.xpose.msra.mxu0 0.0
    %1320 = vmatprep.subr.mxu0 0.0
    %1321 = vmatpush1.xpose.msra.mxu0 0.0
    %1322 = vmatprep.subr.mxu0 0.0
    %1323 = vmatpush1.xpose.msra.mxu0 0.0
    %1324 = vmatprep.subr.mxu0 0.0
    %1325 = vmatpush1.xpose.msra.mxu0 0.0
    %1326 = vmatprep.subr.mxu0 0.0
    %1327 = vmatpush1.xpose.msra.mxu0 0.0
    %1328 = vmatprep.subr.mxu0 0.0
    %1329 = vmatpush1.xpose.msra.mxu0 0.0
    %1330 = vmatprep.subr.mxu0 0.0
    %1331 = vmatpush1.xpose.msra.mxu0 0.0
    %1332 = vmatprep.subr.mxu0 0.0
    %1333 = vmatpush1.xpose.msra.mxu0 0.0
    %1334 = vmatprep.subr.mxu0 0.0
    %1335 = vmatpush1.xpose.msra.mxu0 0.0
    %1336 = vmatprep.subr.mxu0 0.0
    %1337 = vmatpush1.xpose.msra.mxu0 0.0
    %1338 = vmatprep.subr.mxu0 0.0
    %1339 = vmatpush1.xpose.msra.mxu0 0.0
    %1340 = vmatprep.subr.mxu0 0.0
    %1341 = vmatpush1.xpose.msra.mxu0 0.0
    %1342 = vmatprep.subr.mxu0 0.0
    %1343 = vmatpush1.xpose.msra.mxu0 0.0
    %1344 = vmatprep.subr.mxu0 0.0
    %1345 = vmatpush1.xpose.msra.mxu0 0.0
    %1346 = vmatprep.subr.mxu0 0.0
    %1347 = vmatpush1.xpose.msra.mxu0 0.0
    %1348 = vmatprep.subr.mxu0 0.0
    %1349 = vmatpush1.xpose.msra.mxu0 %v1316
    %1350 = vmatprep.subr.mxu0 0.0
    %1351 = vmatpush2.xpose.msra.mxu0 0.0
    %1352 = vmatprep.subr.mxu0 0.0
    %1353 = vmatpush2.xpose.msra.mxu0 0.0
    %1354 = vmatprep.subr.mxu0 0.0
    %1355 = vmatpush2.xpose.msra.mxu0 0.0
    %1356 = vmatprep.subr.mxu0 0.0
    %1357 = vmatpush2.xpose.msra.mxu0 0.0
    %1358 = vmatprep.subr.mxu0 0.0
    %1359 = vmatpush2.xpose.msra.mxu0 0.0
    %1360 = vmatprep.subr.mxu0 0.0
    %1361 = vmatpush2.xpose.msra.mxu0 0.0
    %1362 = vmatprep.subr.mxu0 0.0
    %1363 = vmatpush2.xpose.msra.mxu0 0.0
    %1364 = vmatprep.subr.mxu0 0.0
    %1365 = vmatpush2.xpose.msra.mxu0 0.0
    %1366 = vmatprep.subr.mxu0 0.0
    %1367 = vmatpush2.xpose.msra.mxu0 0.0
    %1368 = vmatprep.subr.mxu0 0.0
    %1369 = vmatpush2.xpose.msra.mxu0 0.0
    %1370 = vmatprep.subr.mxu0 0.0
    %1371 = vmatpush2.xpose.msra.mxu0 0.0
    %1372 = vmatprep.subr.mxu0 0.0
    %1373 = vmatpush2.xpose.msra.mxu0 0.0
    %1374 = vmatprep.subr.mxu0 0.0
    %1375 = vmatpush2.xpose.msra.mxu0 0.0
    %1376 = vmatprep.subr.mxu0 0.0
    %1377 = vmatpush2.xpose.msra.mxu0 0.0
    %1378 = vmatprep.subr.mxu0 0.0
    %1379 = vmatpush2.xpose.msra.mxu0 0.0
    %1380 = vmatprep.subr.mxu0 0.0
    %1381 = vmatpush2.xpose.msra.mxu0 0.0
    %1382 = vmatprep.mubr.f32.mxu0 0.0
    %1383 = vmatmul.mubr.f32.gmra.mxu0 %v1314
    %v1384 = vpop.f32.mrf.mxu0
    %v1385 = vadd.f32 %v1144, %v1384
    %v1386 = vpop.f32.mrf.mxu0
    %1387 = vdwg.mxu0
    %v1388 = vsel %vm189, %v1385, -inf
    %1389 = vmax.xlane.f32.xlu0 %v1388
    %v1390 = vpop.xlane.xlu0 %1389
    %v1391 = vsub.f32 %v1385, %v1390
    %v1392 = vmul.f32 %v1391, 1.442695
    %v1393 = vpow.pop %v1392
    %v1394 = vsel %vm189, %v1393, 0.0
    %1395 = vadd.xlane.f32.xlu0 %v1394
    %v1396 = vpop.xlane.xlu0 %1395
    %v1397 = vrcp.pop %v1396
    %v1398 = vmul.f32 %v1393, %v1397
    %1399 = vrot.lane.b32.xlu0 %v177, 56
    %v1400 = vpop.permute.xlu0 %1399
    %v1403 = vsel %vm189, %v1398, 0
    %1405 = vmatprep.subr.mxu0 0.0
    %1406 = vmatpush1.msra.mxu0 0.0
    %1407 = vmatprep.subr.mxu0 0.0
    %1408 = vmatpush1.msra.mxu0 0.0
    %1409 = vmatprep.subr.mxu0 0.0
    %1410 = vmatpush1.msra.mxu0 0.0
    %1411 = vmatprep.subr.mxu0 0.0
    %1412 = vmatpush1.msra.mxu0 0.0
    %1413 = vmatprep.subr.mxu0 0.0
    %1414 = vmatpush1.msra.mxu0 0.0
    %1415 = vmatprep.subr.mxu0 0.0
    %1416 = vmatpush1.msra.mxu0 0.0
    %1417 = vmatprep.subr.mxu0 0.0
    %1418 = vmatpush1.msra.mxu0 0.0
    %1419 = vmatprep.subr.mxu0 0.0
    %1420 = vmatpush1.msra.mxu0 0.0
    %1421 = vmatprep.subr.mxu0 0.0
    %1422 = vmatpush1.msra.mxu0 0.0
    %1423 = vmatprep.subr.mxu0 0.0
    %1424 = vmatpush1.msra.mxu0 0.0
    %1425 = vmatprep.subr.mxu0 0.0
    %1426 = vmatpush1.msra.mxu0 0.0
    %1427 = vmatprep.subr.mxu0 0.0
    %1428 = vmatpush1.msra.mxu0 0.0
    %1429 = vmatprep.subr.mxu0 0.0
    %1430 = vmatpush1.msra.mxu0 0.0
    %1431 = vmatprep.subr.mxu0 0.0
    %1432 = vmatpush1.msra.mxu0 0.0
    %1433 = vmatprep.subr.mxu0 0.0
    %1434 = vmatpush1.msra.mxu0 0.0
    %1435 = vmatprep.subr.mxu0 0.0
    %1436 = vmatpush1.msra.mxu0 %v1400
    %1437 = vmatprep.subr.mxu0 0.0
    %1438 = vmatpush2.msra.mxu0 0.0
    %1439 = vmatprep.subr.mxu0 0.0
    %1440 = vmatpush2.msra.mxu0 0.0
    %1441 = vmatprep.subr.mxu0 0.0
    %1442 = vmatpush2.msra.mxu0 0.0
    %1443 = vmatprep.subr.mxu0 0.0
    %1444 = vmatpush2.msra.mxu0 0.0
    %1445 = vmatprep.subr.mxu0 0.0
    %1446 = vmatpush2.msra.mxu0 0.0
    %1447 = vmatprep.subr.mxu0 0.0
    %1448 = vmatpush2.msra.mxu0 0.0
    %1449 = vmatprep.subr.mxu0 0.0
    %1450 = vmatpush2.msra.mxu0 0.0
    %1451 = vmatprep.subr.mxu0 0.0
    %1452 = vmatpush2.msra.mxu0 0.0
    %1453 = vmatprep.subr.mxu0 0.0
    %1454 = vmatpush2.msra.mxu0 0.0
    %1455 = vmatprep.subr.mxu0 0.0
    %1456 = vmatpush2.msra.mxu0 0.0
    %1457 = vmatprep.subr.mxu0 0.0
    %1458 = vmatpush2.msra.mxu0 0.0
    %1459 = vmatprep.subr.mxu0 0.0
    %1460 = vmatpush2.msra.mxu0 0.0
    %1461 = vmatprep.subr.mxu0 0.0
    %1462 = vmatpush2.msra.mxu0 0.0
    %1463 = vmatprep.subr.mxu0 0.0
    %1464 = vmatpush2.msra.mxu0 0.0
    %1465 = vmatprep.subr.mxu0 0.0
    %1466 = vmatpush2.msra.mxu0 0.0
    %1467 = vmatprep.subr.mxu0 0.0
    %1468 = vmatpush2.msra.mxu0 0.0
    %1469 = vmatprep.mubr.f32.mxu0 0.0
    %1470 = vmatmul.mubr.f32.gmra.mxu0 %v1403
    %v1471 = vpop.f32.mrf.mxu0
    %v1472 = vadd.f32 0.0, %v1471
    %v1473 = vpop.f32.mrf.mxu0
    %1474 = vdwg.mxu0
    %v1476 = vsel %vm189, %v1472, 0
    %1478 = vmatprep.subr.mxu0 0.0
    %1479 = vmatpush1.msra.mxu0 0.0
    %1480 = vmatprep.subr.mxu0 0.0
    %1481 = vmatpush1.msra.mxu0 0.0
    %1482 = vmatprep.subr.mxu0 0.0
    %1483 = vmatpush1.msra.mxu0 0.0
    %1484 = vmatprep.subr.mxu0 0.0
    %1485 = vmatpush1.msra.mxu0 0.0
    %1486 = vmatprep.subr.mxu0 0.0
    %1487 = vmatpush1.msra.mxu0 0.0
    %1488 = vmatprep.subr.mxu0 0.0
    %1489 = vmatpush1.msra.mxu0 0.0
    %1490 = vmatprep.subr.mxu0 0.0
    %1491 = vmatpush1.msra.mxu0 0.0
    %1492 = vmatprep.subr.mxu0 0.0
    %1493 = vmatpush1.msra.mxu0 0.0
    %1494 = vmatprep.subr.mxu0 0.0
    %1495 = vmatpush1.msra.mxu0 0.0
    %1496 = vmatprep.subr.mxu0 0.0
    %1497 = vmatpush1.msra.mxu0 0.0
    %1498 = vmatprep.subr.mxu0 0.0
    %1499 = vmatpush1.msra.mxu0 0.0
    %1500 = vmatprep.subr.mxu0 0.0
    %1501 = vmatpush1.msra.mxu0 0.0
    %1502 = vmatprep.subr.mxu0 0.0
    %1503 = vmatpush1.msra.mxu0 0.0
    %1504 = vmatprep.subr.mxu0 0.0
    %1505 = vmatpush1.msra.mxu0 0.0
    %1506 = vmatprep.subr.mxu0 0.0
    %1507 = vmatpush1.msra.mxu0 0.0
    %1508 = vmatprep.subr.mxu0 0.0
    %1509 = vmatpush1.msra.mxu0 %v69
    %1510 = vmatprep.subr.mxu0 0.0
    %1511 = vmatpush2.msra.mxu0 0.0
    %1512 = vmatprep.subr.mxu0 0.0
    %1513 = vmatpush2.msra.mxu0 0.0
    %1514 = vmatprep.subr.mxu0 0.0
    %1515 = vmatpush2.msra.mxu0 0.0
    %1516 = vmatprep.subr.mxu0 0.0
    %1517 = vmatpush2.msra.mxu0 0.0
    %1518 = vmatprep.subr.mxu0 0.0
    %1519 = vmatpush2.msra.mxu0 0.0
    %1520 = vmatprep.subr.mxu0 0.0
    %1521 = vmatpush2.msra.mxu0 0.0
    %1522 = vmatprep.subr.mxu0 0.0
    %1523 = vmatpush2.msra.mxu0 0.0
    %1524 = vmatprep.subr.mxu0 0.0
    %1525 = vmatpush2.msra.mxu0 0.0
    %1526 = vmatprep.subr.mxu0 0.0
    %1527 = vmatpush2.msra.mxu0 0.0
    %1528 = vmatprep.subr.mxu0 0.0
    %1529 = vmatpush2.msra.mxu0 0.0
    %1530 = vmatprep.subr.mxu0 0.0
    %1531 = vmatpush2.msra.mxu0 0.0
    %1532 = vmatprep.subr.mxu0 0.0
    %1533 = vmatpush2.msra.mxu0 0.0
    %1534 = vmatprep.subr.mxu0 0.0
    %1535 = vmatpush2.msra.mxu0 0.0
    %1536 = vmatprep.subr.mxu0 0.0
    %1537 = vmatpush2.msra.mxu0 0.0
    %1538 = vmatprep.subr.mxu0 0.0
    %1539 = vmatpush2.msra.mxu0 0.0
    %1540 = vmatprep.subr.mxu0 0.0
    %1541 = vmatpush2.msra.mxu0 0.0
    %1542 = vmatprep.mubr.f32.mxu0 0.0
    %1543 = vmatmul.mubr.f32.gmra.mxu0 %v1476
    %v1544 = vpop.f32.mrf.mxu0
    %v1545 = vadd.f32 0.0, %v1544
    %v1546 = vpop.f32.mrf.mxu0
    %1547 = vdwg.mxu0
    %v1549 = vsel %vm189, %v1307, 0
    %1551 = vmatprep.subr.mxu0 0.0
    %1552 = vmatpush1.msra.mxu0 0.0
    %1553 = vmatprep.subr.mxu0 0.0
    %1554 = vmatpush1.msra.mxu0 0.0
    %1555 = vmatprep.subr.mxu0 0.0
    %1556 = vmatpush1.msra.mxu0 0.0
    %1557 = vmatprep.subr.mxu0 0.0
    %1558 = vmatpush1.msra.mxu0 0.0
    %1559 = vmatprep.subr.mxu0 0.0
    %1560 = vmatpush1.msra.mxu0 0.0
    %1561 = vmatprep.subr.mxu0 0.0
    %1562 = vmatpush1.msra.mxu0 0.0
    %1563 = vmatprep.subr.mxu0 0.0
    %1564 = vmatpush1.msra.mxu0 0.0
    %1565 = vmatprep.subr.mxu0 0.0
    %1566 = vmatpush1.msra.mxu0 0.0
    %1567 = vmatprep.subr.mxu0 0.0
    %1568 = vmatpush1.msra.mxu0 0.0
    %1569 = vmatprep.subr.mxu0 0.0
    %1570 = vmatpush1.msra.mxu0 0.0
    %1571 = vmatprep.subr.mxu0 0.0
    %1572 = vmatpush1.msra.mxu0 0.0
    %1573 = vmatprep.subr.mxu0 0.0
    %1574 = vmatpush1.msra.mxu0 0.0
    %1575 = vmatprep.subr.mxu0 0.0
    %1576 = vmatpush1.msra.mxu0 0.0
    %1577 = vmatprep.subr.mxu0 0.0
    %1578 = vmatpush1.msra.mxu0 0.0
    %1579 = vmatprep.subr.mxu0 0.0
    %1580 = vmatpush1.msra.mxu0 0.0
    %1581 = vmatprep.subr.mxu0 0.0
    %1582 = vmatpush1.msra.mxu0 %v68
    %1583 = vmatprep.subr.mxu0 0.0
    %1584 = vmatpush2.msra.mxu0 0.0
    %1585 = vmatprep.subr.mxu0 0.0
    %1586 = vmatpush2.msra.mxu0 0.0
    %1587 = vmatprep.subr.mxu0 0.0
    %1588 = vmatpush2.msra.mxu0 0.0
    %1589 = vmatprep.subr.mxu0 0.0
    %1590 = vmatpush2.msra.mxu0 0.0
    %1591 = vmatprep.subr.mxu0 0.0
    %1592 = vmatpush2.msra.mxu0 0.0
    %1593 = vmatprep.subr.mxu0 0.0
    %1594 = vmatpush2.msra.mxu0 0.0
    %1595 = vmatprep.subr.mxu0 0.0
    %1596 = vmatpush2.msra.mxu0 0.0
    %1597 = vmatprep.subr.mxu0 0.0
    %1598 = vmatpush2.msra.mxu0 0.0
    %1599 = vmatprep.subr.mxu0 0.0
    %1600 = vmatpush2.msra.mxu0 0.0
    %1601 = vmatprep.subr.mxu0 0.0
    %1602 = vmatpush2.msra.mxu0 0.0
    %1603 = vmatprep.subr.mxu0 0.0
    %1604 = vmatpush2.msra.mxu0 0.0
    %1605 = vmatprep.subr.mxu0 0.0
    %1606 = vmatpush2.msra.mxu0 0.0
    %1607 = vmatprep.subr.mxu0 0.0
    %1608 = vmatpush2.msra.mxu0 0.0
    %1609 = vmatprep.subr.mxu0 0.0
    %1610 = vmatpush2.msra.mxu0 0.0
    %1611 = vmatprep.subr.mxu0 0.0
    %1612 = vmatpush2.msra.mxu0 0.0
    %1613 = vmatprep.subr.mxu0 0.0
    %1614 = vmatpush2.msra.mxu0 0.0
    %1615 = vmatprep.mubr.f32.mxu0 0.0
    %1616 = vmatmul.mubr.f32.gmra.mxu0 %v1549
    %v1617 = vpop.f32.mrf.mxu0
    %v1618 = vadd.f32 %v1545, %v1617
    %v1619 = vpop.f32.mrf.mxu0
    %1620 = vdwg.mxu0
    %1621 = vrot.lane.b32.xlu0 %v177, 112
    %v1622 = vpop.permute.xlu0 %1621
    %1623 = vrot.lane.b32.xlu0 %v177, 80
    %v1624 = vpop.permute.xlu0 %1623
    %v1625 = vsel %vm189, %v1622, 0
    %v1627 = vsel %vm189, %v1624, 0
    %1629 = vmatprep.subr.mxu0 0.0
    %1630 = vmatpush1.xpose.msra.mxu0 0.0
    %1631 = vmatprep.subr.mxu0 0.0
    %1632 = vmatpush1.xpose.msra.mxu0 0.0
    %1633 = vmatprep.subr.mxu0 0.0
    %1634 = vmatpush1.xpose.msra.mxu0 0.0
    %1635 = vmatprep.subr.mxu0 0.0
    %1636 = vmatpush1.xpose.msra.mxu0 0.0
    %1637 = vmatprep.subr.mxu0 0.0
    %1638 = vmatpush1.xpose.msra.mxu0 0.0
    %1639 = vmatprep.subr.mxu0 0.0
    %1640 = vmatpush1.xpose.msra.mxu0 0.0
    %1641 = vmatprep.subr.mxu0 0.0
    %1642 = vmatpush1.xpose.msra.mxu0 0.0
    %1643 = vmatprep.subr.mxu0 0.0
    %1644 = vmatpush1.xpose.msra.mxu0 0.0
    %1645 = vmatprep.subr.mxu0 0.0
    %1646 = vmatpush1.xpose.msra.mxu0 0.0
    %1647 = vmatprep.subr.mxu0 0.0
    %1648 = vmatpush1.xpose.msra.mxu0 0.0
    %1649 = vmatprep.subr.mxu0 0.0
    %1650 = vmatpush1.xpose.msra.mxu0 0.0
    %1651 = vmatprep.subr.mxu0 0.0
    %1652 = vmatpush1.xpose.msra.mxu0 0.0
    %1653 = vmatprep.subr.mxu0 0.0
    %1654 = vmatpush1.xpose.msra.mxu0 0.0
    %1655 = vmatprep.subr.mxu0 0.0
    %1656 = vmatpush1.xpose.msra.mxu0 0.0
    %1657 = vmatprep.subr.mxu0 0.0
    %1658 = vmatpush1.xpose.msra.mxu0 0.0
    %1659 = vmatprep.subr.mxu0 0.0
    %1660 = vmatpush1.xpose.msra.mxu0 %v1627
    %1661 = vmatprep.subr.mxu0 0.0
    %1662 = vmatpush2.xpose.msra.mxu0 0.0
    %1663 = vmatprep.subr.mxu0 0.0
    %1664 = vmatpush2.xpose.msra.mxu0 0.0
    %1665 = vmatprep.subr.mxu0 0.0
    %1666 = vmatpush2.xpose.msra.mxu0 0.0
    %1667 = vmatprep.subr.mxu0 0.0
    %1668 = vmatpush2.xpose.msra.mxu0 0.0
    %1669 = vmatprep.subr.mxu0 0.0
    %1670 = vmatpush2.xpose.msra.mxu0 0.0
    %1671 = vmatprep.subr.mxu0 0.0
    %1672 = vmatpush2.xpose.msra.mxu0 0.0
    %1673 = vmatprep.subr.mxu0 0.0
    %1674 = vmatpush2.xpose.msra.mxu0 0.0
    %1675 = vmatprep.subr.mxu0 0.0
    %1676 = vmatpush2.xpose.msra.mxu0 0.0
    %1677 = vmatprep.subr.mxu0 0.0
    %1678 = vmatpush2.xpose.msra.mxu0 0.0
    %1679 = vmatprep.subr.mxu0 0.0
    %1680 = vmatpush2.xpose.msra.mxu0 0.0
    %1681 = vmatprep.subr.mxu0 0.0
    %1682 = vmatpush2.xpose.msra.mxu0 0.0
    %1683 = vmatprep.subr.mxu0 0.0
    %1684 = vmatpush2.xpose.msra.mxu0 0.0
    %1685 = vmatprep.subr.mxu0 0.0
    %1686 = vmatpush2.xpose.msra.mxu0 0.0
    %1687 = vmatprep.subr.mxu0 0.0
    %1688 = vmatpush2.xpose.msra.mxu0 0.0
    %1689 = vmatprep.subr.mxu0 0.0
    %1690 = vmatpush2.xpose.msra.mxu0 0.0
    %1691 = vmatprep.subr.mxu0 0.0
    %1692 = vmatpush2.xpose.msra.mxu0 0.0
    %1693 = vmatprep.mubr.f32.mxu0 0.0
    %1694 = vmatmul.mubr.f32.gmra.mxu0 %v1625
    %v1695 = vpop.f32.mrf.mxu0
    %v1696 = vadd.f32 %v1144, %v1695
    %v1697 = vpop.f32.mrf.mxu0
    %1698 = vdwg.mxu0
    %v1699 = vsel %vm189, %v1696, -inf
    %1700 = vmax.xlane.f32.xlu0 %v1699
    %v1701 = vpop.xlane.xlu0 %1700
    %v1702 = vsub.f32 %v1696, %v1701
    %v1703 = vmul.f32 %v1702, 1.442695
    %v1704 = vpow.pop %v1703
    %v1705 = vsel %vm189, %v1704, 0.0
    %1706 = vadd.xlane.f32.xlu0 %v1705
    %v1707 = vpop.xlane.xlu0 %1706
    %v1708 = vrcp.pop %v1707
    %v1709 = vmul.f32 %v1704, %v1708
    %1710 = vrot.lane.b32.xlu0 %v177, 48
    %v1711 = vpop.permute.xlu0 %1710
    %v1714 = vsel %vm189, %v1709, 0
    %1716 = vmatprep.subr.mxu0 0.0
    %1717 = vmatpush1.msra.mxu0 0.0
    %1718 = vmatprep.subr.mxu0 0.0
    %1719 = vmatpush1.msra.mxu0 0.0
    %1720 = vmatprep.subr.mxu0 0.0
    %1721 = vmatpush1.msra.mxu0 0.0
    %1722 = vmatprep.subr.mxu0 0.0
    %1723 = vmatpush1.msra.mxu0 0.0
    %1724 = vmatprep.subr.mxu0 0.0
    %1725 = vmatpush1.msra.mxu0 0.0
    %1726 = vmatprep.subr.mxu0 0.0
    %1727 = vmatpush1.msra.mxu0 0.0
    %1728 = vmatprep.subr.mxu0 0.0
    %1729 = vmatpush1.msra.mxu0 0.0
    %1730 = vmatprep.subr.mxu0 0.0
    %1731 = vmatpush1.msra.mxu0 0.0
    %1732 = vmatprep.subr.mxu0 0.0
    %1733 = vmatpush1.msra.mxu0 0.0
    %1734 = vmatprep.subr.mxu0 0.0
    %1735 = vmatpush1.msra.mxu0 0.0
    %1736 = vmatprep.subr.mxu0 0.0
    %1737 = vmatpush1.msra.mxu0 0.0
    %1738 = vmatprep.subr.mxu0 0.0
    %1739 = vmatpush1.msra.mxu0 0.0
    %1740 = vmatprep.subr.mxu0 0.0
    %1741 = vmatpush1.msra.mxu0 0.0
    %1742 = vmatprep.subr.mxu0 0.0
    %1743 = vmatpush1.msra.mxu0 0.0
    %1744 = vmatprep.subr.mxu0 0.0
    %1745 = vmatpush1.msra.mxu0 0.0
    %1746 = vmatprep.subr.mxu0 0.0
    %1747 = vmatpush1.msra.mxu0 %v1711
    %1748 = vmatprep.subr.mxu0 0.0
    %1749 = vmatpush2.msra.mxu0 0.0
    %1750 = vmatprep.subr.mxu0 0.0
    %1751 = vmatpush2.msra.mxu0 0.0
    %1752 = vmatprep.subr.mxu0 0.0
    %1753 = vmatpush2.msra.mxu0 0.0
    %1754 = vmatprep.subr.mxu0 0.0
    %1755 = vmatpush2.msra.mxu0 0.0
    %1756 = vmatprep.subr.mxu0 0.0
    %1757 = vmatpush2.msra.mxu0 0.0
    %1758 = vmatprep.subr.mxu0 0.0
    %1759 = vmatpush2.msra.mxu0 0.0
    %1760 = vmatprep.subr.mxu0 0.0
    %1761 = vmatpush2.msra.mxu0 0.0
    %1762 = vmatprep.subr.mxu0 0.0
    %1763 = vmatpush2.msra.mxu0 0.0
    %1764 = vmatprep.subr.mxu0 0.0
    %1765 = vmatpush2.msra.mxu0 0.0
    %1766 = vmatprep.subr.mxu0 0.0
    %1767 = vmatpush2.msra.mxu0 0.0
    %1768 = vmatprep.subr.mxu0 0.0
    %1769 = vmatpush2.msra.mxu0 0.0
    %1770 = vmatprep.subr.mxu0 0.0
    %1771 = vmatpush2.msra.mxu0 0.0
    %1772 = vmatprep.subr.mxu0 0.0
    %1773 = vmatpush2.msra.mxu0 0.0
    %1774 = vmatprep.subr.mxu0 0.0
    %1775 = vmatpush2.msra.mxu0 0.0
    %1776 = vmatprep.subr.mxu0 0.0
    %1777 = vmatpush2.msra.mxu0 0.0
    %1778 = vmatprep.subr.mxu0 0.0
    %1779 = vmatpush2.msra.mxu0 0.0
    %1780 = vmatprep.mubr.f32.mxu0 0.0
    %1781 = vmatmul.mubr.f32.gmra.mxu0 %v1714
    %v1782 = vpop.f32.mrf.mxu0
    %v1783 = vadd.f32 0.0, %v1782
    %v1784 = vpop.f32.mrf.mxu0
    %1785 = vdwg.mxu0
    %v1787 = vsel %vm189, %v1783, 0
    %1789 = vmatprep.subr.mxu0 0.0
    %1790 = vmatpush1.msra.mxu0 0.0
    %1791 = vmatprep.subr.mxu0 0.0
    %1792 = vmatpush1.msra.mxu0 0.0
    %1793 = vmatprep.subr.mxu0 0.0
    %1794 = vmatpush1.msra.mxu0 0.0
    %1795 = vmatprep.subr.mxu0 0.0
    %1796 = vmatpush1.msra.mxu0 0.0
    %1797 = vmatprep.subr.mxu0 0.0
    %1798 = vmatpush1.msra.mxu0 0.0
    %1799 = vmatprep.subr.mxu0 0.0
    %1800 = vmatpush1.msra.mxu0 0.0
    %1801 = vmatprep.subr.mxu0 0.0
    %1802 = vmatpush1.msra.mxu0 0.0
    %1803 = vmatprep.subr.mxu0 0.0
    %1804 = vmatpush1.msra.mxu0 0.0
    %1805 = vmatprep.subr.mxu0 0.0
    %1806 = vmatpush1.msra.mxu0 0.0
    %1807 = vmatprep.subr.mxu0 0.0
    %1808 = vmatpush1.msra.mxu0 0.0
    %1809 = vmatprep.subr.mxu0 0.0
    %1810 = vmatpush1.msra.mxu0 0.0
    %1811 = vmatprep.subr.mxu0 0.0
    %1812 = vmatpush1.msra.mxu0 0.0
    %1813 = vmatprep.subr.mxu0 0.0
    %1814 = vmatpush1.msra.mxu0 0.0
    %1815 = vmatprep.subr.mxu0 0.0
    %1816 = vmatpush1.msra.mxu0 0.0
    %1817 = vmatprep.subr.mxu0 0.0
    %1818 = vmatpush1.msra.mxu0 0.0
    %1819 = vmatprep.subr.mxu0 0.0
    %1820 = vmatpush1.msra.mxu0 %v70
    %1821 = vmatprep.subr.mxu0 0.0
    %1822 = vmatpush2.msra.mxu0 0.0
    %1823 = vmatprep.subr.mxu0 0.0
    %1824 = vmatpush2.msra.mxu0 0.0
    %1825 = vmatprep.subr.mxu0 0.0
    %1826 = vmatpush2.msra.mxu0 0.0
    %1827 = vmatprep.subr.mxu0 0.0
    %1828 = vmatpush2.msra.mxu0 0.0
    %1829 = vmatprep.subr.mxu0 0.0
    %1830 = vmatpush2.msra.mxu0 0.0
    %1831 = vmatprep.subr.mxu0 0.0
    %1832 = vmatpush2.msra.mxu0 0.0
    %1833 = vmatprep.subr.mxu0 0.0
    %1834 = vmatpush2.msra.mxu0 0.0
    %1835 = vmatprep.subr.mxu0 0.0
    %1836 = vmatpush2.msra.mxu0 0.0
    %1837 = vmatprep.subr.mxu0 0.0
    %1838 = vmatpush2.msra.mxu0 0.0
    %1839 = vmatprep.subr.mxu0 0.0
    %1840 = vmatpush2.msra.mxu0 0.0
    %1841 = vmatprep.subr.mxu0 0.0
    %1842 = vmatpush2.msra.mxu0 0.0
    %1843 = vmatprep.subr.mxu0 0.0
    %1844 = vmatpush2.msra.mxu0 0.0
    %1845 = vmatprep.subr.mxu0 0.0
    %1846 = vmatpush2.msra.mxu0 0.0
    %1847 = vmatprep.subr.mxu0 0.0
    %1848 = vmatpush2.msra.mxu0 0.0
    %1849 = vmatprep.subr.mxu0 0.0
    %1850 = vmatpush2.msra.mxu0 0.0
    %1851 = vmatprep.subr.mxu0 0.0
    %1852 = vmatpush2.msra.mxu0 0.0
    %1853 = vmatprep.mubr.f32.mxu0 0.0
    %1854 = vmatmul.mubr.f32.gmra.mxu0 %v1787
    %v1855 = vpop.f32.mrf.mxu0
    %v1856 = vadd.f32 0.0, %v1855
    %v1857 = vpop.f32.mrf.mxu0
    %1858 = vdwg.mxu0
    %v1859 = vadd.f32 %v1618, %v1856
    %1860 = vrot.lane.b32.xlu0 %v177, 104
    %v1861 = vpop.permute.xlu0 %1860
    %1862 = vrot.lane.b32.xlu0 %v177, 72
    %v1863 = vpop.permute.xlu0 %1862
    %v1864 = vsel %vm189, %v1861, 0
    %v1866 = vsel %vm189, %v1863, 0
    %1868 = vmatprep.subr.mxu0 0.0
    %1869 = vmatpush1.xpose.msra.mxu0 0.0
    %1870 = vmatprep.subr.mxu0 0.0
    %1871 = vmatpush1.xpose.msra.mxu0 0.0
    %1872 = vmatprep.subr.mxu0 0.0
    %1873 = vmatpush1.xpose.msra.mxu0 0.0
    %1874 = vmatprep.subr.mxu0 0.0
    %1875 = vmatpush1.xpose.msra.mxu0 0.0
    %1876 = vmatprep.subr.mxu0 0.0
    %1877 = vmatpush1.xpose.msra.mxu0 0.0
    %1878 = vmatprep.subr.mxu0 0.0
    %1879 = vmatpush1.xpose.msra.mxu0 0.0
    %1880 = vmatprep.subr.mxu0 0.0
    %1881 = vmatpush1.xpose.msra.mxu0 0.0
    %1882 = vmatprep.subr.mxu0 0.0
    %1883 = vmatpush1.xpose.msra.mxu0 0.0
    %1884 = vmatprep.subr.mxu0 0.0
    %1885 = vmatpush1.xpose.msra.mxu0 0.0
    %1886 = vmatprep.subr.mxu0 0.0
    %1887 = vmatpush1.xpose.msra.mxu0 0.0
    %1888 = vmatprep.subr.mxu0 0.0
    %1889 = vmatpush1.xpose.msra.mxu0 0.0
    %1890 = vmatprep.subr.mxu0 0.0
    %1891 = vmatpush1.xpose.msra.mxu0 0.0
    %1892 = vmatprep.subr.mxu0 0.0
    %1893 = vmatpush1.xpose.msra.mxu0 0.0
    %1894 = vmatprep.subr.mxu0 0.0
    %1895 = vmatpush1.xpose.msra.mxu0 0.0
    %1896 = vmatprep.subr.mxu0 0.0
    %1897 = vmatpush1.xpose.msra.mxu0 0.0
    %1898 = vmatprep.subr.mxu0 0.0
    %1899 = vmatpush1.xpose.msra.mxu0 %v1866
    %1900 = vmatprep.subr.mxu0 0.0
    %1901 = vmatpush2.xpose.msra.mxu0 0.0
    %1902 = vmatprep.subr.mxu0 0.0
    %1903 = vmatpush2.xpose.msra.mxu0 0.0
    %1904 = vmatprep.subr.mxu0 0.0
    %1905 = vmatpush2.xpose.msra.mxu0 0.0
    %1906 = vmatprep.subr.mxu0 0.0
    %1907 = vmatpush2.xpose.msra.mxu0 0.0
    %1908 = vmatprep.subr.mxu0 0.0
    %1909 = vmatpush2.xpose.msra.mxu0 0.0
    %1910 = vmatprep.subr.mxu0 0.0
    %1911 = vmatpush2.xpose.msra.mxu0 0.0
    %1912 = vmatprep.subr.mxu0 0.0
    %1913 = vmatpush2.xpose.msra.mxu0 0.0
    %1914 = vmatprep.subr.mxu0 0.0
    %1915 = vmatpush2.xpose.msra.mxu0 0.0
    %1916 = vmatprep.subr.mxu0 0.0
    %1917 = vmatpush2.xpose.msra.mxu0 0.0
    %1918 = vmatprep.subr.mxu0 0.0
    %1919 = vmatpush2.xpose.msra.mxu0 0.0
    %1920 = vmatprep.subr.mxu0 0.0
    %1921 = vmatpush2.xpose.msra.mxu0 0.0
    %1922 = vmatprep.subr.mxu0 0.0
    %1923 = vmatpush2.xpose.msra.mxu0 0.0
    %1924 = vmatprep.subr.mxu0 0.0
    %1925 = vmatpush2.xpose.msra.mxu0 0.0
    %1926 = vmatprep.subr.mxu0 0.0
    %1927 = vmatpush2.xpose.msra.mxu0 0.0
    %1928 = vmatprep.subr.mxu0 0.0
    %1929 = vmatpush2.xpose.msra.mxu0 0.0
    %1930 = vmatprep.subr.mxu0 0.0
    %1931 = vmatpush2.xpose.msra.mxu0 0.0
    %1932 = vmatprep.mubr.f32.mxu0 0.0
    %1933 = vmatmul.mubr.f32.gmra.mxu0 %v1864
    %v1934 = vpop.f32.mrf.mxu0
    %v1935 = vadd.f32 %v1144, %v1934
    %v1936 = vpop.f32.mrf.mxu0
    %1937 = vdwg.mxu0
    %v1938 = vsel %vm189, %v1935, -inf
    %1939 = vmax.xlane.f32.xlu0 %v1938
    %v1940 = vpop.xlane.xlu0 %1939
    %v1941 = vsub.f32 %v1935, %v1940
    %v1942 = vmul.f32 %v1941, 1.442695
    %v1943 = vpow.pop %v1942
    %v1944 = vsel %vm189, %v1943, 0.0
    %1945 = vadd.xlane.f32.xlu0 %v1944
    %v1946 = vpop.xlane.xlu0 %1945
    %v1947 = vrcp.pop %v1946
    %v1948 = vmul.f32 %v1943, %v1947
    %1949 = vrot.lane.b32.xlu0 %v177, 40
    %v1950 = vpop.permute.xlu0 %1949
    %v1953 = vsel %vm189, %v1948, 0
    %1955 = vmatprep.subr.mxu0 0.0
    %1956 = vmatpush1.msra.mxu0 0.0
    %1957 = vmatprep.subr.mxu0 0.0
    %1958 = vmatpush1.msra.mxu0 0.0
    %1959 = vmatprep.subr.mxu0 0.0
    %1960 = vmatpush1.msra.mxu0 0.0
    %1961 = vmatprep.subr.mxu0 0.0
    %1962 = vmatpush1.msra.mxu0 0.0
    %1963 = vmatprep.subr.mxu0 0.0
    %1964 = vmatpush1.msra.mxu0 0.0
    %1965 = vmatprep.subr.mxu0 0.0
    %1966 = vmatpush1.msra.mxu0 0.0
    %1967 = vmatprep.subr.mxu0 0.0
    %1968 = vmatpush1.msra.mxu0 0.0
    %1969 = vmatprep.subr.mxu0 0.0
    %1970 = vmatpush1.msra.mxu0 0.0
    %1971 = vmatprep.subr.mxu0 0.0
    %1972 = vmatpush1.msra.mxu0 0.0
    %1973 = vmatprep.subr.mxu0 0.0
    %1974 = vmatpush1.msra.mxu0 0.0
    %1975 = vmatprep.subr.mxu0 0.0
    %1976 = vmatpush1.msra.mxu0 0.0
    %1977 = vmatprep.subr.mxu0 0.0
    %1978 = vmatpush1.msra.mxu0 0.0
    %1979 = vmatprep.subr.mxu0 0.0
    %1980 = vmatpush1.msra.mxu0 0.0
    %1981 = vmatprep.subr.mxu0 0.0
    %1982 = vmatpush1.msra.mxu0 0.0
    %1983 = vmatprep.subr.mxu0 0.0
    %1984 = vmatpush1.msra.mxu0 0.0
    %1985 = vmatprep.subr.mxu0 0.0
    %1986 = vmatpush1.msra.mxu0 %v1950
    %1987 = vmatprep.subr.mxu0 0.0
    %1988 = vmatpush2.msra.mxu0 0.0
    %1989 = vmatprep.subr.mxu0 0.0
    %1990 = vmatpush2.msra.mxu0 0.0
    %1991 = vmatprep.subr.mxu0 0.0
    %1992 = vmatpush2.msra.mxu0 0.0
    %1993 = vmatprep.subr.mxu0 0.0
    %1994 = vmatpush2.msra.mxu0 0.0
    %1995 = vmatprep.subr.mxu0 0.0
    %1996 = vmatpush2.msra.mxu0 0.0
    %1997 = vmatprep.subr.mxu0 0.0
    %1998 = vmatpush2.msra.mxu0 0.0
    %1999 = vmatprep.subr.mxu0 0.0
    %2000 = vmatpush2.msra.mxu0 0.0
    %2001 = vmatprep.subr.mxu0 0.0
    %2002 = vmatpush2.msra.mxu0 0.0
    %2003 = vmatprep.subr.mxu0 0.0
    %2004 = vmatpush2.msra.mxu0 0.0
    %2005 = vmatprep.subr.mxu0 0.0
    %2006 = vmatpush2.msra.mxu0 0.0
    %2007 = vmatprep.subr.mxu0 0.0
    %2008 = vmatpush2.msra.mxu0 0.0
    %2009 = vmatprep.subr.mxu0 0.0
    %2010 = vmatpush2.msra.mxu0 0.0
    %2011 = vmatprep.subr.mxu0 0.0
    %2012 = vmatpush2.msra.mxu0 0.0
    %2013 = vmatprep.subr.mxu0 0.0
    %2014 = vmatpush2.msra.mxu0 0.0
    %2015 = vmatprep.subr.mxu0 0.0
    %2016 = vmatpush2.msra.mxu0 0.0
    %2017 = vmatprep.subr.mxu0 0.0
    %2018 = vmatpush2.msra.mxu0 0.0
    %2019 = vmatprep.mubr.f32.mxu0 0.0
    %2020 = vmatmul.mubr.f32.gmra.mxu0 %v1953
    %v2021 = vpop.f32.mrf.mxu0
    %v2022 = vadd.f32 0.0, %v2021
    %v2023 = vpop.f32.mrf.mxu0
    %2024 = vdwg.mxu0
    %v2026 = vsel %vm189, %v2022, 0
    %2028 = vmatprep.subr.mxu0 0.0
    %2029 = vmatpush1.msra.mxu0 0.0
    %2030 = vmatprep.subr.mxu0 0.0
    %2031 = vmatpush1.msra.mxu0 0.0
    %2032 = vmatprep.subr.mxu0 0.0
    %2033 = vmatpush1.msra.mxu0 0.0
    %2034 = vmatprep.subr.mxu0 0.0
    %2035 = vmatpush1.msra.mxu0 0.0
    %2036 = vmatprep.subr.mxu0 0.0
    %2037 = vmatpush1.msra.mxu0 0.0
    %2038 = vmatprep.subr.mxu0 0.0
    %2039 = vmatpush1.msra.mxu0 0.0
    %2040 = vmatprep.subr.mxu0 0.0
    %2041 = vmatpush1.msra.mxu0 0.0
    %2042 = vmatprep.subr.mxu0 0.0
    %2043 = vmatpush1.msra.mxu0 0.0
    %2044 = vmatprep.subr.mxu0 0.0
    %2045 = vmatpush1.msra.mxu0 0.0
    %2046 = vmatprep.subr.mxu0 0.0
    %2047 = vmatpush1.msra.mxu0 0.0
    %2048 = vmatprep.subr.mxu0 0.0
    %2049 = vmatpush1.msra.mxu0 0.0
    %2050 = vmatprep.subr.mxu0 0.0
    %2051 = vmatpush1.msra.mxu0 0.0
    %2052 = vmatprep.subr.mxu0 0.0
    %2053 = vmatpush1.msra.mxu0 0.0
    %2054 = vmatprep.subr.mxu0 0.0
    %2055 = vmatpush1.msra.mxu0 0.0
    %2056 = vmatprep.subr.mxu0 0.0
    %2057 = vmatpush1.msra.mxu0 0.0
    %2058 = vmatprep.subr.mxu0 0.0
    %2059 = vmatpush1.msra.mxu0 %v71
    %2060 = vmatprep.subr.mxu0 0.0
    %2061 = vmatpush2.msra.mxu0 0.0
    %2062 = vmatprep.subr.mxu0 0.0
    %2063 = vmatpush2.msra.mxu0 0.0
    %2064 = vmatprep.subr.mxu0 0.0
    %2065 = vmatpush2.msra.mxu0 0.0
    %2066 = vmatprep.subr.mxu0 0.0
    %2067 = vmatpush2.msra.mxu0 0.0
    %2068 = vmatprep.subr.mxu0 0.0
    %2069 = vmatpush2.msra.mxu0 0.0
    %2070 = vmatprep.subr.mxu0 0.0
    %2071 = vmatpush2.msra.mxu0 0.0
    %2072 = vmatprep.subr.mxu0 0.0
    %2073 = vmatpush2.msra.mxu0 0.0
    %2074 = vmatprep.subr.mxu0 0.0
    %2075 = vmatpush2.msra.mxu0 0.0
    %2076 = vmatprep.subr.mxu0 0.0
    %2077 = vmatpush2.msra.mxu0 0.0
    %2078 = vmatprep.subr.mxu0 0.0
    %2079 = vmatpush2.msra.mxu0 0.0
    %2080 = vmatprep.subr.mxu0 0.0
    %2081 = vmatpush2.msra.mxu0 0.0
    %2082 = vmatprep.subr.mxu0 0.0
    %2083 = vmatpush2.msra.mxu0 0.0
    %2084 = vmatprep.subr.mxu0 0.0
    %2085 = vmatpush2.msra.mxu0 0.0
    %2086 = vmatprep.subr.mxu0 0.0
    %2087 = vmatpush2.msra.mxu0 0.0
    %2088 = vmatprep.subr.mxu0 0.0
    %2089 = vmatpush2.msra.mxu0 0.0
    %2090 = vmatprep.subr.mxu0 0.0
    %2091 = vmatpush2.msra.mxu0 0.0
    %2092 = vmatprep.mubr.f32.mxu0 0.0
    %2093 = vmatmul.mubr.f32.gmra.mxu0 %v2026
    %v2094 = vpop.f32.mrf.mxu0
    %v2095 = vadd.f32 0.0, %v2094
    %v2096 = vpop.f32.mrf.mxu0
    %2097 = vdwg.mxu0
    %v2098 = vadd.f32 %v1859, %v2095
    %v2099 = vadd.f32 %v61, %v1139
    %v2100 = vadd.f32 %v62, %v2098
    %v2101 = vlaneseq
    %v2102 = vshrl.u32 %v2101, 7
    %v2103 = vsub.s32 0, %v2102
    %v2104 = vrot.slane %v85, %v2103
    %v2105 = vadd.f32 %v2099, %v2104
    %v2106 = vadd.f32 %v2100, %v2104
    %v2107 = vsel %vm98, %v2105, 0.0
    %2108 = vadd.xlane.f32.xlu0 %v2107
    %v2109 = vpop.xlane.xlu0 %2108
    %v2110 = vsel %vm98, %v2106, 0.0
    %2111 = vadd.xlane.f32.xlu0 %v2110
    %v2112 = vpop.xlane.xlu0 %2111
    %v2113 = vrcp.pop 32.0
    %v2114 = vmul.f32 %v2109, %v2113
    %v2115 = vmul.f32 %v2112, %v2113
    %v2116 = vsub.f32 %v2105, %v2114
    %v2117 = vsub.f32 %v2106, %v2115
    %v2118 = vmul.f32 %v2116, %v2116
    %v2119 = vmul.f32 %v2117, %v2117
    %v2120 = vsel %vm98, %v2118, 0.0
    %2121 = vadd.xlane.f32.xlu0 %v2120
    %v2122 = vpop.xlane.xlu0 %2121
    %v2123 = vsel %vm98, %v2119, 0.0
    %2124 = vadd.xlane.f32.xlu0 %v2123
    %v2125 = vpop.xlane.xlu0 %2124
    %v2126 = vmul.f32 %v2122, %v2113
    %v2127 = vmul.f32 %v2125, %v2113
    %v2128 = vadd.f32 %v2126, 1e-05
    %v2129 = vadd.f32 %v2127, 1e-05
    %v2130 = vrsqrt.pop %v2128
    %v2131 = vrsqrt.pop %v2129
    %v2132 = vmul.f32 %v2116, %v2130
    %v2133 = vmul.f32 %v2117, %v2131
    %v2134 = vlaneseq
    %v2135 = vshrl.u32 %v2134, 7
    %v2136 = vsub.s32 1, %v2135
    %v2137 = vrot.slane %v85, %v2136
    %v2138 = vmul.f32 %v2132, %v2137
    %v2139 = vmul.f32 %v2133, %v2137
    %v2140 = vlaneseq
    %v2141 = vshrl.u32 %v2140, 7
    %v2142 = vsub.s32 2, %v2141
    %v2143 = vrot.slane %v85, %v2142
    %v2144 = vadd.f32 %v2138, %v2143
    %v2145 = vadd.f32 %v2139, %v2143
    %v2147 = vlaneseq
    %v2148 = vshrl.u32 %v2147, 7
    %v2149 = vsub.s32 0, %v2148
    %v2150 = vrot.slane %v76, %v2149
    %v2153 = vsel %vm98, %v2144, 0
    %v2156 = vsel %vm98, %v2145, 0
    %2158 = vmatprep.subr.mxu0 0.0
    %2159 = vmatpush1.msra.mxu0 0.0
    %2160 = vmatprep.subr.mxu0 0.0
    %2161 = vmatpush1.msra.mxu0 0.0
    %2162 = vmatprep.subr.mxu0 0.0
    %2163 = vmatpush1.msra.mxu0 0.0
    %2164 = vmatprep.subr.mxu0 0.0
    %2165 = vmatpush1.msra.mxu0 0.0
    %2166 = vmatprep.subr.mxu0 0.0
    %2167 = vmatpush1.msra.mxu0 0.0
    %2168 = vmatprep.subr.mxu0 0.0
    %2169 = vmatpush1.msra.mxu0 0.0
    %2170 = vmatprep.subr.mxu0 0.0
    %2171 = vmatpush1.msra.mxu0 0.0
    %2172 = vmatprep.subr.mxu0 0.0
    %2173 = vmatpush1.msra.mxu0 0.0
    %2174 = vmatprep.subr.mxu0 0.0
    %2175 = vmatpush1.msra.mxu0 0.0
    %2176 = vmatprep.subr.mxu0 0.0
    %2177 = vmatpush1.msra.mxu0 0.0
    %2178 = vmatprep.subr.mxu0 0.0
    %2179 = vmatpush1.msra.mxu0 0.0
    %2180 = vmatprep.subr.mxu0 0.0
    %2181 = vmatpush1.msra.mxu0 0.0
    %2182 = vmatprep.subr.mxu0 0.0
    %2183 = vmatpush1.msra.mxu0 %v75
    %2184 = vmatprep.subr.mxu0 0.0
    %2185 = vmatpush1.msra.mxu0 %v74
    %2186 = vmatprep.subr.mxu0 0.0
    %2187 = vmatpush1.msra.mxu0 %v73
    %2188 = vmatprep.subr.mxu0 0.0
    %2189 = vmatpush1.msra.mxu0 %v72
    %2190 = vmatprep.subr.mxu0 0.0
    %2191 = vmatpush2.msra.mxu0 0.0
    %2192 = vmatprep.subr.mxu0 0.0
    %2193 = vmatpush2.msra.mxu0 0.0
    %2194 = vmatprep.subr.mxu0 0.0
    %2195 = vmatpush2.msra.mxu0 0.0
    %2196 = vmatprep.subr.mxu0 0.0
    %2197 = vmatpush2.msra.mxu0 0.0
    %2198 = vmatprep.subr.mxu0 0.0
    %2199 = vmatpush2.msra.mxu0 0.0
    %2200 = vmatprep.subr.mxu0 0.0
    %2201 = vmatpush2.msra.mxu0 0.0
    %2202 = vmatprep.subr.mxu0 0.0
    %2203 = vmatpush2.msra.mxu0 0.0
    %2204 = vmatprep.subr.mxu0 0.0
    %2205 = vmatpush2.msra.mxu0 0.0
    %2206 = vmatprep.subr.mxu0 0.0
    %2207 = vmatpush2.msra.mxu0 0.0
    %2208 = vmatprep.subr.mxu0 0.0
    %2209 = vmatpush2.msra.mxu0 0.0
    %2210 = vmatprep.subr.mxu0 0.0
    %2211 = vmatpush2.msra.mxu0 0.0
    %2212 = vmatprep.subr.mxu0 0.0
    %2213 = vmatpush2.msra.mxu0 0.0
    %2214 = vmatprep.subr.mxu0 0.0
    %2215 = vmatpush2.msra.mxu0 0.0
    %2216 = vmatprep.subr.mxu0 0.0
    %2217 = vmatpush2.msra.mxu0 0.0
    %2218 = vmatprep.subr.mxu0 0.0
    %2219 = vmatpush2.msra.mxu0 0.0
    %2220 = vmatprep.subr.mxu0 0.0
    %2221 = vmatpush2.msra.mxu0 0.0
    %2222 = vmatprep.mubr.f32.mxu0 0.0
    %2223 = vmatmul.mubr.f32.gmra.mxu0 %v2153
    %v2224 = vpop.f32.mrf.mxu0
    %v2225 = vadd.f32 %v2150, %v2224
    %v2226 = vpop.f32.mrf.mxu0
    %2227 = vmatprep.mubr.f32.mxu0 0.0
    %2228 = vmatmul.mubr.f32.gmra.mxu0 %v2156
    %v2229 = vpop.f32.mrf.mxu0
    %v2230 = vadd.f32 %v2150, %v2229
    %v2231 = vpop.f32.mrf.mxu0
    %2232 = vdwg.mxu0
    %v2233 = vmax.f32 %v2225, 0.0
    %v2234 = vmax.f32 %v2230, 0.0
    %v2235 = vlaneseq
    %v2236 = vshrl.u32 %v2235, 7
    %v2237 = vsub.s32 3, %v2236
    %v2238 = vrot.slane %v85, %v2237
    %vm2239 = vcmask 523264
    %v2241 = vsel %vm2239, %v2233, 0
    %v2244 = vsel %vm2239, %v2234, 0
    %2246 = vmatprep.subr.mxu0 0.0
    %2247 = vmatpush1.msra.mxu0 0.0
    %2248 = vmatprep.subr.mxu0 0.0
    %2249 = vmatpush1.msra.mxu0 0.0
    %2250 = vmatprep.subr.mxu0 0.0
    %2251 = vmatpush1.msra.mxu0 0.0
    %2252 = vmatprep.subr.mxu0 0.0
    %2253 = vmatpush1.msra.mxu0 0.0
    %2254 = vmatprep.subr.mxu0 0.0
    %2255 = vmatpush1.msra.mxu0 0.0
    %2256 = vmatprep.subr.mxu0 0.0
    %2257 = vmatpush1.msra.mxu0 0.0
    %2258 = vmatprep.subr.mxu0 0.0
    %2259 = vmatpush1.msra.mxu0 0.0
    %2260 = vmatprep.subr.mxu0 0.0
    %2261 = vmatpush1.msra.mxu0 0.0
    %2262 = vmatprep.subr.mxu0 0.0
    %2263 = vmatpush1.msra.mxu0 %v84
    %2264 = vmatprep.subr.mxu0 0.0
    %2265 = vmatpush1.msra.mxu0 %v83
    %2266 = vmatprep.subr.mxu0 0.0
    %2267 = vmatpush1.msra.mxu0 %v82
    %2268 = vmatprep.subr.mxu0 0.0
    %2269 = vmatpush1.msra.mxu0 %v81
    %2270 = vmatprep.subr.mxu0 0.0
    %2271 = vmatpush1.msra.mxu0 %v80
    %2272 = vmatprep.subr.mxu0 0.0
    %2273 = vmatpush1.msra.mxu0 %v79
    %2274 = vmatprep.subr.mxu0 0.0
    %2275 = vmatpush1.msra.mxu0 %v78
    %2276 = vmatprep.subr.mxu0 0.0
    %2277 = vmatpush1.msra.mxu0 %v77
    %2278 = vmatprep.subr.mxu0 0.0
    %2279 = vmatpush2.msra.mxu0 0.0
    %2280 = vmatprep.subr.mxu0 0.0
    %2281 = vmatpush2.msra.mxu0 0.0
    %2282 = vmatprep.subr.mxu0 0.0
    %2283 = vmatpush2.msra.mxu0 0.0
    %2284 = vmatprep.subr.mxu0 0.0
    %2285 = vmatpush2.msra.mxu0 0.0
    %2286 = vmatprep.subr.mxu0 0.0
    %2287 = vmatpush2.msra.mxu0 0.0
    %2288 = vmatprep.subr.mxu0 0.0
    %2289 = vmatpush2.msra.mxu0 0.0
    %2290 = vmatprep.subr.mxu0 0.0
    %2291 = vmatpush2.msra.mxu0 0.0
    %2292 = vmatprep.subr.mxu0 0.0
    %2293 = vmatpush2.msra.mxu0 0.0
    %2294 = vmatprep.subr.mxu0 0.0
    %2295 = vmatpush2.msra.mxu0 0.0
    %2296 = vmatprep.subr.mxu0 0.0
    %2297 = vmatpush2.msra.mxu0 0.0
    %2298 = vmatprep.subr.mxu0 0.0
    %2299 = vmatpush2.msra.mxu0 0.0
    %2300 = vmatprep.subr.mxu0 0.0
    %2301 = vmatpush2.msra.mxu0 0.0
    %2302 = vmatprep.subr.mxu0 0.0
    %2303 = vmatpush2.msra.mxu0 0.0
    %2304 = vmatprep.subr.mxu0 0.0
    %2305 = vmatpush2.msra.mxu0 0.0
    %2306 = vmatprep.subr.mxu0 0.0
    %2307 = vmatpush2.msra.mxu0 0.0
    %2308 = vmatprep.subr.mxu0 0.0
    %2309 = vmatpush2.msra.mxu0 0.0
    %2310 = vmatprep.mubr.f32.mxu0 0.0
    %2311 = vmatmul.mubr.f32.gmra.mxu0 %v2241
    %v2312 = vpop.f32.mrf.mxu0
    %v2313 = vadd.f32 %v2238, %v2312
    %v2314 = vpop.f32.mrf.mxu0
    %2315 = vmatprep.mubr.f32.mxu0 0.0
    %2316 = vmatmul.mubr.f32.gmra.mxu0 %v2244
    %v2317 = vpop.f32.mrf.mxu0
    %v2318 = vadd.f32 %v2238, %v2317
    %v2319 = vpop.f32.mrf.mxu0
    %2320 = vdwg.mxu0
    %v2321 = vadd.f32 %v2144, %v2313
    %v2322 = vadd.f32 %v2145, %v2318
    %v2323 = vsel %vm98, %v2321, 0.0
    %2324 = vadd.xlane.f32.xlu0 %v2323
    %v2325 = vpop.xlane.xlu0 %2324
    %v2326 = vsel %vm98, %v2322, 0.0
    %2327 = vadd.xlane.f32.xlu0 %v2326
    %v2328 = vpop.xlane.xlu0 %2327
    %v2329 = vmul.f32 %v2325, %v2113
    %v2330 = vmul.f32 %v2328, %v2113
    %v2331 = vsub.f32 %v2321, %v2329
    %v2332 = vsub.f32 %v2322, %v2330
    %v2333 = vmul.f32 %v2331, %v2331
    %v2334 = vmul.f32 %v2332, %v2332
    %v2335 = vsel %vm98, %v2333, 0.0
    %2336 = vadd.xlane.f32.xlu0 %v2335
    %v2337 = vpop.xlane.xlu0 %2336
    %v2338 = vsel %vm98, %v2334, 0.0
    %2339 = vadd.xlane.f32.xlu0 %v2338
    %v2340 = vpop.xlane.xlu0 %2339
    %v2341 = vmul.f32 %v2337, %v2113
    %v2342 = vmul.f32 %v2340, %v2113
    %v2343 = vadd.f32 %v2341, 1e-05
    %v2344 = vadd.f32 %v2342, 1e-05
    %v2345 = vrsqrt.pop %v2343
    %v2346 = vrsqrt.pop %v2344
    %v2347 = vmul.f32 %v2331, %v2345
    %v2348 = vmul.f32 %v2332, %v2346
    %v2349 = vlaneseq
    %v2350 = vshrl.u32 %v2349, 7
    %v2351 = vsub.s32 4, %v2350
    %v2352 = vrot.slane %v85, %v2351
    %v2353 = vmul.f32 %v2347, %v2352
    %v2354 = vmul.f32 %v2348, %v2352
    %v2355 = vlaneseq
    %v2356 = vshrl.u32 %v2355, 7
    %v2357 = vsub.s32 5, %v2356
    %v2358 = vrot.slane %v85, %v2357
    %v2359 = vadd.f32 %v2353, %v2358
    %v2360 = vadd.f32 %v2354, %v2358
    %v2362 = vsel %vm98, %v2359, 0
    %v2365 = vsel %vm98, %v2360, 0
    %2367 = vmatprep.subr.mxu0 0.0
    %2368 = vmatpush1.msra.mxu0 0.0
    %2369 = vmatprep.subr.mxu0 0.0
    %2370 = vmatpush1.msra.mxu0 0.0
    %2371 = vmatprep.subr.mxu0 0.0
    %2372 = vmatpush1.msra.mxu0 0.0
    %2373 = vmatprep.subr.mxu0 0.0
    %2374 = vmatpush1.msra.mxu0 0.0
    %2375 = vmatprep.subr.mxu0 0.0
    %2376 = vmatpush1.msra.mxu0 0.0
    %2377 = vmatprep.subr.mxu0 0.0
    %2378 = vmatpush1.msra.mxu0 0.0
    %2379 = vmatprep.subr.mxu0 0.0
    %2380 = vmatpush1.msra.mxu0 0.0
    %2381 = vmatprep.subr.mxu0 0.0
    %2382 = vmatpush1.msra.mxu0 0.0
    %2383 = vmatprep.subr.mxu0 0.0
    %2384 = vmatpush1.msra.mxu0 0.0
    %2385 = vmatprep.subr.mxu0 0.0
    %2386 = vmatpush1.msra.mxu0 0.0
    %2387 = vmatprep.subr.mxu0 0.0
    %2388 = vmatpush1.msra.mxu0 0.0
    %2389 = vmatprep.subr.mxu0 0.0
    %2390 = vmatpush1.msra.mxu0 0.0
    %2391 = vmatprep.subr.mxu0 0.0
    %2392 = vmatpush1.msra.mxu0 %v66
    %2393 = vmatprep.subr.mxu0 0.0
    %2394 = vmatpush1.msra.mxu0 %v65
    %2395 = vmatprep.subr.mxu0 0.0
    %2396 = vmatpush1.msra.mxu0 %v64
    %2397 = vmatprep.subr.mxu0 0.0
    %2398 = vmatpush1.msra.mxu0 %v63
    %2399 = vmatprep.subr.mxu0 0.0
    %2400 = vmatpush2.msra.mxu0 0.0
    %2401 = vmatprep.subr.mxu0 0.0
    %2402 = vmatpush2.msra.mxu0 0.0
    %2403 = vmatprep.subr.mxu0 0.0
    %2404 = vmatpush2.msra.mxu0 0.0
    %2405 = vmatprep.subr.mxu0 0.0
    %2406 = vmatpush2.msra.mxu0 0.0
    %2407 = vmatprep.subr.mxu0 0.0
    %2408 = vmatpush2.msra.mxu0 0.0
    %2409 = vmatprep.subr.mxu0 0.0
    %2410 = vmatpush2.msra.mxu0 0.0
    %2411 = vmatprep.subr.mxu0 0.0
    %2412 = vmatpush2.msra.mxu0 0.0
    %2413 = vmatprep.subr.mxu0 0.0
    %2414 = vmatpush2.msra.mxu0 0.0
    %2415 = vmatprep.subr.mxu0 0.0
    %2416 = vmatpush2.msra.mxu0 0.0
    %2417 = vmatprep.subr.mxu0 0.0
    %2418 = vmatpush2.msra.mxu0 0.0
    %2419 = vmatprep.subr.mxu0 0.0
    %2420 = vmatpush2.msra.mxu0 0.0
    %2421 = vmatprep.subr.mxu0 0.0
    %2422 = vmatpush2.msra.mxu0 0.0
    %2423 = vmatprep.subr.mxu0 0.0
    %2424 = vmatpush2.msra.mxu0 0.0
    %2425 = vmatprep.subr.mxu0 0.0
    %2426 = vmatpush2.msra.mxu0 0.0
    %2427 = vmatprep.subr.mxu0 0.0
    %2428 = vmatpush2.msra.mxu0 0.0
    %2429 = vmatprep.subr.mxu0 0.0
    %2430 = vmatpush2.msra.mxu0 0.0
    %2431 = vmatprep.mubr.f32.mxu0 0.0
    %2432 = vmatmul.mubr.f32.gmra.mxu0 %v2362
    %v2433 = vpop.f32.mrf.mxu0
    %v2434 = vadd.f32 %v96, %v2433
    %v2435 = vpop.f32.mrf.mxu0
    %2436 = vmatprep.mubr.f32.mxu0 0.0
    %2437 = vmatmul.mubr.f32.gmra.mxu0 %v2365
    %v2438 = vpop.f32.mrf.mxu0
    %v2439 = vadd.f32 %v96, %v2438
    %v2440 = vpop.f32.mrf.mxu0
    %2441 = vdwg.mxu0
    %2443 = vrot.lane.b32.xlu0 %v2434, 96
    %v2444 = vpop.permute.xlu0 %2443
    %v2445 = vsel %vm189, %v2434, 0
    %v2447 = vsel %vm189, %v2444, 0
    %2449 = vmatprep.subr.mxu0 0.0
    %2450 = vmatpush1.xpose.msra.mxu0 0.0
    %2451 = vmatprep.subr.mxu0 0.0
    %2452 = vmatpush1.xpose.msra.mxu0 0.0
    %2453 = vmatprep.subr.mxu0 0.0
    %2454 = vmatpush1.xpose.msra.mxu0 0.0
    %2455 = vmatprep.subr.mxu0 0.0
    %2456 = vmatpush1.xpose.msra.mxu0 0.0
    %2457 = vmatprep.subr.mxu0 0.0
    %2458 = vmatpush1.xpose.msra.mxu0 0.0
    %2459 = vmatprep.subr.mxu0 0.0
    %2460 = vmatpush1.xpose.msra.mxu0 0.0
    %2461 = vmatprep.subr.mxu0 0.0
    %2462 = vmatpush1.xpose.msra.mxu0 0.0
    %2463 = vmatprep.subr.mxu0 0.0
    %2464 = vmatpush1.xpose.msra.mxu0 0.0
    %2465 = vmatprep.subr.mxu0 0.0
    %2466 = vmatpush1.xpose.msra.mxu0 0.0
    %2467 = vmatprep.subr.mxu0 0.0
    %2468 = vmatpush1.xpose.msra.mxu0 0.0
    %2469 = vmatprep.subr.mxu0 0.0
    %2470 = vmatpush1.xpose.msra.mxu0 0.0
    %2471 = vmatprep.subr.mxu0 0.0
    %2472 = vmatpush1.xpose.msra.mxu0 0.0
    %2473 = vmatprep.subr.mxu0 0.0
    %2474 = vmatpush1.xpose.msra.mxu0 0.0
    %2475 = vmatprep.subr.mxu0 0.0
    %2476 = vmatpush1.xpose.msra.mxu0 0.0
    %2477 = vmatprep.subr.mxu0 0.0
    %2478 = vmatpush1.xpose.msra.mxu0 0.0
    %2479 = vmatprep.subr.mxu0 0.0
    %2480 = vmatpush1.xpose.msra.mxu0 %v2447
    %2481 = vmatprep.subr.mxu0 0.0
    %2482 = vmatpush2.xpose.msra.mxu0 0.0
    %2483 = vmatprep.subr.mxu0 0.0
    %2484 = vmatpush2.xpose.msra.mxu0 0.0
    %2485 = vmatprep.subr.mxu0 0.0
    %2486 = vmatpush2.xpose.msra.mxu0 0.0
    %2487 = vmatprep.subr.mxu0 0.0
    %2488 = vmatpush2.xpose.msra.mxu0 0.0
    %2489 = vmatprep.subr.mxu0 0.0
    %2490 = vmatpush2.xpose.msra.mxu0 0.0
    %2491 = vmatprep.subr.mxu0 0.0
    %2492 = vmatpush2.xpose.msra.mxu0 0.0
    %2493 = vmatprep.subr.mxu0 0.0
    %2494 = vmatpush2.xpose.msra.mxu0 0.0
    %2495 = vmatprep.subr.mxu0 0.0
    %2496 = vmatpush2.xpose.msra.mxu0 0.0
    %2497 = vmatprep.subr.mxu0 0.0
    %2498 = vmatpush2.xpose.msra.mxu0 0.0
    %2499 = vmatprep.subr.mxu0 0.0
    %2500 = vmatpush2.xpose.msra.mxu0 0.0
    %2501 = vmatprep.subr.mxu0 0.0
    %2502 = vmatpush2.xpose.msra.mxu0 0.0
    %2503 = vmatprep.subr.mxu0 0.0
    %2504 = vmatpush2.xpose.msra.mxu0 0.0
    %2505 = vmatprep.subr.mxu0 0.0
    %2506 = vmatpush2.xpose.msra.mxu0 0.0
    %2507 = vmatprep.subr.mxu0 0.0
    %2508 = vmatpush2.xpose.msra.mxu0 0.0
    %2509 = vmatprep.subr.mxu0 0.0
    %2510 = vmatpush2.xpose.msra.mxu0 0.0
    %2511 = vmatprep.subr.mxu0 0.0
    %2512 = vmatpush2.xpose.msra.mxu0 0.0
    %2513 = vmatprep.mubr.f32.mxu0 0.0
    %2514 = vmatmul.mubr.f32.gmra.mxu0 %v2445
    %v2515 = vpop.f32.mrf.mxu0
    %v2516 = vadd.f32 %v184, %v2515
    %v2517 = vpop.f32.mrf.mxu0
    %2518 = vdwg.mxu0
    %v2519 = vsel %vm189, %v2516, -inf
    %2520 = vmax.xlane.f32.xlu0 %v2519
    %v2521 = vpop.xlane.xlu0 %2520
    %v2522 = vsub.f32 %v2516, %v2521
    %v2523 = vmul.f32 %v2522, 1.442695
    %v2524 = vpow.pop %v2523
    %v2525 = vsel %vm189, %v2524, 0.0
    %2526 = vadd.xlane.f32.xlu0 %v2525
    %v2527 = vpop.xlane.xlu0 %2526
    %v2528 = vrcp.pop %v2527
    %v2529 = vmul.f32 %v2524, %v2528
    %2530 = vrot.lane.b32.xlu0 %v2434, 64
    %v2531 = vpop.permute.xlu0 %2530
    %v2534 = vsel %vm189, %v2529, 0
    %2536 = vmatprep.subr.mxu0 0.0
    %2537 = vmatpush1.msra.mxu0 0.0
    %2538 = vmatprep.subr.mxu0 0.0
    %2539 = vmatpush1.msra.mxu0 0.0
    %2540 = vmatprep.subr.mxu0 0.0
    %2541 = vmatpush1.msra.mxu0 0.0
    %2542 = vmatprep.subr.mxu0 0.0
    %2543 = vmatpush1.msra.mxu0 0.0
    %2544 = vmatprep.subr.mxu0 0.0
    %2545 = vmatpush1.msra.mxu0 0.0
    %2546 = vmatprep.subr.mxu0 0.0
    %2547 = vmatpush1.msra.mxu0 0.0
    %2548 = vmatprep.subr.mxu0 0.0
    %2549 = vmatpush1.msra.mxu0 0.0
    %2550 = vmatprep.subr.mxu0 0.0
    %2551 = vmatpush1.msra.mxu0 0.0
    %2552 = vmatprep.subr.mxu0 0.0
    %2553 = vmatpush1.msra.mxu0 0.0
    %2554 = vmatprep.subr.mxu0 0.0
    %2555 = vmatpush1.msra.mxu0 0.0
    %2556 = vmatprep.subr.mxu0 0.0
    %2557 = vmatpush1.msra.mxu0 0.0
    %2558 = vmatprep.subr.mxu0 0.0
    %2559 = vmatpush1.msra.mxu0 0.0
    %2560 = vmatprep.subr.mxu0 0.0
    %2561 = vmatpush1.msra.mxu0 0.0
    %2562 = vmatprep.subr.mxu0 0.0
    %2563 = vmatpush1.msra.mxu0 0.0
    %2564 = vmatprep.subr.mxu0 0.0
    %2565 = vmatpush1.msra.mxu0 0.0
    %2566 = vmatprep.subr.mxu0 0.0
    %2567 = vmatpush1.msra.mxu0 %v2531
    %2568 = vmatprep.subr.mxu0 0.0
    %2569 = vmatpush2.msra.mxu0 0.0
    %2570 = vmatprep.subr.mxu0 0.0
    %2571 = vmatpush2.msra.mxu0 0.0
    %2572 = vmatprep.subr.mxu0 0.0
    %2573 = vmatpush2.msra.mxu0 0.0
    %2574 = vmatprep.subr.mxu0 0.0
    %2575 = vmatpush2.msra.mxu0 0.0
    %2576 = vmatprep.subr.mxu0 0.0
    %2577 = vmatpush2.msra.mxu0 0.0
    %2578 = vmatprep.subr.mxu0 0.0
    %2579 = vmatpush2.msra.mxu0 0.0
    %2580 = vmatprep.subr.mxu0 0.0
    %2581 = vmatpush2.msra.mxu0 0.0
    %2582 = vmatprep.subr.mxu0 0.0
    %2583 = vmatpush2.msra.mxu0 0.0
    %2584 = vmatprep.subr.mxu0 0.0
    %2585 = vmatpush2.msra.mxu0 0.0
    %2586 = vmatprep.subr.mxu0 0.0
    %2587 = vmatpush2.msra.mxu0 0.0
    %2588 = vmatprep.subr.mxu0 0.0
    %2589 = vmatpush2.msra.mxu0 0.0
    %2590 = vmatprep.subr.mxu0 0.0
    %2591 = vmatpush2.msra.mxu0 0.0
    %2592 = vmatprep.subr.mxu0 0.0
    %2593 = vmatpush2.msra.mxu0 0.0
    %2594 = vmatprep.subr.mxu0 0.0
    %2595 = vmatpush2.msra.mxu0 0.0
    %2596 = vmatprep.subr.mxu0 0.0
    %2597 = vmatpush2.msra.mxu0 0.0
    %2598 = vmatprep.subr.mxu0 0.0
    %2599 = vmatpush2.msra.mxu0 0.0
    %2600 = vmatprep.mubr.f32.mxu0 0.0
    %2601 = vmatmul.mubr.f32.gmra.mxu0 %v2534
    %v2602 = vpop.f32.mrf.mxu0
    %v2603 = vadd.f32 0.0, %v2602
    %v2604 = vpop.f32.mrf.mxu0
    %2605 = vdwg.mxu0
    %2606 = vrot.lane.b32.xlu0 %v2434, 120
    %v2607 = vpop.permute.xlu0 %2606
    %2608 = vrot.lane.b32.xlu0 %v2434, 88
    %v2609 = vpop.permute.xlu0 %2608
    %v2610 = vsel %vm189, %v2607, 0
    %v2612 = vsel %vm189, %v2609, 0
    %2614 = vmatprep.subr.mxu0 0.0
    %2615 = vmatpush1.xpose.msra.mxu0 0.0
    %2616 = vmatprep.subr.mxu0 0.0
    %2617 = vmatpush1.xpose.msra.mxu0 0.0
    %2618 = vmatprep.subr.mxu0 0.0
    %2619 = vmatpush1.xpose.msra.mxu0 0.0
    %2620 = vmatprep.subr.mxu0 0.0
    %2621 = vmatpush1.xpose.msra.mxu0 0.0
    %2622 = vmatprep.subr.mxu0 0.0
    %2623 = vmatpush1.xpose.msra.mxu0 0.0
    %2624 = vmatprep.subr.mxu0 0.0
    %2625 = vmatpush1.xpose.msra.mxu0 0.0
    %2626 = vmatprep.subr.mxu0 0.0
    %2627 = vmatpush1.xpose.msra.mxu0 0.0
    %2628 = vmatprep.subr.mxu0 0.0
    %2629 = vmatpush1.xpose.msra.mxu0 0.0
    %2630 = vmatprep.subr.mxu0 0.0
    %2631 = vmatpush1.xpose.msra.mxu0 0.0
    %2632 = vmatprep.subr.mxu0 0.0
    %2633 = vmatpush1.xpose.msra.mxu0 0.0
    %2634 = vmatprep.subr.mxu0 0.0
    %2635 = vmatpush1.xpose.msra.mxu0 0.0
    %2636 = vmatprep.subr.mxu0 0.0
    %2637 = vmatpush1.xpose.msra.mxu0 0.0
    %2638 = vmatprep.subr.mxu0 0.0
    %2639 = vmatpush1.xpose.msra.mxu0 0.0
    %2640 = vmatprep.subr.mxu0 0.0
    %2641 = vmatpush1.xpose.msra.mxu0 0.0
    %2642 = vmatprep.subr.mxu0 0.0
    %2643 = vmatpush1.xpose.msra.mxu0 0.0
    %2644 = vmatprep.subr.mxu0 0.0
    %2645 = vmatpush1.xpose.msra.mxu0 %v2612
    %2646 = vmatprep.subr.mxu0 0.0
    %2647 = vmatpush2.xpose.msra.mxu0 0.0
    %2648 = vmatprep.subr.mxu0 0.0
    %2649 = vmatpush2.xpose.msra.mxu0 0.0
    %2650 = vmatprep.subr.mxu0 0.0
    %2651 = vmatpush2.xpose.msra.mxu0 0.0
    %2652 = vmatprep.subr.mxu0 0.0
    %2653 = vmatpush2.xpose.msra.mxu0 0.0
    %2654 = vmatprep.subr.mxu0 0.0
    %2655 = vmatpush2.xpose.msra.mxu0 0.0
    %2656 = vmatprep.subr.mxu0 0.0
    %2657 = vmatpush2.xpose.msra.mxu0 0.0
    %2658 = vmatprep.subr.mxu0 0.0
    %2659 = vmatpush2.xpose.msra.mxu0 0.0
    %2660 = vmatprep.subr.mxu0 0.0
    %2661 = vmatpush2.xpose.msra.mxu0 0.0
    %2662 = vmatprep.subr.mxu0 0.0
    %2663 = vmatpush2.xpose.msra.mxu0 0.0
    %2664 = vmatprep.subr.mxu0 0.0
    %2665 = vmatpush2.xpose.msra.mxu0 0.0
    %2666 = vmatprep.subr.mxu0 0.0
    %2667 = vmatpush2.xpose.msra.mxu0 0.0
    %2668 = vmatprep.subr.mxu0 0.0
    %2669 = vmatpush2.xpose.msra.mxu0 0.0
    %2670 = vmatprep.subr.mxu0 0.0
    %2671 = vmatpush2.xpose.msra.mxu0 0.0
    %2672 = vmatprep.subr.mxu0 0.0
    %2673 = vmatpush2.xpose.msra.mxu0 0.0
    %2674 = vmatprep.subr.mxu0 0.0
    %2675 = vmatpush2.xpose.msra.mxu0 0.0
    %2676 = vmatprep.subr.mxu0 0.0
    %2677 = vmatpush2.xpose.msra.mxu0 0.0
    %2678 = vmatprep.mubr.f32.mxu0 0.0
    %2679 = vmatmul.mubr.f32.gmra.mxu0 %v2610
    %v2680 = vpop.f32.mrf.mxu0
    %v2681 = vadd.f32 %v184, %v2680
    %v2682 = vpop.f32.mrf.mxu0
    %2683 = vdwg.mxu0
    %v2684 = vsel %vm189, %v2681, -inf
    %2685 = vmax.xlane.f32.xlu0 %v2684
    %v2686 = vpop.xlane.xlu0 %2685
    %v2687 = vsub.f32 %v2681, %v2686
    %v2688 = vmul.f32 %v2687, 1.442695
    %v2689 = vpow.pop %v2688
    %v2690 = vsel %vm189, %v2689, 0.0
    %2691 = vadd.xlane.f32.xlu0 %v2690
    %v2692 = vpop.xlane.xlu0 %2691
    %v2693 = vrcp.pop %v2692
    %v2694 = vmul.f32 %v2689, %v2693
    %2695 = vrot.lane.b32.xlu0 %v2434, 56
    %v2696 = vpop.permute.xlu0 %2695
    %v2699 = vsel %vm189, %v2694, 0
    %2701 = vmatprep.subr.mxu0 0.0
    %2702 = vmatpush1.msra.mxu0 0.0
    %2703 = vmatprep.subr.mxu0 0.0
    %2704 = vmatpush1.msra.mxu0 0.0
    %2705 = vmatprep.subr.mxu0 0.0
    %2706 = vmatpush1.msra.mxu0 0.0
    %2707 = vmatprep.subr.mxu0 0.0
    %2708 = vmatpush1.msra.mxu0 0.0
    %2709 = vmatprep.subr.mxu0 0.0
    %2710 = vmatpush1.msra.mxu0 0.0
    %2711 = vmatprep.subr.mxu0 0.0
    %2712 = vmatpush1.msra.mxu0 0.0
    %2713 = vmatprep.subr.mxu0 0.0
    %2714 = vmatpush1.msra.mxu0 0.0
    %2715 = vmatprep.subr.mxu0 0.0
    %2716 = vmatpush1.msra.mxu0 0.0
    %2717 = vmatprep.subr.mxu0 0.0
    %2718 = vmatpush1.msra.mxu0 0.0
    %2719 = vmatprep.subr.mxu0 0.0
    %2720 = vmatpush1.msra.mxu0 0.0
    %2721 = vmatprep.subr.mxu0 0.0
    %2722 = vmatpush1.msra.mxu0 0.0
    %2723 = vmatprep.subr.mxu0 0.0
    %2724 = vmatpush1.msra.mxu0 0.0
    %2725 = vmatprep.subr.mxu0 0.0
    %2726 = vmatpush1.msra.mxu0 0.0
    %2727 = vmatprep.subr.mxu0 0.0
    %2728 = vmatpush1.msra.mxu0 0.0
    %2729 = vmatprep.subr.mxu0 0.0
    %2730 = vmatpush1.msra.mxu0 0.0
    %2731 = vmatprep.subr.mxu0 0.0
    %2732 = vmatpush1.msra.mxu0 %v2696
    %2733 = vmatprep.subr.mxu0 0.0
    %2734 = vmatpush2.msra.mxu0 0.0
    %2735 = vmatprep.subr.mxu0 0.0
    %2736 = vmatpush2.msra.mxu0 0.0
    %2737 = vmatprep.subr.mxu0 0.0
    %2738 = vmatpush2.msra.mxu0 0.0
    %2739 = vmatprep.subr.mxu0 0.0
    %2740 = vmatpush2.msra.mxu0 0.0
    %2741 = vmatprep.subr.mxu0 0.0
    %2742 = vmatpush2.msra.mxu0 0.0
    %2743 = vmatprep.subr.mxu0 0.0
    %2744 = vmatpush2.msra.mxu0 0.0
    %2745 = vmatprep.subr.mxu0 0.0
    %2746 = vmatpush2.msra.mxu0 0.0
    %2747 = vmatprep.subr.mxu0 0.0
    %2748 = vmatpush2.msra.mxu0 0.0
    %2749 = vmatprep.subr.mxu0 0.0
    %2750 = vmatpush2.msra.mxu0 0.0
    %2751 = vmatprep.subr.mxu0 0.0
    %2752 = vmatpush2.msra.mxu0 0.0
    %2753 = vmatprep.subr.mxu0 0.0
    %2754 = vmatpush2.msra.mxu0 0.0
    %2755 = vmatprep.subr.mxu0 0.0
    %2756 = vmatpush2.msra.mxu0 0.0
    %2757 = vmatprep.subr.mxu0 0.0
    %2758 = vmatpush2.msra.mxu0 0.0
    %2759 = vmatprep.subr.mxu0 0.0
    %2760 = vmatpush2.msra.mxu0 0.0
    %2761 = vmatprep.subr.mxu0 0.0
    %2762 = vmatpush2.msra.mxu0 0.0
    %2763 = vmatprep.subr.mxu0 0.0
    %2764 = vmatpush2.msra.mxu0 0.0
    %2765 = vmatprep.mubr.f32.mxu0 0.0
    %2766 = vmatmul.mubr.f32.gmra.mxu0 %v2699
    %v2767 = vpop.f32.mrf.mxu0
    %v2768 = vadd.f32 0.0, %v2767
    %v2769 = vpop.f32.mrf.mxu0
    %2770 = vdwg.mxu0
    %v2772 = vsel %vm189, %v2768, 0
    %2774 = vmatprep.subr.mxu0 0.0
    %2775 = vmatpush1.msra.mxu0 0.0
    %2776 = vmatprep.subr.mxu0 0.0
    %2777 = vmatpush1.msra.mxu0 0.0
    %2778 = vmatprep.subr.mxu0 0.0
    %2779 = vmatpush1.msra.mxu0 0.0
    %2780 = vmatprep.subr.mxu0 0.0
    %2781 = vmatpush1.msra.mxu0 0.0
    %2782 = vmatprep.subr.mxu0 0.0
    %2783 = vmatpush1.msra.mxu0 0.0
    %2784 = vmatprep.subr.mxu0 0.0
    %2785 = vmatpush1.msra.mxu0 0.0
    %2786 = vmatprep.subr.mxu0 0.0
    %2787 = vmatpush1.msra.mxu0 0.0
    %2788 = vmatprep.subr.mxu0 0.0
    %2789 = vmatpush1.msra.mxu0 0.0
    %2790 = vmatprep.subr.mxu0 0.0
    %2791 = vmatpush1.msra.mxu0 0.0
    %2792 = vmatprep.subr.mxu0 0.0
    %2793 = vmatpush1.msra.mxu0 0.0
    %2794 = vmatprep.subr.mxu0 0.0
    %2795 = vmatpush1.msra.mxu0 0.0
    %2796 = vmatprep.subr.mxu0 0.0
    %2797 = vmatpush1.msra.mxu0 0.0
    %2798 = vmatprep.subr.mxu0 0.0
    %2799 = vmatpush1.msra.mxu0 0.0
    %2800 = vmatprep.subr.mxu0 0.0
    %2801 = vmatpush1.msra.mxu0 0.0
    %2802 = vmatprep.subr.mxu0 0.0
    %2803 = vmatpush1.msra.mxu0 0.0
    %2804 = vmatprep.subr.mxu0 0.0
    %2805 = vmatpush1.msra.mxu0 %v69
    %2806 = vmatprep.subr.mxu0 0.0
    %2807 = vmatpush2.msra.mxu0 0.0
    %2808 = vmatprep.subr.mxu0 0.0
    %2809 = vmatpush2.msra.mxu0 0.0
    %2810 = vmatprep.subr.mxu0 0.0
    %2811 = vmatpush2.msra.mxu0 0.0
    %2812 = vmatprep.subr.mxu0 0.0
    %2813 = vmatpush2.msra.mxu0 0.0
    %2814 = vmatprep.subr.mxu0 0.0
    %2815 = vmatpush2.msra.mxu0 0.0
    %2816 = vmatprep.subr.mxu0 0.0
    %2817 = vmatpush2.msra.mxu0 0.0
    %2818 = vmatprep.subr.mxu0 0.0
    %2819 = vmatpush2.msra.mxu0 0.0
    %2820 = vmatprep.subr.mxu0 0.0
    %2821 = vmatpush2.msra.mxu0 0.0
    %2822 = vmatprep.subr.mxu0 0.0
    %2823 = vmatpush2.msra.mxu0 0.0
    %2824 = vmatprep.subr.mxu0 0.0
    %2825 = vmatpush2.msra.mxu0 0.0
    %2826 = vmatprep.subr.mxu0 0.0
    %2827 = vmatpush2.msra.mxu0 0.0
    %2828 = vmatprep.subr.mxu0 0.0
    %2829 = vmatpush2.msra.mxu0 0.0
    %2830 = vmatprep.subr.mxu0 0.0
    %2831 = vmatpush2.msra.mxu0 0.0
    %2832 = vmatprep.subr.mxu0 0.0
    %2833 = vmatpush2.msra.mxu0 0.0
    %2834 = vmatprep.subr.mxu0 0.0
    %2835 = vmatpush2.msra.mxu0 0.0
    %2836 = vmatprep.subr.mxu0 0.0
    %2837 = vmatpush2.msra.mxu0 0.0
    %2838 = vmatprep.mubr.f32.mxu0 0.0
    %2839 = vmatmul.mubr.f32.gmra.mxu0 %v2772
    %v2840 = vpop.f32.mrf.mxu0
    %v2841 = vadd.f32 0.0, %v2840
    %v2842 = vpop.f32.mrf.mxu0
    %2843 = vdwg.mxu0
    %v2845 = vsel %vm189, %v2603, 0
    %2847 = vmatprep.subr.mxu0 0.0
    %2848 = vmatpush1.msra.mxu0 0.0
    %2849 = vmatprep.subr.mxu0 0.0
    %2850 = vmatpush1.msra.mxu0 0.0
    %2851 = vmatprep.subr.mxu0 0.0
    %2852 = vmatpush1.msra.mxu0 0.0
    %2853 = vmatprep.subr.mxu0 0.0
    %2854 = vmatpush1.msra.mxu0 0.0
    %2855 = vmatprep.subr.mxu0 0.0
    %2856 = vmatpush1.msra.mxu0 0.0
    %2857 = vmatprep.subr.mxu0 0.0
    %2858 = vmatpush1.msra.mxu0 0.0
    %2859 = vmatprep.subr.mxu0 0.0
    %2860 = vmatpush1.msra.mxu0 0.0
    %2861 = vmatprep.subr.mxu0 0.0
    %2862 = vmatpush1.msra.mxu0 0.0
    %2863 = vmatprep.subr.mxu0 0.0
    %2864 = vmatpush1.msra.mxu0 0.0
    %2865 = vmatprep.subr.mxu0 0.0
    %2866 = vmatpush1.msra.mxu0 0.0
    %2867 = vmatprep.subr.mxu0 0.0
    %2868 = vmatpush1.msra.mxu0 0.0
    %2869 = vmatprep.subr.mxu0 0.0
    %2870 = vmatpush1.msra.mxu0 0.0
    %2871 = vmatprep.subr.mxu0 0.0
    %2872 = vmatpush1.msra.mxu0 0.0
    %2873 = vmatprep.subr.mxu0 0.0
    %2874 = vmatpush1.msra.mxu0 0.0
    %2875 = vmatprep.subr.mxu0 0.0
    %2876 = vmatpush1.msra.mxu0 0.0
    %2877 = vmatprep.subr.mxu0 0.0
    %2878 = vmatpush1.msra.mxu0 %v68
    %2879 = vmatprep.subr.mxu0 0.0
    %2880 = vmatpush2.msra.mxu0 0.0
    %2881 = vmatprep.subr.mxu0 0.0
    %2882 = vmatpush2.msra.mxu0 0.0
    %2883 = vmatprep.subr.mxu0 0.0
    %2884 = vmatpush2.msra.mxu0 0.0
    %2885 = vmatprep.subr.mxu0 0.0
    %2886 = vmatpush2.msra.mxu0 0.0
    %2887 = vmatprep.subr.mxu0 0.0
    %2888 = vmatpush2.msra.mxu0 0.0
    %2889 = vmatprep.subr.mxu0 0.0
    %2890 = vmatpush2.msra.mxu0 0.0
    %2891 = vmatprep.subr.mxu0 0.0
    %2892 = vmatpush2.msra.mxu0 0.0
    %2893 = vmatprep.subr.mxu0 0.0
    %2894 = vmatpush2.msra.mxu0 0.0
    %2895 = vmatprep.subr.mxu0 0.0
    %2896 = vmatpush2.msra.mxu0 0.0
    %2897 = vmatprep.subr.mxu0 0.0
    %2898 = vmatpush2.msra.mxu0 0.0
    %2899 = vmatprep.subr.mxu0 0.0
    %2900 = vmatpush2.msra.mxu0 0.0
    %2901 = vmatprep.subr.mxu0 0.0
    %2902 = vmatpush2.msra.mxu0 0.0
    %2903 = vmatprep.subr.mxu0 0.0
    %2904 = vmatpush2.msra.mxu0 0.0
    %2905 = vmatprep.subr.mxu0 0.0
    %2906 = vmatpush2.msra.mxu0 0.0
    %2907 = vmatprep.subr.mxu0 0.0
    %2908 = vmatpush2.msra.mxu0 0.0
    %2909 = vmatprep.subr.mxu0 0.0
    %2910 = vmatpush2.msra.mxu0 0.0
    %2911 = vmatprep.mubr.f32.mxu0 0.0
    %2912 = vmatmul.mubr.f32.gmra.mxu0 %v2845
    %v2913 = vpop.f32.mrf.mxu0
    %v2914 = vadd.f32 %v2841, %v2913
    %v2915 = vpop.f32.mrf.mxu0
    %2916 = vdwg.mxu0
    %2917 = vrot.lane.b32.xlu0 %v2434, 112
    %v2918 = vpop.permute.xlu0 %2917
    %2919 = vrot.lane.b32.xlu0 %v2434, 80
    %v2920 = vpop.permute.xlu0 %2919
    %v2921 = vsel %vm189, %v2918, 0
    %v2923 = vsel %vm189, %v2920, 0
    %2925 = vmatprep.subr.mxu0 0.0
    %2926 = vmatpush1.xpose.msra.mxu0 0.0
    %2927 = vmatprep.subr.mxu0 0.0
    %2928 = vmatpush1.xpose.msra.mxu0 0.0
    %2929 = vmatprep.subr.mxu0 0.0
    %2930 = vmatpush1.xpose.msra.mxu0 0.0
    %2931 = vmatprep.subr.mxu0 0.0
    %2932 = vmatpush1.xpose.msra.mxu0 0.0
    %2933 = vmatprep.subr.mxu0 0.0
    %2934 = vmatpush1.xpose.msra.mxu0 0.0
    %2935 = vmatprep.subr.mxu0 0.0
    %2936 = vmatpush1.xpose.msra.mxu0 0.0
    %2937 = vmatprep.subr.mxu0 0.0
    %2938 = vmatpush1.xpose.msra.mxu0 0.0
    %2939 = vmatprep.subr.mxu0 0.0
    %2940 = vmatpush1.xpose.msra.mxu0 0.0
    %2941 = vmatprep.subr.mxu0 0.0
    %2942 = vmatpush1.xpose.msra.mxu0 0.0
    %2943 = vmatprep.subr.mxu0 0.0
    %2944 = vmatpush1.xpose.msra.mxu0 0.0
    %2945 = vmatprep.subr.mxu0 0.0
    %2946 = vmatpush1.xpose.msra.mxu0 0.0
    %2947 = vmatprep.subr.mxu0 0.0
    %2948 = vmatpush1.xpose.msra.mxu0 0.0
    %2949 = vmatprep.subr.mxu0 0.0
    %2950 = vmatpush1.xpose.msra.mxu0 0.0
    %2951 = vmatprep.subr.mxu0 0.0
    %2952 = vmatpush1.xpose.msra.mxu0 0.0
    %2953 = vmatprep.subr.mxu0 0.0
    %2954 = vmatpush1.xpose.msra.mxu0 0.0
    %2955 = vmatprep.subr.mxu0 0.0
    %2956 = vmatpush1.xpose.msra.mxu0 %v2923
    %2957 = vmatprep.subr.mxu0 0.0
    %2958 = vmatpush2.xpose.msra.mxu0 0.0
    %2959 = vmatprep.subr.mxu0 0.0
    %2960 = vmatpush2.xpose.msra.mxu0 0.0
    %2961 = vmatprep.subr.mxu0 0.0
    %2962 = vmatpush2.xpose.msra.mxu0 0.0
    %2963 = vmatprep.subr.mxu0 0.0
    %2964 = vmatpush2.xpose.msra.mxu0 0.0
    %2965 = vmatprep.subr.mxu0 0.0
    %2966 = vmatpush2.xpose.msra.mxu0 0.0
    %2967 = vmatprep.subr.mxu0 0.0
    %2968 = vmatpush2.xpose.msra.mxu0 0.0
    %2969 = vmatprep.subr.mxu0 0.0
    %2970 = vmatpush2.xpose.msra.mxu0 0.0
    %2971 = vmatprep.subr.mxu0 0.0
    %2972 = vmatpush2.xpose.msra.mxu0 0.0
    %2973 = vmatprep.subr.mxu0 0.0
    %2974 = vmatpush2.xpose.msra.mxu0 0.0
    %2975 = vmatprep.subr.mxu0 0.0
    %2976 = vmatpush2.xpose.msra.mxu0 0.0
    %2977 = vmatprep.subr.mxu0 0.0
    %2978 = vmatpush2.xpose.msra.mxu0 0.0
    %2979 = vmatprep.subr.mxu0 0.0
    %2980 = vmatpush2.xpose.msra.mxu0 0.0
    %2981 = vmatprep.subr.mxu0 0.0
    %2982 = vmatpush2.xpose.msra.mxu0 0.0
    %2983 = vmatprep.subr.mxu0 0.0
    %2984 = vmatpush2.xpose.msra.mxu0 0.0
    %2985 = vmatprep.subr.mxu0 0.0
    %2986 = vmatpush2.xpose.msra.mxu0 0.0
    %2987 = vmatprep.subr.mxu0 0.0
    %2988 = vmatpush2.xpose.msra.mxu0 0.0
    %2989 = vmatprep.mubr.f32.mxu0 0.0
    %2990 = vmatmul.mubr.f32.gmra.mxu0 %v2921
    %v2991 = vpop.f32.mrf.mxu0
    %v2992 = vadd.f32 %v184, %v2991
    %v2993 = vpop.f32.mrf.mxu0
    %2994 = vdwg.mxu0
    %v2995 = vsel %vm189, %v2992, -inf
    %2996 = vmax.xlane.f32.xlu0 %v2995
    %v2997 = vpop.xlane.xlu0 %2996
    %v2998 = vsub.f32 %v2992, %v2997
    %v2999 = vmul.f32 %v2998, 1.442695
    %v3000 = vpow.pop %v2999
    %v3001 = vsel %vm189, %v3000, 0.0
    %3002 = vadd.xlane.f32.xlu0 %v3001
    %v3003 = vpop.xlane.xlu0 %3002
    %v3004 = vrcp.pop %v3003
    %v3005 = vmul.f32 %v3000, %v3004
    %3006 = vrot.lane.b32.xlu0 %v2434, 48
    %v3007 = vpop.permute.xlu0 %3006
    %v3010 = vsel %vm189, %v3005, 0
    %3012 = vmatprep.subr.mxu0 0.0
    %3013 = vmatpush1.msra.mxu0 0.0
    %3014 = vmatprep.subr.mxu0 0.0
    %3015 = vmatpush1.msra.mxu0 0.0
    %3016 = vmatprep.subr.mxu0 0.0
    %3017 = vmatpush1.msra.mxu0 0.0
    %3018 = vmatprep.subr.mxu0 0.0
    %3019 = vmatpush1.msra.mxu0 0.0
    %3020 = vmatprep.subr.mxu0 0.0
    %3021 = vmatpush1.msra.mxu0 0.0
    %3022 = vmatprep.subr.mxu0 0.0
    %3023 = vmatpush1.msra.mxu0 0.0
    %3024 = vmatprep.subr.mxu0 0.0
    %3025 = vmatpush1.msra.mxu0 0.0
    %3026 = vmatprep.subr.mxu0 0.0
    %3027 = vmatpush1.msra.mxu0 0.0
    %3028 = vmatprep.subr.mxu0 0.0
    %3029 = vmatpush1.msra.mxu0 0.0
    %3030 = vmatprep.subr.mxu0 0.0
    %3031 = vmatpush1.msra.mxu0 0.0
    %3032 = vmatprep.subr.mxu0 0.0
    %3033 = vmatpush1.msra.mxu0 0.0
    %3034 = vmatprep.subr.mxu0 0.0
    %3035 = vmatpush1.msra.mxu0 0.0
    %3036 = vmatprep.subr.mxu0 0.0
    %3037 = vmatpush1.msra.mxu0 0.0
    %3038 = vmatprep.subr.mxu0 0.0
    %3039 = vmatpush1.msra.mxu0 0.0
    %3040 = vmatprep.subr.mxu0 0.0
    %3041 = vmatpush1.msra.mxu0 0.0
    %3042 = vmatprep.subr.mxu0 0.0
    %3043 = vmatpush1.msra.mxu0 %v3007
    %3044 = vmatprep.subr.mxu0 0.0
    %3045 = vmatpush2.msra.mxu0 0.0
    %3046 = vmatprep.subr.mxu0 0.0
    %3047 = vmatpush2.msra.mxu0 0.0
    %3048 = vmatprep.subr.mxu0 0.0
    %3049 = vmatpush2.msra.mxu0 0.0
    %3050 = vmatprep.subr.mxu0 0.0
    %3051 = vmatpush2.msra.mxu0 0.0
    %3052 = vmatprep.subr.mxu0 0.0
    %3053 = vmatpush2.msra.mxu0 0.0
    %3054 = vmatprep.subr.mxu0 0.0
    %3055 = vmatpush2.msra.mxu0 0.0
    %3056 = vmatprep.subr.mxu0 0.0
    %3057 = vmatpush2.msra.mxu0 0.0
    %3058 = vmatprep.subr.mxu0 0.0
    %3059 = vmatpush2.msra.mxu0 0.0
    %3060 = vmatprep.subr.mxu0 0.0
    %3061 = vmatpush2.msra.mxu0 0.0
    %3062 = vmatprep.subr.mxu0 0.0
    %3063 = vmatpush2.msra.mxu0 0.0
    %3064 = vmatprep.subr.mxu0 0.0
    %3065 = vmatpush2.msra.mxu0 0.0
    %3066 = vmatprep.subr.mxu0 0.0
    %3067 = vmatpush2.msra.mxu0 0.0
    %3068 = vmatprep.subr.mxu0 0.0
    %3069 = vmatpush2.msra.mxu0 0.0
    %3070 = vmatprep.subr.mxu0 0.0
    %3071 = vmatpush2.msra.mxu0 0.0
    %3072 = vmatprep.subr.mxu0 0.0
    %3073 = vmatpush2.msra.mxu0 0.0
    %3074 = vmatprep.subr.mxu0 0.0
    %3075 = vmatpush2.msra.mxu0 0.0
    %3076 = vmatprep.mubr.f32.mxu0 0.0
    %3077 = vmatmul.mubr.f32.gmra.mxu0 %v3010
    %v3078 = vpop.f32.mrf.mxu0
    %v3079 = vadd.f32 0.0, %v3078
    %v3080 = vpop.f32.mrf.mxu0
    %3081 = vdwg.mxu0
    %v3083 = vsel %vm189, %v3079, 0
    %3085 = vmatprep.subr.mxu0 0.0
    %3086 = vmatpush1.msra.mxu0 0.0
    %3087 = vmatprep.subr.mxu0 0.0
    %3088 = vmatpush1.msra.mxu0 0.0
    %3089 = vmatprep.subr.mxu0 0.0
    %3090 = vmatpush1.msra.mxu0 0.0
    %3091 = vmatprep.subr.mxu0 0.0
    %3092 = vmatpush1.msra.mxu0 0.0
    %3093 = vmatprep.subr.mxu0 0.0
    %3094 = vmatpush1.msra.mxu0 0.0
    %3095 = vmatprep.subr.mxu0 0.0
    %3096 = vmatpush1.msra.mxu0 0.0
    %3097 = vmatprep.subr.mxu0 0.0
    %3098 = vmatpush1.msra.mxu0 0.0
    %3099 = vmatprep.subr.mxu0 0.0
    %3100 = vmatpush1.msra.mxu0 0.0
    %3101 = vmatprep.subr.mxu0 0.0
    %3102 = vmatpush1.msra.mxu0 0.0
    %3103 = vmatprep.subr.mxu0 0.0
    %3104 = vmatpush1.msra.mxu0 0.0
    %3105 = vmatprep.subr.mxu0 0.0
    %3106 = vmatpush1.msra.mxu0 0.0
    %3107 = vmatprep.subr.mxu0 0.0
    %3108 = vmatpush1.msra.mxu0 0.0
    %3109 = vmatprep.subr.mxu0 0.0
    %3110 = vmatpush1.msra.mxu0 0.0
    %3111 = vmatprep.subr.mxu0 0.0
    %3112 = vmatpush1.msra.mxu0 0.0
    %3113 = vmatprep.subr.mxu0 0.0
    %3114 = vmatpush1.msra.mxu0 0.0
    %3115 = vmatprep.subr.mxu0 0.0
    %3116 = vmatpush1.msra.mxu0 %v70
    %3117 = vmatprep.subr.mxu0 0.0
    %3118 = vmatpush2.msra.mxu0 0.0
    %3119 = vmatprep.subr.mxu0 0.0
    %3120 = vmatpush2.msra.mxu0 0.0
    %3121 = vmatprep.subr.mxu0 0.0
    %3122 = vmatpush2.msra.mxu0 0.0
    %3123 = vmatprep.subr.mxu0 0.0
    %3124 = vmatpush2.msra.mxu0 0.0
    %3125 = vmatprep.subr.mxu0 0.0
    %3126 = vmatpush2.msra.mxu0 0.0
    %3127 = vmatprep.subr.mxu0 0.0
    %3128 = vmatpush2.msra.mxu0 0.0
    %3129 = vmatprep.subr.mxu0 0.0
    %3130 = vmatpush2.msra.mxu0 0.0
    %3131 = vmatprep.subr.mxu0 0.0
    %3132 = vmatpush2.msra.mxu0 0.0
    %3133 = vmatprep.subr.mxu0 0.0
    %3134 = vmatpush2.msra.mxu0 0.0
    %3135 = vmatprep.subr.mxu0 0.0
    %3136 = vmatpush2.msra.mxu0 0.0
    %3137 = vmatprep.subr.mxu0 0.0
    %3138 = vmatpush2.msra.mxu0 0.0
    %3139 = vmatprep.subr.mxu0 0.0
    %3140 = vmatpush2.msra.mxu0 0.0
    %3141 = vmatprep.subr.mxu0 0.0
    %3142 = vmatpush2.msra.mxu0 0.0
    %3143 = vmatprep.subr.mxu0 0.0
    %3144 = vmatpush2.msra.mxu0 0.0
    %3145 = vmatprep.subr.mxu0 0.0
    %3146 = vmatpush2.msra.mxu0 0.0
    %3147 = vmatprep.subr.mxu0 0.0
    %3148 = vmatpush2.msra.mxu0 0.0
    %3149 = vmatprep.mubr.f32.mxu0 0.0
    %3150 = vmatmul.mubr.f32.gmra.mxu0 %v3083
    %v3151 = vpop.f32.mrf.mxu0
    %v3152 = vadd.f32 0.0, %v3151
    %v3153 = vpop.f32.mrf.mxu0
    %3154 = vdwg.mxu0
    %v3155 = vadd.f32 %v2914, %v3152
    %3156 = vrot.lane.b32.xlu0 %v2434, 104
    %v3157 = vpop.permute.xlu0 %3156
    %3158 = vrot.lane.b32.xlu0 %v2434, 72
    %v3159 = vpop.permute.xlu0 %3158
    %v3160 = vsel %vm189, %v3157, 0
    %v3162 = vsel %vm189, %v3159, 0
    %3164 = vmatprep.subr.mxu0 0.0
    %3165 = vmatpush1.xpose.msra.mxu0 0.0
    %3166 = vmatprep.subr.mxu0 0.0
    %3167 = vmatpush1.xpose.msra.mxu0 0.0
    %3168 = vmatprep.subr.mxu0 0.0
    %3169 = vmatpush1.xpose.msra.mxu0 0.0
    %3170 = vmatprep.subr.mxu0 0.0
    %3171 = vmatpush1.xpose.msra.mxu0 0.0
    %3172 = vmatprep.subr.mxu0 0.0
    %3173 = vmatpush1.xpose.msra.mxu0 0.0
    %3174 = vmatprep.subr.mxu0 0.0
    %3175 = vmatpush1.xpose.msra.mxu0 0.0
    %3176 = vmatprep.subr.mxu0 0.0
    %3177 = vmatpush1.xpose.msra.mxu0 0.0
    %3178 = vmatprep.subr.mxu0 0.0
    %3179 = vmatpush1.xpose.msra.mxu0 0.0
    %3180 = vmatprep.subr.mxu0 0.0
    %3181 = vmatpush1.xpose.msra.mxu0 0.0
    %3182 = vmatprep.subr.mxu0 0.0
    %3183 = vmatpush1.xpose.msra.mxu0 0.0
    %3184 = vmatprep.subr.mxu0 0.0
    %3185 = vmatpush1.xpose.msra.mxu0 0.0
    %3186 = vmatprep.subr.mxu0 0.0
    %3187 = vmatpush1.xpose.msra.mxu0 0.0
    %3188 = vmatprep.subr.mxu0 0.0
    %3189 = vmatpush1.xpose.msra.mxu0 0.0
    %3190 = vmatprep.subr.mxu0 0.0
    %3191 = vmatpush1.xpose.msra.mxu0 0.0
    %3192 = vmatprep.subr.mxu0 0.0
    %3193 = vmatpush1.xpose.msra.mxu0 0.0
    %3194 = vmatprep.subr.mxu0 0.0
    %3195 = vmatpush1.xpose.msra.mxu0 %v3162
    %3196 = vmatprep.subr.mxu0 0.0
    %3197 = vmatpush2.xpose.msra.mxu0 0.0
    %3198 = vmatprep.subr.mxu0 0.0
    %3199 = vmatpush2.xpose.msra.mxu0 0.0
    %3200 = vmatprep.subr.mxu0 0.0
    %3201 = vmatpush2.xpose.msra.mxu0 0.0
    %3202 = vmatprep.subr.mxu0 0.0
    %3203 = vmatpush2.xpose.msra.mxu0 0.0
    %3204 = vmatprep.subr.mxu0 0.0
    %3205 = vmatpush2.xpose.msra.mxu0 0.0
    %3206 = vmatprep.subr.mxu0 0.0
    %3207 = vmatpush2.xpose.msra.mxu0 0.0
    %3208 = vmatprep.subr.mxu0 0.0
    %3209 = vmatpush2.xpose.msra.mxu0 0.0
    %3210 = vmatprep.subr.mxu0 0.0
    %3211 = vmatpush2.xpose.msra.mxu0 0.0
    %3212 = vmatprep.subr.mxu0 0.0
    %3213 = vmatpush2.xpose.msra.mxu0 0.0
    %3214 = vmatprep.subr.mxu0 0.0
    %3215 = vmatpush2.xpose.msra.mxu0 0.0
    %3216 = vmatprep.subr.mxu0 0.0
    %3217 = vmatpush2.xpose.msra.mxu0 0.0
    %3218 = vmatprep.subr.mxu0 0.0
    %3219 = vmatpush2.xpose.msra.mxu0 0.0
    %3220 = vmatprep.subr.mxu0 0.0
    %3221 = vmatpush2.xpose.msra.mxu0 0.0
    %3222 = vmatprep.subr.mxu0 0.0
    %3223 = vmatpush2.xpose.msra.mxu0 0.0
    %3224 = vmatprep.subr.mxu0 0.0
    %3225 = vmatpush2.xpose.msra.mxu0 0.0
    %3226 = vmatprep.subr.mxu0 0.0
    %3227 = vmatpush2.xpose.msra.mxu0 0.0
    %3228 = vmatprep.mubr.f32.mxu0 0.0
    %3229 = vmatmul.mubr.f32.gmra.mxu0 %v3160
    %v3230 = vpop.f32.mrf.mxu0
    %v3231 = vadd.f32 %v184, %v3230
    %v3232 = vpop.f32.mrf.mxu0
    %3233 = vdwg.mxu0
    %v3234 = vsel %vm189, %v3231, -inf
    %3235 = vmax.xlane.f32.xlu0 %v3234
    %v3236 = vpop.xlane.xlu0 %3235
    %v3237 = vsub.f32 %v3231, %v3236
    %v3238 = vmul.f32 %v3237, 1.442695
    %v3239 = vpow.pop %v3238
    %v3240 = vsel %vm189, %v3239, 0.0
    %3241 = vadd.xlane.f32.xlu0 %v3240
    %v3242 = vpop.xlane.xlu0 %3241
    %v3243 = vrcp.pop %v3242
    %v3244 = vmul.f32 %v3239, %v3243
    %3245 = vrot.lane.b32.xlu0 %v2434, 40
    %v3246 = vpop.permute.xlu0 %3245
    %v3249 = vsel %vm189, %v3244, 0
    %3251 = vmatprep.subr.mxu0 0.0
    %3252 = vmatpush1.msra.mxu0 0.0
    %3253 = vmatprep.subr.mxu0 0.0
    %3254 = vmatpush1.msra.mxu0 0.0
    %3255 = vmatprep.subr.mxu0 0.0
    %3256 = vmatpush1.msra.mxu0 0.0
    %3257 = vmatprep.subr.mxu0 0.0
    %3258 = vmatpush1.msra.mxu0 0.0
    %3259 = vmatprep.subr.mxu0 0.0
    %3260 = vmatpush1.msra.mxu0 0.0
    %3261 = vmatprep.subr.mxu0 0.0
    %3262 = vmatpush1.msra.mxu0 0.0
    %3263 = vmatprep.subr.mxu0 0.0
    %3264 = vmatpush1.msra.mxu0 0.0
    %3265 = vmatprep.subr.mxu0 0.0
    %3266 = vmatpush1.msra.mxu0 0.0
    %3267 = vmatprep.subr.mxu0 0.0
    %3268 = vmatpush1.msra.mxu0 0.0
    %3269 = vmatprep.subr.mxu0 0.0
    %3270 = vmatpush1.msra.mxu0 0.0
    %3271 = vmatprep.subr.mxu0 0.0
    %3272 = vmatpush1.msra.mxu0 0.0
    %3273 = vmatprep.subr.mxu0 0.0
    %3274 = vmatpush1.msra.mxu0 0.0
    %3275 = vmatprep.subr.mxu0 0.0
    %3276 = vmatpush1.msra.mxu0 0.0
    %3277 = vmatprep.subr.mxu0 0.0
    %3278 = vmatpush1.msra.mxu0 0.0
    %3279 = vmatprep.subr.mxu0 0.0
    %3280 = vmatpush1.msra.mxu0 0.0
    %3281 = vmatprep.subr.mxu0 0.0
    %3282 = vmatpush1.msra.mxu0 %v3246
    %3283 = vmatprep.subr.mxu0 0.0
    %3284 = vmatpush2.msra.mxu0 0.0
    %3285 = vmatprep.subr.mxu0 0.0
    %3286 = vmatpush2.msra.mxu0 0.0
    %3287 = vmatprep.subr.mxu0 0.0
    %3288 = vmatpush2.msra.mxu0 0.0
    %3289 = vmatprep.subr.mxu0 0.0
    %3290 = vmatpush2.msra.mxu0 0.0
    %3291 = vmatprep.subr.mxu0 0.0
    %3292 = vmatpush2.msra.mxu0 0.0
    %3293 = vmatprep.subr.mxu0 0.0
    %3294 = vmatpush2.msra.mxu0 0.0
    %3295 = vmatprep.subr.mxu0 0.0
    %3296 = vmatpush2.msra.mxu0 0.0
    %3297 = vmatprep.subr.mxu0 0.0
    %3298 = vmatpush2.msra.mxu0 0.0
    %3299 = vmatprep.subr.mxu0 0.0
    %3300 = vmatpush2.msra.mxu0 0.0
    %3301 = vmatprep.subr.mxu0 0.0
    %3302 = vmatpush2.msra.mxu0 0.0
    %3303 = vmatprep.subr.mxu0 0.0
    %3304 = vmatpush2.msra.mxu0 0.0
    %3305 = vmatprep.subr.mxu0 0.0
    %3306 = vmatpush2.msra.mxu0 0.0
    %3307 = vmatprep.subr.mxu0 0.0
    %3308 = vmatpush2.msra.mxu0 0.0
    %3309 = vmatprep.subr.mxu0 0.0
    %3310 = vmatpush2.msra.mxu0 0.0
    %3311 = vmatprep.subr.mxu0 0.0
    %3312 = vmatpush2.msra.mxu0 0.0
    %3313 = vmatprep.subr.mxu0 0.0
    %3314 = vmatpush2.msra.mxu0 0.0
    %3315 = vmatprep.mubr.f32.mxu0 0.0
    %3316 = vmatmul.mubr.f32.gmra.mxu0 %v3249
    %v3317 = vpop.f32.mrf.mxu0
    %v3318 = vadd.f32 0.0, %v3317
    %v3319 = vpop.f32.mrf.mxu0
    %3320 = vdwg.mxu0
    %v3322 = vsel %vm189, %v3318, 0
    %3324 = vmatprep.subr.mxu0 0.0
    %3325 = vmatpush1.msra.mxu0 0.0
    %3326 = vmatprep.subr.mxu0 0.0
    %3327 = vmatpush1.msra.mxu0 0.0
    %3328 = vmatprep.subr.mxu0 0.0
    %3329 = vmatpush1.msra.mxu0 0.0
    %3330 = vmatprep.subr.mxu0 0.0
    %3331 = vmatpush1.msra.mxu0 0.0
    %3332 = vmatprep.subr.mxu0 0.0
    %3333 = vmatpush1.msra.mxu0 0.0
    %3334 = vmatprep.subr.mxu0 0.0
    %3335 = vmatpush1.msra.mxu0 0.0
    %3336 = vmatprep.subr.mxu0 0.0
    %3337 = vmatpush1.msra.mxu0 0.0
    %3338 = vmatprep.subr.mxu0 0.0
    %3339 = vmatpush1.msra.mxu0 0.0
    %3340 = vmatprep.subr.mxu0 0.0
    %3341 = vmatpush1.msra.mxu0 0.0
    %3342 = vmatprep.subr.mxu0 0.0
    %3343 = vmatpush1.msra.mxu0 0.0
    %3344 = vmatprep.subr.mxu0 0.0
    %3345 = vmatpush1.msra.mxu0 0.0
    %3346 = vmatprep.subr.mxu0 0.0
    %3347 = vmatpush1.msra.mxu0 0.0
    %3348 = vmatprep.subr.mxu0 0.0
    %3349 = vmatpush1.msra.mxu0 0.0
    %3350 = vmatprep.subr.mxu0 0.0
    %3351 = vmatpush1.msra.mxu0 0.0
    %3352 = vmatprep.subr.mxu0 0.0
    %3353 = vmatpush1.msra.mxu0 0.0
    %3354 = vmatprep.subr.mxu0 0.0
    %3355 = vmatpush1.msra.mxu0 %v71
    %3356 = vmatprep.subr.mxu0 0.0
    %3357 = vmatpush2.msra.mxu0 0.0
    %3358 = vmatprep.subr.mxu0 0.0
    %3359 = vmatpush2.msra.mxu0 0.0
    %3360 = vmatprep.subr.mxu0 0.0
    %3361 = vmatpush2.msra.mxu0 0.0
    %3362 = vmatprep.subr.mxu0 0.0
    %3363 = vmatpush2.msra.mxu0 0.0
    %3364 = vmatprep.subr.mxu0 0.0
    %3365 = vmatpush2.msra.mxu0 0.0
    %3366 = vmatprep.subr.mxu0 0.0
    %3367 = vmatpush2.msra.mxu0 0.0
    %3368 = vmatprep.subr.mxu0 0.0
    %3369 = vmatpush2.msra.mxu0 0.0
    %3370 = vmatprep.subr.mxu0 0.0
    %3371 = vmatpush2.msra.mxu0 0.0
    %3372 = vmatprep.subr.mxu0 0.0
    %3373 = vmatpush2.msra.mxu0 0.0
    %3374 = vmatprep.subr.mxu0 0.0
    %3375 = vmatpush2.msra.mxu0 0.0
    %3376 = vmatprep.subr.mxu0 0.0
    %3377 = vmatpush2.msra.mxu0 0.0
    %3378 = vmatprep.subr.mxu0 0.0
    %3379 = vmatpush2.msra.mxu0 0.0
    %3380 = vmatprep.subr.mxu0 0.0
    %3381 = vmatpush2.msra.mxu0 0.0
    %3382 = vmatprep.subr.mxu0 0.0
    %3383 = vmatpush2.msra.mxu0 0.0
    %3384 = vmatprep.subr.mxu0 0.0
    %3385 = vmatpush2.msra.mxu0 0.0
    %3386 = vmatprep.subr.mxu0 0.0
    %3387 = vmatpush2.msra.mxu0 0.0
    %3388 = vmatprep.mubr.f32.mxu0 0.0
    %3389 = vmatmul.mubr.f32.gmra.mxu0 %v3322
    %v3390 = vpop.f32.mrf.mxu0
    %v3391 = vadd.f32 0.0, %v3390
    %v3392 = vpop.f32.mrf.mxu0
    %3393 = vdwg.mxu0
    %v3394 = vadd.f32 %v3155, %v3391
    %3396 = vrot.lane.b32.xlu0 %v2439, 96
    %v3397 = vpop.permute.xlu0 %3396
    %v3398 = vsel %vm189, %v2439, 0
    %v3400 = vsel %vm189, %v3397, 0
    %3402 = vmatprep.subr.mxu0 0.0
    %3403 = vmatpush1.xpose.msra.mxu0 0.0
    %3404 = vmatprep.subr.mxu0 0.0
    %3405 = vmatpush1.xpose.msra.mxu0 0.0
    %3406 = vmatprep.subr.mxu0 0.0
    %3407 = vmatpush1.xpose.msra.mxu0 0.0
    %3408 = vmatprep.subr.mxu0 0.0
    %3409 = vmatpush1.xpose.msra.mxu0 0.0
    %3410 = vmatprep.subr.mxu0 0.0
    %3411 = vmatpush1.xpose.msra.mxu0 0.0
    %3412 = vmatprep.subr.mxu0 0.0
    %3413 = vmatpush1.xpose.msra.mxu0 0.0
    %3414 = vmatprep.subr.mxu0 0.0
    %3415 = vmatpush1.xpose.msra.mxu0 0.0
    %3416 = vmatprep.subr.mxu0 0.0
    %3417 = vmatpush1.xpose.msra.mxu0 0.0
    %3418 = vmatprep.subr.mxu0 0.0
    %3419 = vmatpush1.xpose.msra.mxu0 0.0
    %3420 = vmatprep.subr.mxu0 0.0
    %3421 = vmatpush1.xpose.msra.mxu0 0.0
    %3422 = vmatprep.subr.mxu0 0.0
    %3423 = vmatpush1.xpose.msra.mxu0 0.0
    %3424 = vmatprep.subr.mxu0 0.0
    %3425 = vmatpush1.xpose.msra.mxu0 0.0
    %3426 = vmatprep.subr.mxu0 0.0
    %3427 = vmatpush1.xpose.msra.mxu0 0.0
    %3428 = vmatprep.subr.mxu0 0.0
    %3429 = vmatpush1.xpose.msra.mxu0 0.0
    %3430 = vmatprep.subr.mxu0 0.0
    %3431 = vmatpush1.xpose.msra.mxu0 0.0
    %3432 = vmatprep.subr.mxu0 0.0
    %3433 = vmatpush1.xpose.msra.mxu0 %v3400
    %3434 = vmatprep.subr.mxu0 0.0
    %3435 = vmatpush2.xpose.msra.mxu0 0.0
    %3436 = vmatprep.subr.mxu0 0.0
    %3437 = vmatpush2.xpose.msra.mxu0 0.0
    %3438 = vmatprep.subr.mxu0 0.0
    %3439 = vmatpush2.xpose.msra.mxu0 0.0
    %3440 = vmatprep.subr.mxu0 0.0
    %3441 = vmatpush2.xpose.msra.mxu0 0.0
    %3442 = vmatprep.subr.mxu0 0.0
    %3443 = vmatpush2.xpose.msra.mxu0 0.0
    %3444 = vmatprep.subr.mxu0 0.0
    %3445 = vmatpush2.xpose.msra.mxu0 0.0
    %3446 = vmatprep.subr.mxu0 0.0
    %3447 = vmatpush2.xpose.msra.mxu0 0.0
    %3448 = vmatprep.subr.mxu0 0.0
    %3449 = vmatpush2.xpose.msra.mxu0 0.0
    %3450 = vmatprep.subr.mxu0 0.0
    %3451 = vmatpush2.xpose.msra.mxu0 0.0
    %3452 = vmatprep.subr.mxu0 0.0
    %3453 = vmatpush2.xpose.msra.mxu0 0.0
    %3454 = vmatprep.subr.mxu0 0.0
    %3455 = vmatpush2.xpose.msra.mxu0 0.0
    %3456 = vmatprep.subr.mxu0 0.0
    %3457 = vmatpush2.xpose.msra.mxu0 0.0
    %3458 = vmatprep.subr.mxu0 0.0
    %3459 = vmatpush2.xpose.msra.mxu0 0.0
    %3460 = vmatprep.subr.mxu0 0.0
    %3461 = vmatpush2.xpose.msra.mxu0 0.0
    %3462 = vmatprep.subr.mxu0 0.0
    %3463 = vmatpush2.xpose.msra.mxu0 0.0
    %3464 = vmatprep.subr.mxu0 0.0
    %3465 = vmatpush2.xpose.msra.mxu0 0.0
    %3466 = vmatprep.mubr.f32.mxu0 0.0
    %3467 = vmatmul.mubr.f32.gmra.mxu0 %v3398
    %v3468 = vpop.f32.mrf.mxu0
    %v3469 = vadd.f32 %v1144, %v3468
    %v3470 = vpop.f32.mrf.mxu0
    %3471 = vdwg.mxu0
    %v3472 = vsel %vm189, %v3469, -inf
    %3473 = vmax.xlane.f32.xlu0 %v3472
    %v3474 = vpop.xlane.xlu0 %3473
    %v3475 = vsub.f32 %v3469, %v3474
    %v3476 = vmul.f32 %v3475, 1.442695
    %v3477 = vpow.pop %v3476
    %v3478 = vsel %vm189, %v3477, 0.0
    %3479 = vadd.xlane.f32.xlu0 %v3478
    %v3480 = vpop.xlane.xlu0 %3479
    %v3481 = vrcp.pop %v3480
    %v3482 = vmul.f32 %v3477, %v3481
    %3483 = vrot.lane.b32.xlu0 %v2439, 64
    %v3484 = vpop.permute.xlu0 %3483
    %v3487 = vsel %vm189, %v3482, 0
    %3489 = vmatprep.subr.mxu0 0.0
    %3490 = vmatpush1.msra.mxu0 0.0
    %3491 = vmatprep.subr.mxu0 0.0
    %3492 = vmatpush1.msra.mxu0 0.0
    %3493 = vmatprep.subr.mxu0 0.0
    %3494 = vmatpush1.msra.mxu0 0.0
    %3495 = vmatprep.subr.mxu0 0.0
    %3496 = vmatpush1.msra.mxu0 0.0
    %3497 = vmatprep.subr.mxu0 0.0
    %3498 = vmatpush1.msra.mxu0 0.0
    %3499 = vmatprep.subr.mxu0 0.0
    %3500 = vmatpush1.msra.mxu0 0.0
    %3501 = vmatprep.subr.mxu0 0.0
    %3502 = vmatpush1.msra.mxu0 0.0
    %3503 = vmatprep.subr.mxu0 0.0
    %3504 = vmatpush1.msra.mxu0 0.0
    %3505 = vmatprep.subr.mxu0 0.0
    %3506 = vmatpush1.msra.mxu0 0.0
    %3507 = vmatprep.subr.mxu0 0.0
    %3508 = vmatpush1.msra.mxu0 0.0
    %3509 = vmatprep.subr.mxu0 0.0
    %3510 = vmatpush1.msra.mxu0 0.0
    %3511 = vmatprep.subr.mxu0 0.0
    %3512 = vmatpush1.msra.mxu0 0.0
    %3513 = vmatprep.subr.mxu0 0.0
    %3514 = vmatpush1.msra.mxu0 0.0
    %3515 = vmatprep.subr.mxu0 0.0
    %3516 = vmatpush1.msra.mxu0 0.0
    %3517 = vmatprep.subr.mxu0 0.0
    %3518 = vmatpush1.msra.mxu0 0.0
    %3519 = vmatprep.subr.mxu0 0.0
    %3520 = vmatpush1.msra.mxu0 %v3484
    %3521 = vmatprep.subr.mxu0 0.0
    %3522 = vmatpush2.msra.mxu0 0.0
    %3523 = vmatprep.subr.mxu0 0.0
    %3524 = vmatpush2.msra.mxu0 0.0
    %3525 = vmatprep.subr.mxu0 0.0
    %3526 = vmatpush2.msra.mxu0 0.0
    %3527 = vmatprep.subr.mxu0 0.0
    %3528 = vmatpush2.msra.mxu0 0.0
    %3529 = vmatprep.subr.mxu0 0.0
    %3530 = vmatpush2.msra.mxu0 0.0
    %3531 = vmatprep.subr.mxu0 0.0
    %3532 = vmatpush2.msra.mxu0 0.0
    %3533 = vmatprep.subr.mxu0 0.0
    %3534 = vmatpush2.msra.mxu0 0.0
    %3535 = vmatprep.subr.mxu0 0.0
    %3536 = vmatpush2.msra.mxu0 0.0
    %3537 = vmatprep.subr.mxu0 0.0
    %3538 = vmatpush2.msra.mxu0 0.0
    %3539 = vmatprep.subr.mxu0 0.0
    %3540 = vmatpush2.msra.mxu0 0.0
    %3541 = vmatprep.subr.mxu0 0.0
    %3542 = vmatpush2.msra.mxu0 0.0
    %3543 = vmatprep.subr.mxu0 0.0
    %3544 = vmatpush2.msra.mxu0 0.0
    %3545 = vmatprep.subr.mxu0 0.0
    %3546 = vmatpush2.msra.mxu0 0.0
    %3547 = vmatprep.subr.mxu0 0.0
    %3548 = vmatpush2.msra.mxu0 0.0
    %3549 = vmatprep.subr.mxu0 0.0
    %3550 = vmatpush2.msra.mxu0 0.0
    %3551 = vmatprep.subr.mxu0 0.0
    %3552 = vmatpush2.msra.mxu0 0.0
    %3553 = vmatprep.mubr.f32.mxu0 0.0
    %3554 = vmatmul.mubr.f32.gmra.mxu0 %v3487
    %v3555 = vpop.f32.mrf.mxu0
    %v3556 = vadd.f32 0.0, %v3555
    %v3557 = vpop.f32.mrf.mxu0
    %3558 = vdwg.mxu0
    %3559 = vrot.lane.b32.xlu0 %v2439, 120
    %v3560 = vpop.permute.xlu0 %3559
    %3561 = vrot.lane.b32.xlu0 %v2439, 88
    %v3562 = vpop.permute.xlu0 %3561
    %v3563 = vsel %vm189, %v3560, 0
    %v3565 = vsel %vm189, %v3562, 0
    %3567 = vmatprep.subr.mxu0 0.0
    %3568 = vmatpush1.xpose.msra.mxu0 0.0
    %3569 = vmatprep.subr.mxu0 0.0
    %3570 = vmatpush1.xpose.msra.mxu0 0.0
    %3571 = vmatprep.subr.mxu0 0.0
    %3572 = vmatpush1.xpose.msra.mxu0 0.0
    %3573 = vmatprep.subr.mxu0 0.0
    %3574 = vmatpush1.xpose.msra.mxu0 0.0
    %3575 = vmatprep.subr.mxu0 0.0
    %3576 = vmatpush1.xpose.msra.mxu0 0.0
    %3577 = vmatprep.subr.mxu0 0.0
    %3578 = vmatpush1.xpose.msra.mxu0 0.0
    %3579 = vmatprep.subr.mxu0 0.0
    %3580 = vmatpush1.xpose.msra.mxu0 0.0
    %3581 = vmatprep.subr.mxu0 0.0
    %3582 = vmatpush1.xpose.msra.mxu0 0.0
    %3583 = vmatprep.subr.mxu0 0.0
    %3584 = vmatpush1.xpose.msra.mxu0 0.0
    %3585 = vmatprep.subr.mxu0 0.0
    %3586 = vmatpush1.xpose.msra.mxu0 0.0
    %3587 = vmatprep.subr.mxu0 0.0
    %3588 = vmatpush1.xpose.msra.mxu0 0.0
    %3589 = vmatprep.subr.mxu0 0.0
    %3590 = vmatpush1.xpose.msra.mxu0 0.0
    %3591 = vmatprep.subr.mxu0 0.0
    %3592 = vmatpush1.xpose.msra.mxu0 0.0
    %3593 = vmatprep.subr.mxu0 0.0
    %3594 = vmatpush1.xpose.msra.mxu0 0.0
    %3595 = vmatprep.subr.mxu0 0.0
    %3596 = vmatpush1.xpose.msra.mxu0 0.0
    %3597 = vmatprep.subr.mxu0 0.0
    %3598 = vmatpush1.xpose.msra.mxu0 %v3565
    %3599 = vmatprep.subr.mxu0 0.0
    %3600 = vmatpush2.xpose.msra.mxu0 0.0
    %3601 = vmatprep.subr.mxu0 0.0
    %3602 = vmatpush2.xpose.msra.mxu0 0.0
    %3603 = vmatprep.subr.mxu0 0.0
    %3604 = vmatpush2.xpose.msra.mxu0 0.0
    %3605 = vmatprep.subr.mxu0 0.0
    %3606 = vmatpush2.xpose.msra.mxu0 0.0
    %3607 = vmatprep.subr.mxu0 0.0
    %3608 = vmatpush2.xpose.msra.mxu0 0.0
    %3609 = vmatprep.subr.mxu0 0.0
    %3610 = vmatpush2.xpose.msra.mxu0 0.0
    %3611 = vmatprep.subr.mxu0 0.0
    %3612 = vmatpush2.xpose.msra.mxu0 0.0
    %3613 = vmatprep.subr.mxu0 0.0
    %3614 = vmatpush2.xpose.msra.mxu0 0.0
    %3615 = vmatprep.subr.mxu0 0.0
    %3616 = vmatpush2.xpose.msra.mxu0 0.0
    %3617 = vmatprep.subr.mxu0 0.0
    %3618 = vmatpush2.xpose.msra.mxu0 0.0
    %3619 = vmatprep.subr.mxu0 0.0
    %3620 = vmatpush2.xpose.msra.mxu0 0.0
    %3621 = vmatprep.subr.mxu0 0.0
    %3622 = vmatpush2.xpose.msra.mxu0 0.0
    %3623 = vmatprep.subr.mxu0 0.0
    %3624 = vmatpush2.xpose.msra.mxu0 0.0
    %3625 = vmatprep.subr.mxu0 0.0
    %3626 = vmatpush2.xpose.msra.mxu0 0.0
    %3627 = vmatprep.subr.mxu0 0.0
    %3628 = vmatpush2.xpose.msra.mxu0 0.0
    %3629 = vmatprep.subr.mxu0 0.0
    %3630 = vmatpush2.xpose.msra.mxu0 0.0
    %3631 = vmatprep.mubr.f32.mxu0 0.0
    %3632 = vmatmul.mubr.f32.gmra.mxu0 %v3563
    %v3633 = vpop.f32.mrf.mxu0
    %v3634 = vadd.f32 %v1144, %v3633
    %v3635 = vpop.f32.mrf.mxu0
    %3636 = vdwg.mxu0
    %v3637 = vsel %vm189, %v3634, -inf
    %3638 = vmax.xlane.f32.xlu0 %v3637
    %v3639 = vpop.xlane.xlu0 %3638
    %v3640 = vsub.f32 %v3634, %v3639
    %v3641 = vmul.f32 %v3640, 1.442695
    %v3642 = vpow.pop %v3641
    %v3643 = vsel %vm189, %v3642, 0.0
    %3644 = vadd.xlane.f32.xlu0 %v3643
    %v3645 = vpop.xlane.xlu0 %3644
    %v3646 = vrcp.pop %v3645
    %v3647 = vmul.f32 %v3642, %v3646
    %3648 = vrot.lane.b32.xlu0 %v2439, 56
    %v3649 = vpop.permute.xlu0 %3648
    %v3652 = vsel %vm189, %v3647, 0
    %3654 = vmatprep.subr.mxu0 0.0
    %3655 = vmatpush1.msra.mxu0 0.0
    %3656 = vmatprep.subr.mxu0 0.0
    %3657 = vmatpush1.msra.mxu0 0.0
    %3658 = vmatprep.subr.mxu0 0.0
    %3659 = vmatpush1.msra.mxu0 0.0
    %3660 = vmatprep.subr.mxu0 0.0
    %3661 = vmatpush1.msra.mxu0 0.0
    %3662 = vmatprep.subr.mxu0 0.0
    %3663 = vmatpush1.msra.mxu0 0.0
    %3664 = vmatprep.subr.mxu0 0.0
    %3665 = vmatpush1.msra.mxu0 0.0
    %3666 = vmatprep.subr.mxu0 0.0
    %3667 = vmatpush1.msra.mxu0 0.0
    %3668 = vmatprep.subr.mxu0 0.0
    %3669 = vmatpush1.msra.mxu0 0.0
    %3670 = vmatprep.subr.mxu0 0.0
    %3671 = vmatpush1.msra.mxu0 0.0
    %3672 = vmatprep.subr.mxu0 0.0
    %3673 = vmatpush1.msra.mxu0 0.0
    %3674 = vmatprep.subr.mxu0 0.0
    %3675 = vmatpush1.msra.mxu0 0.0
    %3676 = vmatprep.subr.mxu0 0.0
    %3677 = vmatpush1.msra.mxu0 0.0
    %3678 = vmatprep.subr.mxu0 0.0
    %3679 = vmatpush1.msra.mxu0 0.0
    %3680 = vmatprep.subr.mxu0 0.0
    %3681 = vmatpush1.msra.mxu0 0.0
    %3682 = vmatprep.subr.mxu0 0.0
    %3683 = vmatpush1.msra.mxu0 0.0
    %3684 = vmatprep.subr.mxu0 0.0
    %3685 = vmatpush1.msra.mxu0 %v3649
    %3686 = vmatprep.subr.mxu0 0.0
    %3687 = vmatpush2.msra.mxu0 0.0
    %3688 = vmatprep.subr.mxu0 0.0
    %3689 = vmatpush2.msra.mxu0 0.0
    %3690 = vmatprep.subr.mxu0 0.0
    %3691 = vmatpush2.msra.mxu0 0.0
    %3692 = vmatprep.subr.mxu0 0.0
    %3693 = vmatpush2.msra.mxu0 0.0
    %3694 = vmatprep.subr.mxu0 0.0
    %3695 = vmatpush2.msra.mxu0 0.0
    %3696 = vmatprep.subr.mxu0 0.0
    %3697 = vmatpush2.msra.mxu0 0.0
    %3698 = vmatprep.subr.mxu0 0.0
    %3699 = vmatpush2.msra.mxu0 0.0
    %3700 = vmatprep.subr.mxu0 0.0
    %3701 = vmatpush2.msra.mxu0 0.0
    %3702 = vmatprep.subr.mxu0 0.0
    %3703 = vmatpush2.msra.mxu0 0.0
    %3704 = vmatprep.subr.mxu0 0.0
    %3705 = vmatpush2.msra.mxu0 0.0
    %3706 = vmatprep.subr.mxu0 0.0
    %3707 = vmatpush2.msra.mxu0 0.0
    %3708 = vmatprep.subr.mxu0 0.0
    %3709 = vmatpush2.msra.mxu0 0.0
    %3710 = vmatprep.subr.mxu0 0.0
    %3711 = vmatpush2.msra.mxu0 0.0
    %3712 = vmatprep.subr.mxu0 0.0
    %3713 = vmatpush2.msra.mxu0 0.0
    %3714 = vmatprep.subr.mxu0 0.0
    %3715 = vmatpush2.msra.mxu0 0.0
    %3716 = vmatprep.subr.mxu0 0.0
    %3717 = vmatpush2.msra.mxu0 0.0
    %3718 = vmatprep.mubr.f32.mxu0 0.0
    %3719 = vmatmul.mubr.f32.gmra.mxu0 %v3652
    %v3720 = vpop.f32.mrf.mxu0
    %v3721 = vadd.f32 0.0, %v3720
    %v3722 = vpop.f32.mrf.mxu0
    %3723 = vdwg.mxu0
    %v3725 = vsel %vm189, %v3721, 0
    %3727 = vmatprep.subr.mxu0 0.0
    %3728 = vmatpush1.msra.mxu0 0.0
    %3729 = vmatprep.subr.mxu0 0.0
    %3730 = vmatpush1.msra.mxu0 0.0
    %3731 = vmatprep.subr.mxu0 0.0
    %3732 = vmatpush1.msra.mxu0 0.0
    %3733 = vmatprep.subr.mxu0 0.0
    %3734 = vmatpush1.msra.mxu0 0.0
    %3735 = vmatprep.subr.mxu0 0.0
    %3736 = vmatpush1.msra.mxu0 0.0
    %3737 = vmatprep.subr.mxu0 0.0
    %3738 = vmatpush1.msra.mxu0 0.0
    %3739 = vmatprep.subr.mxu0 0.0
    %3740 = vmatpush1.msra.mxu0 0.0
    %3741 = vmatprep.subr.mxu0 0.0
    %3742 = vmatpush1.msra.mxu0 0.0
    %3743 = vmatprep.subr.mxu0 0.0
    %3744 = vmatpush1.msra.mxu0 0.0
    %3745 = vmatprep.subr.mxu0 0.0
    %3746 = vmatpush1.msra.mxu0 0.0
    %3747 = vmatprep.subr.mxu0 0.0
    %3748 = vmatpush1.msra.mxu0 0.0
    %3749 = vmatprep.subr.mxu0 0.0
    %3750 = vmatpush1.msra.mxu0 0.0
    %3751 = vmatprep.subr.mxu0 0.0
    %3752 = vmatpush1.msra.mxu0 0.0
    %3753 = vmatprep.subr.mxu0 0.0
    %3754 = vmatpush1.msra.mxu0 0.0
    %3755 = vmatprep.subr.mxu0 0.0
    %3756 = vmatpush1.msra.mxu0 0.0
    %3757 = vmatprep.subr.mxu0 0.0
    %3758 = vmatpush1.msra.mxu0 %v69
    %3759 = vmatprep.subr.mxu0 0.0
    %3760 = vmatpush2.msra.mxu0 0.0
    %3761 = vmatprep.subr.mxu0 0.0
    %3762 = vmatpush2.msra.mxu0 0.0
    %3763 = vmatprep.subr.mxu0 0.0
    %3764 = vmatpush2.msra.mxu0 0.0
    %3765 = vmatprep.subr.mxu0 0.0
    %3766 = vmatpush2.msra.mxu0 0.0
    %3767 = vmatprep.subr.mxu0 0.0
    %3768 = vmatpush2.msra.mxu0 0.0
    %3769 = vmatprep.subr.mxu0 0.0
    %3770 = vmatpush2.msra.mxu0 0.0
    %3771 = vmatprep.subr.mxu0 0.0
    %3772 = vmatpush2.msra.mxu0 0.0
    %3773 = vmatprep.subr.mxu0 0.0
    %3774 = vmatpush2.msra.mxu0 0.0
    %3775 = vmatprep.subr.mxu0 0.0
    %3776 = vmatpush2.msra.mxu0 0.0
    %3777 = vmatprep.subr.mxu0 0.0
    %3778 = vmatpush2.msra.mxu0 0.0
    %3779 = vmatprep.subr.mxu0 0.0
    %3780 = vmatpush2.msra.mxu0 0.0
    %3781 = vmatprep.subr.mxu0 0.0
    %3782 = vmatpush2.msra.mxu0 0.0
    %3783 = vmatprep.subr.mxu0 0.0
    %3784 = vmatpush2.msra.mxu0 0.0
    %3785 = vmatprep.subr.mxu0 0.0
    %3786 = vmatpush2.msra.mxu0 0.0
    %3787 = vmatprep.subr.mxu0 0.0
    %3788 = vmatpush2.msra.mxu0 0.0
    %3789 = vmatprep.subr.mxu0 0.0
    %3790 = vmatpush2.msra.mxu0 0.0
    %3791 = vmatprep.mubr.f32.mxu0 0.0
    %3792 = vmatmul.mubr.f32.gmra.mxu0 %v3725
    %v3793 = vpop.f32.mrf.mxu0
    %v3794 = vadd.f32 0.0, %v3793
    %v3795 = vpop.f32.mrf.mxu0
    %3796 = vdwg.mxu0
    %v3798 = vsel %vm189, %v3556, 0
    %3800 = vmatprep.subr.mxu0 0.0
    %3801 = vmatpush1.msra.mxu0 0.0
    %3802 = vmatprep.subr.mxu0 0.0
    %3803 = vmatpush1.msra.mxu0 0.0
    %3804 = vmatprep.subr.mxu0 0.0
    %3805 = vmatpush1.msra.mxu0 0.0
    %3806 = vmatprep.subr.mxu0 0.0
    %3807 = vmatpush1.msra.mxu0 0.0
    %3808 = vmatprep.subr.mxu0 0.0
    %3809 = vmatpush1.msra.mxu0 0.0
    %3810 = vmatprep.subr.mxu0 0.0
    %3811 = vmatpush1.msra.mxu0 0.0
    %3812 = vmatprep.subr.mxu0 0.0
    %3813 = vmatpush1.msra.mxu0 0.0
    %3814 = vmatprep.subr.mxu0 0.0
    %3815 = vmatpush1.msra.mxu0 0.0
    %3816 = vmatprep.subr.mxu0 0.0
    %3817 = vmatpush1.msra.mxu0 0.0
    %3818 = vmatprep.subr.mxu0 0.0
    %3819 = vmatpush1.msra.mxu0 0.0
    %3820 = vmatprep.subr.mxu0 0.0
    %3821 = vmatpush1.msra.mxu0 0.0
    %3822 = vmatprep.subr.mxu0 0.0
    %3823 = vmatpush1.msra.mxu0 0.0
    %3824 = vmatprep.subr.mxu0 0.0
    %3825 = vmatpush1.msra.mxu0 0.0
    %3826 = vmatprep.subr.mxu0 0.0
    %3827 = vmatpush1.msra.mxu0 0.0
    %3828 = vmatprep.subr.mxu0 0.0
    %3829 = vmatpush1.msra.mxu0 0.0
    %3830 = vmatprep.subr.mxu0 0.0
    %3831 = vmatpush1.msra.mxu0 %v68
    %3832 = vmatprep.subr.mxu0 0.0
    %3833 = vmatpush2.msra.mxu0 0.0
    %3834 = vmatprep.subr.mxu0 0.0
    %3835 = vmatpush2.msra.mxu0 0.0
    %3836 = vmatprep.subr.mxu0 0.0
    %3837 = vmatpush2.msra.mxu0 0.0
    %3838 = vmatprep.subr.mxu0 0.0
    %3839 = vmatpush2.msra.mxu0 0.0
    %3840 = vmatprep.subr.mxu0 0.0
    %3841 = vmatpush2.msra.mxu0 0.0
    %3842 = vmatprep.subr.mxu0 0.0
    %3843 = vmatpush2.msra.mxu0 0.0
    %3844 = vmatprep.subr.mxu0 0.0
    %3845 = vmatpush2.msra.mxu0 0.0
    %3846 = vmatprep.subr.mxu0 0.0
    %3847 = vmatpush2.msra.mxu0 0.0
    %3848 = vmatprep.subr.mxu0 0.0
    %3849 = vmatpush2.msra.mxu0 0.0
    %3850 = vmatprep.subr.mxu0 0.0
    %3851 = vmatpush2.msra.mxu0 0.0
    %3852 = vmatprep.subr.mxu0 0.0
    %3853 = vmatpush2.msra.mxu0 0.0
    %3854 = vmatprep.subr.mxu0 0.0
    %3855 = vmatpush2.msra.mxu0 0.0
    %3856 = vmatprep.subr.mxu0 0.0
    %3857 = vmatpush2.msra.mxu0 0.0
    %3858 = vmatprep.subr.mxu0 0.0
    %3859 = vmatpush2.msra.mxu0 0.0
    %3860 = vmatprep.subr.mxu0 0.0
    %3861 = vmatpush2.msra.mxu0 0.0
    %3862 = vmatprep.subr.mxu0 0.0
    %3863 = vmatpush2.msra.mxu0 0.0
    %3864 = vmatprep.mubr.f32.mxu0 0.0
    %3865 = vmatmul.mubr.f32.gmra.mxu0 %v3798
    %v3866 = vpop.f32.mrf.mxu0
    %v3867 = vadd.f32 %v3794, %v3866
    %v3868 = vpop.f32.mrf.mxu0
    %3869 = vdwg.mxu0
    %3870 = vrot.lane.b32.xlu0 %v2439, 112
    %v3871 = vpop.permute.xlu0 %3870
    %3872 = vrot.lane.b32.xlu0 %v2439, 80
    %v3873 = vpop.permute.xlu0 %3872
    %v3874 = vsel %vm189, %v3871, 0
    %v3876 = vsel %vm189, %v3873, 0
    %3878 = vmatprep.subr.mxu0 0.0
    %3879 = vmatpush1.xpose.msra.mxu0 0.0
    %3880 = vmatprep.subr.mxu0 0.0
    %3881 = vmatpush1.xpose.msra.mxu0 0.0
    %3882 = vmatprep.subr.mxu0 0.0
    %3883 = vmatpush1.xpose.msra.mxu0 0.0
    %3884 = vmatprep.subr.mxu0 0.0
    %3885 = vmatpush1.xpose.msra.mxu0 0.0
    %3886 = vmatprep.subr.mxu0 0.0
    %3887 = vmatpush1.xpose.msra.mxu0 0.0
    %3888 = vmatprep.subr.mxu0 0.0
    %3889 = vmatpush1.xpose.msra.mxu0 0.0
    %3890 = vmatprep.subr.mxu0 0.0
    %3891 = vmatpush1.xpose.msra.mxu0 0.0
    %3892 = vmatprep.subr.mxu0 0.0
    %3893 = vmatpush1.xpose.msra.mxu0 0.0
    %3894 = vmatprep.subr.mxu0 0.0
    %3895 = vmatpush1.xpose.msra.mxu0 0.0
    %3896 = vmatprep.subr.mxu0 0.0
    %3897 = vmatpush1.xpose.msra.mxu0 0.0
    %3898 = vmatprep.subr.mxu0 0.0
    %3899 = vmatpush1.xpose.msra.mxu0 0.0
    %3900 = vmatprep.subr.mxu0 0.0
    %3901 = vmatpush1.xpose.msra.mxu0 0.0
    %3902 = vmatprep.subr.mxu0 0.0
    %3903 = vmatpush1.xpose.msra.mxu0 0.0
    %3904 = vmatprep.subr.mxu0 0.0
    %3905 = vmatpush1.xpose.msra.mxu0 0.0
    %3906 = vmatprep.subr.mxu0 0.0
    %3907 = vmatpush1.xpose.msra.mxu0 0.0
    %3908 = vmatprep.subr.mxu0 0.0
    %3909 = vmatpush1.xpose.msra.mxu0 %v3876
    %3910 = vmatprep.subr.mxu0 0.0
    %3911 = vmatpush2.xpose.msra.mxu0 0.0
    %3912 = vmatprep.subr.mxu0 0.0
    %3913 = vmatpush2.xpose.msra.mxu0 0.0
    %3914 = vmatprep.subr.mxu0 0.0
    %3915 = vmatpush2.xpose.msra.mxu0 0.0
    %3916 = vmatprep.subr.mxu0 0.0
    %3917 = vmatpush2.xpose.msra.mxu0 0.0
    %3918 = vmatprep.subr.mxu0 0.0
    %3919 = vmatpush2.xpose.msra.mxu0 0.0
    %3920 = vmatprep.subr.mxu0 0.0
    %3921 = vmatpush2.xpose.msra.mxu0 0.0
    %3922 = vmatprep.subr.mxu0 0.0
    %3923 = vmatpush2.xpose.msra.mxu0 0.0
    %3924 = vmatprep.subr.mxu0 0.0
    %3925 = vmatpush2.xpose.msra.mxu0 0.0
    %3926 = vmatprep.subr.mxu0 0.0
    %3927 = vmatpush2.xpose.msra.mxu0 0.0
    %3928 = vmatprep.subr.mxu0 0.0
    %3929 = vmatpush2.xpose.msra.mxu0 0.0
    %3930 = vmatprep.subr.mxu0 0.0
    %3931 = vmatpush2.xpose.msra.mxu0 0.0
    %3932 = vmatprep.subr.mxu0 0.0
    %3933 = vmatpush2.xpose.msra.mxu0 0.0
    %3934 = vmatprep.subr.mxu0 0.0
    %3935 = vmatpush2.xpose.msra.mxu0 0.0
    %3936 = vmatprep.subr.mxu0 0.0
    %3937 = vmatpush2.xpose.msra.mxu0 0.0
    %3938 = vmatprep.subr.mxu0 0.0
    %3939 = vmatpush2.xpose.msra.mxu0 0.0
    %3940 = vmatprep.subr.mxu0 0.0
    %3941 = vmatpush2.xpose.msra.mxu0 0.0
    %3942 = vmatprep.mubr.f32.mxu0 0.0
    %3943 = vmatmul.mubr.f32.gmra.mxu0 %v3874
    %v3944 = vpop.f32.mrf.mxu0
    %v3945 = vadd.f32 %v1144, %v3944
    %v3946 = vpop.f32.mrf.mxu0
    %3947 = vdwg.mxu0
    %v3948 = vsel %vm189, %v3945, -inf
    %3949 = vmax.xlane.f32.xlu0 %v3948
    %v3950 = vpop.xlane.xlu0 %3949
    %v3951 = vsub.f32 %v3945, %v3950
    %v3952 = vmul.f32 %v3951, 1.442695
    %v3953 = vpow.pop %v3952
    %v3954 = vsel %vm189, %v3953, 0.0
    %3955 = vadd.xlane.f32.xlu0 %v3954
    %v3956 = vpop.xlane.xlu0 %3955
    %v3957 = vrcp.pop %v3956
    %v3958 = vmul.f32 %v3953, %v3957
    %3959 = vrot.lane.b32.xlu0 %v2439, 48
    %v3960 = vpop.permute.xlu0 %3959
    %v3963 = vsel %vm189, %v3958, 0
    %3965 = vmatprep.subr.mxu0 0.0
    %3966 = vmatpush1.msra.mxu0 0.0
    %3967 = vmatprep.subr.mxu0 0.0
    %3968 = vmatpush1.msra.mxu0 0.0
    %3969 = vmatprep.subr.mxu0 0.0
    %3970 = vmatpush1.msra.mxu0 0.0
    %3971 = vmatprep.subr.mxu0 0.0
    %3972 = vmatpush1.msra.mxu0 0.0
    %3973 = vmatprep.subr.mxu0 0.0
    %3974 = vmatpush1.msra.mxu0 0.0
    %3975 = vmatprep.subr.mxu0 0.0
    %3976 = vmatpush1.msra.mxu0 0.0
    %3977 = vmatprep.subr.mxu0 0.0
    %3978 = vmatpush1.msra.mxu0 0.0
    %3979 = vmatprep.subr.mxu0 0.0
    %3980 = vmatpush1.msra.mxu0 0.0
    %3981 = vmatprep.subr.mxu0 0.0
    %3982 = vmatpush1.msra.mxu0 0.0
    %3983 = vmatprep.subr.mxu0 0.0
    %3984 = vmatpush1.msra.mxu0 0.0
    %3985 = vmatprep.subr.mxu0 0.0
    %3986 = vmatpush1.msra.mxu0 0.0
    %3987 = vmatprep.subr.mxu0 0.0
    %3988 = vmatpush1.msra.mxu0 0.0
    %3989 = vmatprep.subr.mxu0 0.0
    %3990 = vmatpush1.msra.mxu0 0.0
    %3991 = vmatprep.subr.mxu0 0.0
    %3992 = vmatpush1.msra.mxu0 0.0
    %3993 = vmatprep.subr.mxu0 0.0
    %3994 = vmatpush1.msra.mxu0 0.0
    %3995 = vmatprep.subr.mxu0 0.0
    %3996 = vmatpush1.msra.mxu0 %v3960
    %3997 = vmatprep.subr.mxu0 0.0
    %3998 = vmatpush2.msra.mxu0 0.0
    %3999 = vmatprep.subr.mxu0 0.0
    %4000 = vmatpush2.msra.mxu0 0.0
    %4001 = vmatprep.subr.mxu0 0.0
    %4002 = vmatpush2.msra.mxu0 0.0
    %4003 = vmatprep.subr.mxu0 0.0
    %4004 = vmatpush2.msra.mxu0 0.0
    %4005 = vmatprep.subr.mxu0 0.0
    %4006 = vmatpush2.msra.mxu0 0.0
    %4007 = vmatprep.subr.mxu0 0.0
    %4008 = vmatpush2.msra.mxu0 0.0
    %4009 = vmatprep.subr.mxu0 0.0
    %4010 = vmatpush2.msra.mxu0 0.0
    %4011 = vmatprep.subr.mxu0 0.0
    %4012 = vmatpush2.msra.mxu0 0.0
    %4013 = vmatprep.subr.mxu0 0.0
    %4014 = vmatpush2.msra.mxu0 0.0
    %4015 = vmatprep.subr.mxu0 0.0
    %4016 = vmatpush2.msra.mxu0 0.0
    %4017 = vmatprep.subr.mxu0 0.0
    %4018 = vmatpush2.msra.mxu0 0.0
    %4019 = vmatprep.subr.mxu0 0.0
    %4020 = vmatpush2.msra.mxu0 0.0
    %4021 = vmatprep.subr.mxu0 0.0
    %4022 = vmatpush2.msra.mxu0 0.0
    %4023 = vmatprep.subr.mxu0 0.0
    %4024 = vmatpush2.msra.mxu0 0.0
    %4025 = vmatprep.subr.mxu0 0.0
    %4026 = vmatpush2.msra.mxu0 0.0
    %4027 = vmatprep.subr.mxu0 0.0
    %4028 = vmatpush2.msra.mxu0 0.0
    %4029 = vmatprep.mubr.f32.mxu0 0.0
    %4030 = vmatmul.mubr.f32.gmra.mxu0 %v3963
    %v4031 = vpop.f32.mrf.mxu0
    %v4032 = vadd.f32 0.0, %v4031
    %v4033 = vpop.f32.mrf.mxu0
    %4034 = vdwg.mxu0
    %v4036 = vsel %vm189, %v4032, 0
    %4038 = vmatprep.subr.mxu0 0.0
    %4039 = vmatpush1.msra.mxu0 0.0
    %4040 = vmatprep.subr.mxu0 0.0
    %4041 = vmatpush1.msra.mxu0 0.0
    %4042 = vmatprep.subr.mxu0 0.0
    %4043 = vmatpush1.msra.mxu0 0.0
    %4044 = vmatprep.subr.mxu0 0.0
    %4045 = vmatpush1.msra.mxu0 0.0
    %4046 = vmatprep.subr.mxu0 0.0
    %4047 = vmatpush1.msra.mxu0 0.0
    %4048 = vmatprep.subr.mxu0 0.0
    %4049 = vmatpush1.msra.mxu0 0.0
    %4050 = vmatprep.subr.mxu0 0.0
    %4051 = vmatpush1.msra.mxu0 0.0
    %4052 = vmatprep.subr.mxu0 0.0
    %4053 = vmatpush1.msra.mxu0 0.0
    %4054 = vmatprep.subr.mxu0 0.0
    %4055 = vmatpush1.msra.mxu0 0.0
    %4056 = vmatprep.subr.mxu0 0.0
    %4057 = vmatpush1.msra.mxu0 0.0
    %4058 = vmatprep.subr.mxu0 0.0
    %4059 = vmatpush1.msra.mxu0 0.0
    %4060 = vmatprep.subr.mxu0 0.0
    %4061 = vmatpush1.msra.mxu0 0.0
    %4062 = vmatprep.subr.mxu0 0.0
    %4063 = vmatpush1.msra.mxu0 0.0
    %4064 = vmatprep.subr.mxu0 0.0
    %4065 = vmatpush1.msra.mxu0 0.0
    %4066 = vmatprep.subr.mxu0 0.0
    %4067 = vmatpush1.msra.mxu0 0.0
    %4068 = vmatprep.subr.mxu0 0.0
    %4069 = vmatpush1.msra.mxu0 %v70
    %4070 = vmatprep.subr.mxu0 0.0
    %4071 = vmatpush2.msra.mxu0 0.0
    %4072 = vmatprep.subr.mxu0 0.0
    %4073 = vmatpush2.msra.mxu0 0.0
    %4074 = vmatprep.subr.mxu0 0.0
    %4075 = vmatpush2.msra.mxu0 0.0
    %4076 = vmatprep.subr.mxu0 0.0
    %4077 = vmatpush2.msra.mxu0 0.0
    %4078 = vmatprep.subr.mxu0 0.0
    %4079 = vmatpush2.msra.mxu0 0.0
    %4080 = vmatprep.subr.mxu0 0.0
    %4081 = vmatpush2.msra.mxu0 0.0
    %4082 = vmatprep.subr.mxu0 0.0
    %4083 = vmatpush2.msra.mxu0 0.0
    %4084 = vmatprep.subr.mxu0 0.0
    %4085 = vmatpush2.msra.mxu0 0.0
    %4086 = vmatprep.subr.mxu0 0.0
    %4087 = vmatpush2.msra.mxu0 0.0
    %4088 = vmatprep.subr.mxu0 0.0
    %4089 = vmatpush2.msra.mxu0 0.0
    %4090 = vmatprep.subr.mxu0 0.0
    %4091 = vmatpush2.msra.mxu0 0.0
    %4092 = vmatprep.subr.mxu0 0.0
    %4093 = vmatpush2.msra.mxu0 0.0
    %4094 = vmatprep.subr.mxu0 0.0
    %4095 = vmatpush2.msra.mxu0 0.0
    %4096 = vmatprep.subr.mxu0 0.0
    %4097 = vmatpush2.msra.mxu0 0.0
    %4098 = vmatprep.subr.mxu0 0.0
    %4099 = vmatpush2.msra.mxu0 0.0
    %4100 = vmatprep.subr.mxu0 0.0
    %4101 = vmatpush2.msra.mxu0 0.0
    %4102 = vmatprep.mubr.f32.mxu0 0.0
    %4103 = vmatmul.mubr.f32.gmra.mxu0 %v4036
    %v4104 = vpop.f32.mrf.mxu0
    %v4105 = vadd.f32 0.0, %v4104
    %v4106 = vpop.f32.mrf.mxu0
    %4107 = vdwg.mxu0
    %v4108 = vadd.f32 %v3867, %v4105
    %4109 = vrot.lane.b32.xlu0 %v2439, 104
    %v4110 = vpop.permute.xlu0 %4109
    %4111 = vrot.lane.b32.xlu0 %v2439, 72
    %v4112 = vpop.permute.xlu0 %4111
    %v4113 = vsel %vm189, %v4110, 0
    %v4115 = vsel %vm189, %v4112, 0
    %4117 = vmatprep.subr.mxu0 0.0
    %4118 = vmatpush1.xpose.msra.mxu0 0.0
    %4119 = vmatprep.subr.mxu0 0.0
    %4120 = vmatpush1.xpose.msra.mxu0 0.0
    %4121 = vmatprep.subr.mxu0 0.0
    %4122 = vmatpush1.xpose.msra.mxu0 0.0
    %4123 = vmatprep.subr.mxu0 0.0
    %4124 = vmatpush1.xpose.msra.mxu0 0.0
    %4125 = vmatprep.subr.mxu0 0.0
    %4126 = vmatpush1.xpose.msra.mxu0 0.0
    %4127 = vmatprep.subr.mxu0 0.0
    %4128 = vmatpush1.xpose.msra.mxu0 0.0
    %4129 = vmatprep.subr.mxu0 0.0
    %4130 = vmatpush1.xpose.msra.mxu0 0.0
    %4131 = vmatprep.subr.mxu0 0.0
    %4132 = vmatpush1.xpose.msra.mxu0 0.0
    %4133 = vmatprep.subr.mxu0 0.0
    %4134 = vmatpush1.xpose.msra.mxu0 0.0
    %4135 = vmatprep.subr.mxu0 0.0
    %4136 = vmatpush1.xpose.msra.mxu0 0.0
    %4137 = vmatprep.subr.mxu0 0.0
    %4138 = vmatpush1.xpose.msra.mxu0 0.0
    %4139 = vmatprep.subr.mxu0 0.0
    %4140 = vmatpush1.xpose.msra.mxu0 0.0
    %4141 = vmatprep.subr.mxu0 0.0
    %4142 = vmatpush1.xpose.msra.mxu0 0.0
    %4143 = vmatprep.subr.mxu0 0.0
    %4144 = vmatpush1.xpose.msra.mxu0 0.0
    %4145 = vmatprep.subr.mxu0 0.0
    %4146 = vmatpush1.xpose.msra.mxu0 0.0
    %4147 = vmatprep.subr.mxu0 0.0
    %4148 = vmatpush1.xpose.msra.mxu0 %v4115
    %4149 = vmatprep.subr.mxu0 0.0
    %4150 = vmatpush2.xpose.msra.mxu0 0.0
    %4151 = vmatprep.subr.mxu0 0.0
    %4152 = vmatpush2.xpose.msra.mxu0 0.0
    %4153 = vmatprep.subr.mxu0 0.0
    %4154 = vmatpush2.xpose.msra.mxu0 0.0
    %4155 = vmatprep.subr.mxu0 0.0
    %4156 = vmatpush2.xpose.msra.mxu0 0.0
    %4157 = vmatprep.subr.mxu0 0.0
    %4158 = vmatpush2.xpose.msra.mxu0 0.0
    %4159 = vmatprep.subr.mxu0 0.0
    %4160 = vmatpush2.xpose.msra.mxu0 0.0
    %4161 = vmatprep.subr.mxu0 0.0
    %4162 = vmatpush2.xpose.msra.mxu0 0.0
    %4163 = vmatprep.subr.mxu0 0.0
    %4164 = vmatpush2.xpose.msra.mxu0 0.0
    %4165 = vmatprep.subr.mxu0 0.0
    %4166 = vmatpush2.xpose.msra.mxu0 0.0
    %4167 = vmatprep.subr.mxu0 0.0
    %4168 = vmatpush2.xpose.msra.mxu0 0.0
    %4169 = vmatprep.subr.mxu0 0.0
    %4170 = vmatpush2.xpose.msra.mxu0 0.0
    %4171 = vmatprep.subr.mxu0 0.0
    %4172 = vmatpush2.xpose.msra.mxu0 0.0
    %4173 = vmatprep.subr.mxu0 0.0
    %4174 = vmatpush2.xpose.msra.mxu0 0.0
    %4175 = vmatprep.subr.mxu0 0.0
    %4176 = vmatpush2.xpose.msra.mxu0 0.0
    %4177 = vmatprep.subr.mxu0 0.0
    %4178 = vmatpush2.xpose.msra.mxu0 0.0
    %4179 = vmatprep.subr.mxu0 0.0
    %4180 = vmatpush2.xpose.msra.mxu0 0.0
    %4181 = vmatprep.mubr.f32.mxu0 0.0
    %4182 = vmatmul.mubr.f32.gmra.mxu0 %v4113
    %v4183 = vpop.f32.mrf.mxu0
    %v4184 = vadd.f32 %v1144, %v4183
    %v4185 = vpop.f32.mrf.mxu0
    %4186 = vdwg.mxu0
    %v4187 = vsel %vm189, %v4184, -inf
    %4188 = vmax.xlane.f32.xlu0 %v4187
    %v4189 = vpop.xlane.xlu0 %4188
    %v4190 = vsub.f32 %v4184, %v4189
    %v4191 = vmul.f32 %v4190, 1.442695
    %v4192 = vpow.pop %v4191
    %v4193 = vsel %vm189, %v4192, 0.0
    %4194 = vadd.xlane.f32.xlu0 %v4193
    %v4195 = vpop.xlane.xlu0 %4194
    %v4196 = vrcp.pop %v4195
    %v4197 = vmul.f32 %v4192, %v4196
    %4198 = vrot.lane.b32.xlu0 %v2439, 40
    %v4199 = vpop.permute.xlu0 %4198
    %v4202 = vsel %vm189, %v4197, 0
    %4204 = vmatprep.subr.mxu0 0.0
    %4205 = vmatpush1.msra.mxu0 0.0
    %4206 = vmatprep.subr.mxu0 0.0
    %4207 = vmatpush1.msra.mxu0 0.0
    %4208 = vmatprep.subr.mxu0 0.0
    %4209 = vmatpush1.msra.mxu0 0.0
    %4210 = vmatprep.subr.mxu0 0.0
    %4211 = vmatpush1.msra.mxu0 0.0
    %4212 = vmatprep.subr.mxu0 0.0
    %4213 = vmatpush1.msra.mxu0 0.0
    %4214 = vmatprep.subr.mxu0 0.0
    %4215 = vmatpush1.msra.mxu0 0.0
    %4216 = vmatprep.subr.mxu0 0.0
    %4217 = vmatpush1.msra.mxu0 0.0
    %4218 = vmatprep.subr.mxu0 0.0
    %4219 = vmatpush1.msra.mxu0 0.0
    %4220 = vmatprep.subr.mxu0 0.0
    %4221 = vmatpush1.msra.mxu0 0.0
    %4222 = vmatprep.subr.mxu0 0.0
    %4223 = vmatpush1.msra.mxu0 0.0
    %4224 = vmatprep.subr.mxu0 0.0
    %4225 = vmatpush1.msra.mxu0 0.0
    %4226 = vmatprep.subr.mxu0 0.0
    %4227 = vmatpush1.msra.mxu0 0.0
    %4228 = vmatprep.subr.mxu0 0.0
    %4229 = vmatpush1.msra.mxu0 0.0
    %4230 = vmatprep.subr.mxu0 0.0
    %4231 = vmatpush1.msra.mxu0 0.0
    %4232 = vmatprep.subr.mxu0 0.0
    %4233 = vmatpush1.msra.mxu0 0.0
    %4234 = vmatprep.subr.mxu0 0.0
    %4235 = vmatpush1.msra.mxu0 %v4199
    %4236 = vmatprep.subr.mxu0 0.0
    %4237 = vmatpush2.msra.mxu0 0.0
    %4238 = vmatprep.subr.mxu0 0.0
    %4239 = vmatpush2.msra.mxu0 0.0
    %4240 = vmatprep.subr.mxu0 0.0
    %4241 = vmatpush2.msra.mxu0 0.0
    %4242 = vmatprep.subr.mxu0 0.0
    %4243 = vmatpush2.msra.mxu0 0.0
    %4244 = vmatprep.subr.mxu0 0.0
    %4245 = vmatpush2.msra.mxu0 0.0
    %4246 = vmatprep.subr.mxu0 0.0
    %4247 = vmatpush2.msra.mxu0 0.0
    %4248 = vmatprep.subr.mxu0 0.0
    %4249 = vmatpush2.msra.mxu0 0.0
    %4250 = vmatprep.subr.mxu0 0.0
    %4251 = vmatpush2.msra.mxu0 0.0
    %4252 = vmatprep.subr.mxu0 0.0
    %4253 = vmatpush2.msra.mxu0 0.0
    %4254 = vmatprep.subr.mxu0 0.0
    %4255 = vmatpush2.msra.mxu0 0.0
    %4256 = vmatprep.subr.mxu0 0.0
    %4257 = vmatpush2.msra.mxu0 0.0
    %4258 = vmatprep.subr.mxu0 0.0
    %4259 = vmatpush2.msra.mxu0 0.0
    %4260 = vmatprep.subr.mxu0 0.0
    %4261 = vmatpush2.msra.mxu0 0.0
    %4262 = vmatprep.subr.mxu0 0.0
    %4263 = vmatpush2.msra.mxu0 0.0
    %4264 = vmatprep.subr.mxu0 0.0
    %4265 = vmatpush2.msra.mxu0 0.0
    %4266 = vmatprep.subr.mxu0 0.0
    %4267 = vmatpush2.msra.mxu0 0.0
    %4268 = vmatprep.mubr.f32.mxu0 0.0
    %4269 = vmatmul.mubr.f32.gmra.mxu0 %v4202
    %v4270 = vpop.f32.mrf.mxu0
    %v4271 = vadd.f32 0.0, %v4270
    %v4272 = vpop.f32.mrf.mxu0
    %4273 = vdwg.mxu0
    %v4275 = vsel %vm189, %v4271, 0
    %4277 = vmatprep.subr.mxu0 0.0
    %4278 = vmatpush1.msra.mxu0 0.0
    %4279 = vmatprep.subr.mxu0 0.0
    %4280 = vmatpush1.msra.mxu0 0.0
    %4281 = vmatprep.subr.mxu0 0.0
    %4282 = vmatpush1.msra.mxu0 0.0
    %4283 = vmatprep.subr.mxu0 0.0
    %4284 = vmatpush1.msra.mxu0 0.0
    %4285 = vmatprep.subr.mxu0 0.0
    %4286 = vmatpush1.msra.mxu0 0.0
    %4287 = vmatprep.subr.mxu0 0.0
    %4288 = vmatpush1.msra.mxu0 0.0
    %4289 = vmatprep.subr.mxu0 0.0
    %4290 = vmatpush1.msra.mxu0 0.0
    %4291 = vmatprep.subr.mxu0 0.0
    %4292 = vmatpush1.msra.mxu0 0.0
    %4293 = vmatprep.subr.mxu0 0.0
    %4294 = vmatpush1.msra.mxu0 0.0
    %4295 = vmatprep.subr.mxu0 0.0
    %4296 = vmatpush1.msra.mxu0 0.0
    %4297 = vmatprep.subr.mxu0 0.0
    %4298 = vmatpush1.msra.mxu0 0.0
    %4299 = vmatprep.subr.mxu0 0.0
    %4300 = vmatpush1.msra.mxu0 0.0
    %4301 = vmatprep.subr.mxu0 0.0
    %4302 = vmatpush1.msra.mxu0 0.0
    %4303 = vmatprep.subr.mxu0 0.0
    %4304 = vmatpush1.msra.mxu0 0.0
    %4305 = vmatprep.subr.mxu0 0.0
    %4306 = vmatpush1.msra.mxu0 0.0
    %4307 = vmatprep.subr.mxu0 0.0
    %4308 = vmatpush1.msra.mxu0 %v71
    %4309 = vmatprep.subr.mxu0 0.0
    %4310 = vmatpush2.msra.mxu0 0.0
    %4311 = vmatprep.subr.mxu0 0.0
    %4312 = vmatpush2.msra.mxu0 0.0
    %4313 = vmatprep.subr.mxu0 0.0
    %4314 = vmatpush2.msra.mxu0 0.0
    %4315 = vmatprep.subr.mxu0 0.0
    %4316 = vmatpush2.msra.mxu0 0.0
    %4317 = vmatprep.subr.mxu0 0.0
    %4318 = vmatpush2.msra.mxu0 0.0
    %4319 = vmatprep.subr.mxu0 0.0
    %4320 = vmatpush2.msra.mxu0 0.0
    %4321 = vmatprep.subr.mxu0 0.0
    %4322 = vmatpush2.msra.mxu0 0.0
    %4323 = vmatprep.subr.mxu0 0.0
    %4324 = vmatpush2.msra.mxu0 0.0
    %4325 = vmatprep.subr.mxu0 0.0
    %4326 = vmatpush2.msra.mxu0 0.0
    %4327 = vmatprep.subr.mxu0 0.0
    %4328 = vmatpush2.msra.mxu0 0.0
    %4329 = vmatprep.subr.mxu0 0.0
    %4330 = vmatpush2.msra.mxu0 0.0
    %4331 = vmatprep.subr.mxu0 0.0
    %4332 = vmatpush2.msra.mxu0 0.0
    %4333 = vmatprep.subr.mxu0 0.0
    %4334 = vmatpush2.msra.mxu0 0.0
    %4335 = vmatprep.subr.mxu0 0.0
    %4336 = vmatpush2.msra.mxu0 0.0
    %4337 = vmatprep.subr.mxu0 0.0
    %4338 = vmatpush2.msra.mxu0 0.0
    %4339 = vmatprep.subr.mxu0 0.0
    %4340 = vmatpush2.msra.mxu0 0.0
    %4341 = vmatprep.mubr.f32.mxu0 0.0
    %4342 = vmatmul.mubr.f32.gmra.mxu0 %v4275
    %v4343 = vpop.f32.mrf.mxu0
    %v4344 = vadd.f32 0.0, %v4343
    %v4345 = vpop.f32.mrf.mxu0
    %4346 = vdwg.mxu0
    %v4347 = vadd.f32 %v4108, %v4344
    %v4348 = vadd.f32 %v2359, %v3394
    %v4349 = vadd.f32 %v2360, %v4347
    %v4350 = vadd.f32 %v4348, %v2104
    %v4351 = vadd.f32 %v4349, %v2104
    %v4352 = vsel %vm98, %v4350, 0.0
    %4353 = vadd.xlane.f32.xlu0 %v4352
    %v4354 = vpop.xlane.xlu0 %4353
    %v4355 = vsel %vm98, %v4351, 0.0
    %4356 = vadd.xlane.f32.xlu0 %v4355
    %v4357 = vpop.xlane.xlu0 %4356
    %v4358 = vmul.f32 %v4354, %v2113
    %v4359 = vmul.f32 %v4357, %v2113
    %v4360 = vsub.f32 %v4350, %v4358
    %v4361 = vsub.f32 %v4351, %v4359
    %v4362 = vmul.f32 %v4360, %v4360
    %v4363 = vmul.f32 %v4361, %v4361
    %v4364 = vsel %vm98, %v4362, 0.0
    %4365 = vadd.xlane.f32.xlu0 %v4364
    %v4366 = vpop.xlane.xlu0 %4365
    %v4367 = vsel %vm98, %v4363, 0.0
    %4368 = vadd.xlane.f32.xlu0 %v4367
    %v4369 = vpop.xlane.xlu0 %4368
    %v4370 = vmul.f32 %v4366, %v2113
    %v4371 = vmul.f32 %v4369, %v2113
    %v4372 = vadd.f32 %v4370, 1e-05
    %v4373 = vadd.f32 %v4371, 1e-05
    %v4374 = vrsqrt.pop %v4372
    %v4375 = vrsqrt.pop %v4373
    %v4376 = vmul.f32 %v4360, %v4374
    %v4377 = vmul.f32 %v4361, %v4375
    %v4378 = vmul.f32 %v4376, %v2137
    %v4379 = vmul.f32 %v4377, %v2137
    %v4380 = vadd.f32 %v4378, %v2143
    %v4381 = vadd.f32 %v4379, %v2143
    %v4383 = vsel %vm98, %v4380, 0
    %v4386 = vsel %vm98, %v4381, 0
    %4388 = vmatprep.subr.mxu0 0.0
    %4389 = vmatpush1.msra.mxu0 0.0
    %4390 = vmatprep.subr.mxu0 0.0
    %4391 = vmatpush1.msra.mxu0 0.0
    %4392 = vmatprep.subr.mxu0 0.0
    %4393 = vmatpush1.msra.mxu0 0.0
    %4394 = vmatprep.subr.mxu0 0.0
    %4395 = vmatpush1.msra.mxu0 0.0
    %4396 = vmatprep.subr.mxu0 0.0
    %4397 = vmatpush1.msra.mxu0 0.0
    %4398 = vmatprep.subr.mxu0 0.0
    %4399 = vmatpush1.msra.mxu0 0.0
    %4400 = vmatprep.subr.mxu0 0.0
    %4401 = vmatpush1.msra.mxu0 0.0
    %4402 = vmatprep.subr.mxu0 0.0
    %4403 = vmatpush1.msra.mxu0 0.0
    %4404 = vmatprep.subr.mxu0 0.0
    %4405 = vmatpush1.msra.mxu0 0.0
    %4406 = vmatprep.subr.mxu0 0.0
    %4407 = vmatpush1.msra.mxu0 0.0
    %4408 = vmatprep.subr.mxu0 0.0
    %4409 = vmatpush1.msra.mxu0 0.0
    %4410 = vmatprep.subr.mxu0 0.0
    %4411 = vmatpush1.msra.mxu0 0.0
    %4412 = vmatprep.subr.mxu0 0.0
    %4413 = vmatpush1.msra.mxu0 %v75
    %4414 = vmatprep.subr.mxu0 0.0
    %4415 = vmatpush1.msra.mxu0 %v74
    %4416 = vmatprep.subr.mxu0 0.0
    %4417 = vmatpush1.msra.mxu0 %v73
    %4418 = vmatprep.subr.mxu0 0.0
    %4419 = vmatpush1.msra.mxu0 %v72
    %4420 = vmatprep.subr.mxu0 0.0
    %4421 = vmatpush2.msra.mxu0 0.0
    %4422 = vmatprep.subr.mxu0 0.0
    %4423 = vmatpush2.msra.mxu0 0.0
    %4424 = vmatprep.subr.mxu0 0.0
    %4425 = vmatpush2.msra.mxu0 0.0
    %4426 = vmatprep.subr.mxu0 0.0
    %4427 = vmatpush2.msra.mxu0 0.0
    %4428 = vmatprep.subr.mxu0 0.0
    %4429 = vmatpush2.msra.mxu0 0.0
    %4430 = vmatprep.subr.mxu0 0.0
    %4431 = vmatpush2.msra.mxu0 0.0
    %4432 = vmatprep.subr.mxu0 0.0
    %4433 = vmatpush2.msra.mxu0 0.0
    %4434 = vmatprep.subr.mxu0 0.0
    %4435 = vmatpush2.msra.mxu0 0.0
    %4436 = vmatprep.subr.mxu0 0.0
    %4437 = vmatpush2.msra.mxu0 0.0
    %4438 = vmatprep.subr.mxu0 0.0
    %4439 = vmatpush2.msra.mxu0 0.0
    %4440 = vmatprep.subr.mxu0 0.0
    %4441 = vmatpush2.msra.mxu0 0.0
    %4442 = vmatprep.subr.mxu0 0.0
    %4443 = vmatpush2.msra.mxu0 0.0
    %4444 = vmatprep.subr.mxu0 0.0
    %4445 = vmatpush2.msra.mxu0 0.0
    %4446 = vmatprep.subr.mxu0 0.0
    %4447 = vmatpush2.msra.mxu0 0.0
    %4448 = vmatprep.subr.mxu0 0.0
    %4449 = vmatpush2.msra.mxu0 0.0
    %4450 = vmatprep.subr.mxu0 0.0
    %4451 = vmatpush2.msra.mxu0 0.0
    %4452 = vmatprep.mubr.f32.mxu0 0.0
    %4453 = vmatmul.mubr.f32.gmra.mxu0 %v4383
    %v4454 = vpop.f32.mrf.mxu0
    %v4455 = vadd.f32 %v2150, %v4454
    %v4456 = vpop.f32.mrf.mxu0
    %4457 = vmatprep.mubr.f32.mxu0 0.0
    %4458 = vmatmul.mubr.f32.gmra.mxu0 %v4386
    %v4459 = vpop.f32.mrf.mxu0
    %v4460 = vadd.f32 %v2150, %v4459
    %v4461 = vpop.f32.mrf.mxu0
    %4462 = vdwg.mxu0
    %v4463 = vmax.f32 %v4455, 0.0
    %v4464 = vmax.f32 %v4460, 0.0
    %v4466 = vsel %vm2239, %v4463, 0
    %v4469 = vsel %vm2239, %v4464, 0
    %4471 = vmatprep.subr.mxu0 0.0
    %4472 = vmatpush1.msra.mxu0 0.0
    %4473 = vmatprep.subr.mxu0 0.0
    %4474 = vmatpush1.msra.mxu0 0.0
    %4475 = vmatprep.subr.mxu0 0.0
    %4476 = vmatpush1.msra.mxu0 0.0
    %4477 = vmatprep.subr.mxu0 0.0
    %4478 = vmatpush1.msra.mxu0 0.0
    %4479 = vmatprep.subr.mxu0 0.0
    %4480 = vmatpush1.msra.mxu0 0.0
    %4481 = vmatprep.subr.mxu0 0.0
    %4482 = vmatpush1.msra.mxu0 0.0
    %4483 = vmatprep.subr.mxu0 0.0
    %4484 = vmatpush1.msra.mxu0 0.0
    %4485 = vmatprep.subr.mxu0 0.0
    %4486 = vmatpush1.msra.mxu0 0.0
    %4487 = vmatprep.subr.mxu0 0.0
    %4488 = vmatpush1.msra.mxu0 %v84
    %4489 = vmatprep.subr.mxu0 0.0
    %4490 = vmatpush1.msra.mxu0 %v83
    %4491 = vmatprep.subr.mxu0 0.0
    %4492 = vmatpush1.msra.mxu0 %v82
    %4493 = vmatprep.subr.mxu0 0.0
    %4494 = vmatpush1.msra.mxu0 %v81
    %4495 = vmatprep.subr.mxu0 0.0
    %4496 = vmatpush1.msra.mxu0 %v80
    %4497 = vmatprep.subr.mxu0 0.0
    %4498 = vmatpush1.msra.mxu0 %v79
    %4499 = vmatprep.subr.mxu0 0.0
    %4500 = vmatpush1.msra.mxu0 %v78
    %4501 = vmatprep.subr.mxu0 0.0
    %4502 = vmatpush1.msra.mxu0 %v77
    %4503 = vmatprep.subr.mxu0 0.0
    %4504 = vmatpush2.msra.mxu0 0.0
    %4505 = vmatprep.subr.mxu0 0.0
    %4506 = vmatpush2.msra.mxu0 0.0
    %4507 = vmatprep.subr.mxu0 0.0
    %4508 = vmatpush2.msra.mxu0 0.0
    %4509 = vmatprep.subr.mxu0 0.0
    %4510 = vmatpush2.msra.mxu0 0.0
    %4511 = vmatprep.subr.mxu0 0.0
    %4512 = vmatpush2.msra.mxu0 0.0
    %4513 = vmatprep.subr.mxu0 0.0
    %4514 = vmatpush2.msra.mxu0 0.0
    %4515 = vmatprep.subr.mxu0 0.0
    %4516 = vmatpush2.msra.mxu0 0.0
    %4517 = vmatprep.subr.mxu0 0.0
    %4518 = vmatpush2.msra.mxu0 0.0
    %4519 = vmatprep.subr.mxu0 0.0
    %4520 = vmatpush2.msra.mxu0 0.0
    %4521 = vmatprep.subr.mxu0 0.0
    %4522 = vmatpush2.msra.mxu0 0.0
    %4523 = vmatprep.subr.mxu0 0.0
    %4524 = vmatpush2.msra.mxu0 0.0
    %4525 = vmatprep.subr.mxu0 0.0
    %4526 = vmatpush2.msra.mxu0 0.0
    %4527 = vmatprep.subr.mxu0 0.0
    %4528 = vmatpush2.msra.mxu0 0.0
    %4529 = vmatprep.subr.mxu0 0.0
    %4530 = vmatpush2.msra.mxu0 0.0
    %4531 = vmatprep.subr.mxu0 0.0
    %4532 = vmatpush2.msra.mxu0 0.0
    %4533 = vmatprep.subr.mxu0 0.0
    %4534 = vmatpush2.msra.mxu0 0.0
    %4535 = vmatprep.mubr.f32.mxu0 0.0
    %4536 = vmatmul.mubr.f32.gmra.mxu0 %v4466
    %v4537 = vpop.f32.mrf.mxu0
    %v4538 = vadd.f32 %v2238, %v4537
    %v4539 = vpop.f32.mrf.mxu0
    %4540 = vmatprep.mubr.f32.mxu0 0.0
    %4541 = vmatmul.mubr.f32.gmra.mxu0 %v4469
    %v4542 = vpop.f32.mrf.mxu0
    %v4543 = vadd.f32 %v2238, %v4542
    %v4544 = vpop.f32.mrf.mxu0
    %4545 = vdwg.mxu0
    %v4546 = vadd.f32 %v4380, %v4538
    %v4547 = vadd.f32 %v4381, %v4543
    %v4548 = vsel %vm98, %v4546, 0.0
    %4549 = vadd.xlane.f32.xlu0 %v4548
    %v4550 = vpop.xlane.xlu0 %4549
    %v4551 = vsel %vm98, %v4547, 0.0
    %4552 = vadd.xlane.f32.xlu0 %v4551
    %v4553 = vpop.xlane.xlu0 %4552
    %v4554 = vmul.f32 %v4550, %v2113
    %v4555 = vmul.f32 %v4553, %v2113
    %v4556 = vsub.f32 %v4546, %v4554
    %v4557 = vsub.f32 %v4547, %v4555
    %v4558 = vmul.f32 %v4556, %v4556
    %v4559 = vmul.f32 %v4557, %v4557
    %v4560 = vsel %vm98, %v4558, 0.0
    %4561 = vadd.xlane.f32.xlu0 %v4560
    %v4562 = vpop.xlane.xlu0 %4561
    %v4563 = vsel %vm98, %v4559, 0.0
    %4564 = vadd.xlane.f32.xlu0 %v4563
    %v4565 = vpop.xlane.xlu0 %4564
    %v4566 = vmul.f32 %v4562, %v2113
    %v4567 = vmul.f32 %v4565, %v2113
    %v4568 = vadd.f32 %v4566, 1e-05
    %v4569 = vadd.f32 %v4567, 1e-05
    %v4570 = vrsqrt.pop %v4568
    %v4571 = vrsqrt.pop %v4569
    %v4572 = vmul.f32 %v4556, %v4570
    %v4573 = vmul.f32 %v4557, %v4571
    %v4574 = vmul.f32 %v4572, %v2352
    %v4575 = vmul.f32 %v4573, %v2352
    %v4576 = vadd.f32 %v4574, %v2358
    %v4577 = vadd.f32 %v4575, %v2358
    %4578 = vst.msk [vmem:[#allocation7] sm:$0xff] %vm98, %v4576
    %4579 = vst.msk [vmem:[#allocation7 + $0x8] sm:$0xff] %vm98, %v4577
    // Predicated region
    $region46: #{encoder_forward.1} parent=1 // pred_check
      _
    $region47: #{encoder_forward.1} parent=1 // pred_check_branch
      %4581 = sbr.rel (0) target = $region49
    $region48: #{encoder_forward.1} parent=1 // pred_region
      %s4583 = ssub.s32 256, 256
      %4584 = vsyncadd [#allocation4], %s4583
      %s4585 = sshll.u32 [#allocation7], 4
      %s4586 = int_to_ptr.vmem [resolvable:$true] %s4585
      %4591 = dma.vmem_to_hbm [thread:$0]  %s4586, 256, %s9, [#allocation4], 128, 128, 8
    $region49: #{encoder_forward.1} parent=1 // pred_fallthru
      _
    // Predicated region
    $region50: #{encoder_forward.1} parent=1 // pred_check
      _
    $region51: #{encoder_forward.1} parent=1 // pred_check_branch
      %4593 = sbr.rel (0) target = $region53
    $region52: #{encoder_forward.1} parent=1 // pred_region
      %4594 = dma.done [#allocation4], 256
    $region53: #{encoder_forward.1} parent=1 // pred_fallthru
      _
    %4595 = vsyncpa [#allocation3], 1
    %4596 = vsyncpa [#allocation6], 1
    %4597 = vsyncpa [#allocation4], 1

</llo_original>
